<compile_context>
chip_gen: v7x
topology: tpu7x:2x2x1
jax: 0.10.0
libtpu: 0.0.40
codegen_flags: <defaults>
</compile_context>

<pallas_src>
import math

import jax
import jax.numpy as jnp
from jax.experimental import pallas as pl
from jax.experimental.pallas import tpu as pltpu

# ---------------- synthetic "config" (small BERT) ----------------
VOCAB_SIZE = 100
HIDDEN = 32
NUM_LAYERS = 2
NUM_HEADS = 4
HEAD_DIM = HIDDEN // NUM_HEADS
INTERMEDIATE = 64
MAX_POS = 64
TYPE_VOCAB = 2
NUM_CLASSES = 3
LN_EPS = 1e-12

BATCH = 2
SEQ = 8
BS = BATCH * SEQ


# ---------------- in-kernel helpers (pure f32 element-wise math) ----------------
def _layernorm(x, g, b, eps=LN_EPS):
    mean = jnp.mean(x, axis=-1, keepdims=True)
    var = jnp.mean((x - mean) ** 2, axis=-1, keepdims=True)
    return (x - mean) * jax.lax.rsqrt(var + eps) * g + b


def _gelu(x):
    # TODO(synk): reference BERT uses exact erf-GELU; tanh approximation used (Mosaic-safe).
    c = math.sqrt(2.0 / math.pi)
    return 0.5 * x * (1.0 + jnp.tanh(c * (x + 0.044715 * x * x * x)))


# ---------------- fused encoder kernel (grid over layers) ----------------
def _encoder_kernel(emb_ref, bias_ref, eln_g_ref, eln_b_ref,
                    qkv_w_ref, qkv_b_ref, ao_w_ref, ao_b_ref,
                    aln_g_ref, aln_b_ref, i_w_ref, i_b_ref,
                    o_w_ref, o_b_ref, oln_g_ref, oln_b_ref,
                    pool_w_ref, pool_b_ref, fc_w_ref, fc_b_ref,
                    logits_ref, h_sc):
    layer = pl.program_id(0)

    # First grid step: embedding LayerNorm, result lives in VMEM scratch for all layers.
    @pl.when(layer == 0)
    def _():
        h_sc[...] = _layernorm(emb_ref[...].astype(jnp.float32),
                               eln_g_ref[...], eln_b_ref[...])

    x = h_sc[...]                                                # (B*S, H) f32

    # Fused QKV projection (1/sqrt(head_dim) already folded into the Q weights/bias).
    qkv = jnp.dot(x, qkv_w_ref[0],
                  preferred_element_type=jnp.float32) + qkv_b_ref[0]
    q = qkv[:, 0 * HIDDEN:1 * HIDDEN]
    k = qkv[:, 1 * HIDDEN:2 * HIDDEN]
    v = qkv[:, 2 * HIDDEN:3 * HIDDEN]

    # Multi-head self-attention: static (batch, head) unroll of tiny 2-D matmuls.
    batch_ctx = []
    for b in range(BATCH):
        r0, r1 = b * SEQ, (b + 1) * SEQ
        bias = bias_ref[b]                                       # (S, S) additive mask
        head_ctx = []
        for h in range(NUM_HEADS):
            c0, c1 = h * HEAD_DIM, (h + 1) * HEAD_DIM
            qh = q[r0:r1, c0:c1]                                 # (S, D)
            kh = k[r0:r1, c0:c1]
            vh = v[r0:r1, c0:c1]
            s = jax.lax.dot_general(
                qh, kh, (((1,), (1,)), ((), ())),
                preferred_element_type=jnp.float32) + bias       # (S, S)
            m = jnp.max(s, axis=-1, keepdims=True)
            p = jnp.exp(s - m)
            denom = jnp.sum(p, axis=-1, keepdims=True)
            p = p * pl.reciprocal(denom, approx=True)            # EUP, not VALU divide
            head_ctx.append(jnp.dot(p, vh,
                                    preferred_element_type=jnp.float32))
        batch_ctx.append(jnp.concatenate(head_ctx, axis=-1))     # (S, H)
    ctx = jnp.concatenate(batch_ctx, axis=0)                     # (B*S, H)

    # Attention output projection + residual + LayerNorm.
    attn = jnp.dot(ctx, ao_w_ref[0],
                   preferred_element_type=jnp.float32) + ao_b_ref[0]
    h1 = _layernorm(attn + x, aln_g_ref[0], aln_b_ref[0])

    # Feed-forward (GELU) + residual + LayerNorm.
    inter = _gelu(jnp.dot(h1, i_w_ref[0],
                          preferred_element_type=jnp.float32) + i_b_ref[0])
    out = jnp.dot(inter, o_w_ref[0],
                  preferred_element_type=jnp.float32) + o_b_ref[0]
    h2 = _layernorm(out + h1, oln_g_ref[0], oln_b_ref[0])
    h_sc[...] = h2

    # Last grid step: pooler (tanh on [CLS]) + classification head, fused in-kernel.
    @pl.when(layer == pl.num_programs(0) - 1)
    def _():
        first = jnp.concatenate(
            [h2[b * SEQ:b * SEQ + 1, :] for b in range(BATCH)], axis=0)  # (B, H)
        pooled = jnp.tanh(
            jnp.dot(first, pool_w_ref[...],
                    preferred_element_type=jnp.float32) + pool_b_ref[...])
        logits = jnp.dot(pooled, fc_w_ref[...],
                         preferred_element_type=jnp.float32) + fc_b_ref[...]
        logits_ref[...] = logits.astype(logits_ref.dtype)


def bert_classifier_forward(params, context, mask):
    """Equivalent of Model.forward(x) with x = (context, seq_len, mask)."""
    B, S = context.shape

    # Embedding gathers (plain-JAX glue), token_type_ids == 0 everywhere.
    we = jnp.take(params["word_emb"], context, axis=0)           # (B, S, H)
    pe = params["pos_emb"][:S][None, :, :]                       # (1, S, H)
    te = params["type_emb"][0][None, None, :]                    # (1, 1, H)
    emb = (we + pe + te).reshape(B * S, HIDDEN)

    # Additive attention-mask bias, pre-broadcast on the host to (B, S, S).
    mask_f = mask.astype(jnp.float32)
    bias = jnp.broadcast_to(((1.0 - mask_f) * -10000.0)[:, None, :], (B, S, S))

    const2 = lambda l: (0, 0)
    const3 = lambda l: (0, 0, 0)
    per_layer = lambda l: (l, 0, 0)

    grid_spec = pltpu.PrefetchScalarGridSpec(
        num_scalar_prefetch=0,
        grid=(NUM_LAYERS,),
        in_specs=[
            pl.BlockSpec((B * S, HIDDEN), const2),                 # emb
            pl.BlockSpec((B, S, S), const3),                       # mask bias
            pl.BlockSpec((1, HIDDEN), const2),                     # eln_g
            pl.BlockSpec((1, HIDDEN), const2),                     # eln_b
            pl.BlockSpec((1, HIDDEN, 3 * HIDDEN), per_layer),      # qkv_w
            pl.BlockSpec((1, 1, 3 * HIDDEN), per_layer),           # qkv_b
            pl.BlockSpec((1, HIDDEN, HIDDEN), per_layer),          # ao_w
            pl.BlockSpec((1, 1, HIDDEN), per_layer),               # ao_b
            pl.BlockSpec((1, 1, HIDDEN), per_layer),               # aln_g
            pl.BlockSpec((1, 1, HIDDEN), per_layer),               # aln_b
            pl.BlockSpec((1, HIDDEN, INTERMEDIATE), per_layer),    # i_w
            pl.BlockSpec((1, 1, INTERMEDIATE), per_layer),         # i_b
            pl.BlockSpec((1, INTERMEDIATE, HIDDEN), per_layer),    # o_w
            pl.BlockSpec((1, 1, HIDDEN), per_layer),               # o_b
            pl.BlockSpec((1, 1, HIDDEN), per_layer),               # oln_g
            pl.BlockSpec((1, 1, HIDDEN), per_layer),               # oln_b
            pl.BlockSpec((HIDDEN, HIDDEN), const2),                # pool_w
            pl.BlockSpec((1, HIDDEN), const2),                     # pool_b
            pl.BlockSpec((HIDDEN, NUM_CLASSES), const2),           # fc_w
            pl.BlockSpec((1, NUM_CLASSES), const2),                # fc_b
        ],
        out_specs=pl.BlockSpec((B, NUM_CLASSES), const2),
        scratch_shapes=[pltpu.VMEM((B * S, HIDDEN), jnp.float32)],
    )

    return pl.pallas_call(
        _encoder_kernel,
        out_shape=jax.ShapeDtypeStruct((B, NUM_CLASSES), jnp.float32),
        grid_spec=grid_spec,
        compiler_params=pltpu.CompilerParams(
            dimension_semantics=("arbitrary",)),     # layers are sequential
    )(emb, bias,
      params["eln_g"], params["eln_b"],
      params["qkv_w"], params["qkv_b"],
      params["ao_w"], params["ao_b"],
      params["aln_g"], params["aln_b"],
      params["i_w"], params["i_b"],
      params["o_w"], params["o_b"],
      params["oln_g"], params["oln_b"],
      params["pool_w"], params["pool_b"],
      params["fc_w"], params["fc_b"])


# ---------------- parameters (deterministic synthetic init, pre-packed) ----------------
def init_params(key):
    keys = jax.random.split(key, 64)
    it = iter(keys)

    def w(shape):
        return jax.random.normal(next(it), shape, jnp.float32) * 0.02

    def zeros(shape):
        return jnp.zeros(shape, jnp.float32)

    def ones(shape):
        return jnp.ones(shape, jnp.float32)

    scale = 1.0 / math.sqrt(HEAD_DIM)

    qkv_w, qkv_b = [], []
    ao_w, ao_b, aln_g, aln_b = [], [], [], []
    i_w, i_b, o_w, o_b, oln_g, oln_b = [], [], [], [], [], []
    for _ in range(NUM_LAYERS):
        qw, kw, vw = w((HIDDEN, HIDDEN)), w((HIDDEN, HIDDEN)), w((HIDDEN, HIDDEN))
        qb, kb, vb = zeros((HIDDEN,)), zeros((HIDDEN,)), zeros((HIDDEN,))
        # Fold the 1/sqrt(head_dim) attention scale into the Q projection.
        qkv_w.append(jnp.concatenate([qw * scale, kw, vw], axis=1))
        qkv_b.append(jnp.concatenate([qb * scale, kb, vb]).reshape(1, 3 * HIDDEN))
        ao_w.append(w((HIDDEN, HIDDEN)));       ao_b.append(zeros((1, HIDDEN)))
        aln_g.append(ones((1, HIDDEN)));        aln_b.append(zeros((1, HIDDEN)))
        i_w.append(w((HIDDEN, INTERMEDIATE)));  i_b.append(zeros((1, INTERMEDIATE)))
        o_w.append(w((INTERMEDIATE, HIDDEN)));  o_b.append(zeros((1, HIDDEN)))
        oln_g.append(ones((1, HIDDEN)));        oln_b.append(zeros((1, HIDDEN)))

    return {
        "word_emb": w((VOCAB_SIZE, HIDDEN)),
        "pos_emb": w((MAX_POS, HIDDEN)),
        "type_emb": w((TYPE_VOCAB, HIDDEN)),
        "eln_g": ones((1, HIDDEN)),
        "eln_b": zeros((1, HIDDEN)),
        "qkv_w": jnp.stack(qkv_w),   # (L, H, 3H)
        "qkv_b": jnp.stack(qkv_b),   # (L, 1, 3H)
        "ao_w": jnp.stack(ao_w),     # (L, H, H)
        "ao_b": jnp.stack(ao_b),     # (L, 1, H)
        "aln_g": jnp.stack(aln_g),
        "aln_b": jnp.stack(aln_b),
        "i_w": jnp.stack(i_w),       # (L, H, I)
        "i_b": jnp.stack(i_b),       # (L, 1, I)
        "o_w": jnp.stack(o_w),       # (L, I, H)
        "o_b": jnp.stack(o_b),
        "oln_g": jnp.stack(oln_g),
        "oln_b": jnp.stack(oln_b),
        "pool_w": w((HIDDEN, HIDDEN)),
        "pool_b": zeros((1, HIDDEN)),
        "fc_w": w((HIDDEN, NUM_CLASSES)),
        "fc_b": zeros((1, NUM_CLASSES)),
    }


if __name__ == "__main__":
    key = jax.random.PRNGKey(0)
    pkey, ckey = jax.random.split(key)
    params = init_params(pkey)

    # x = (context, seq_len, mask) — model uses x[0] and x[2]
    context = jax.random.randint(ckey, (BATCH, SEQ), 0, VOCAB_SIZE, jnp.int32)
    seq_len = jnp.full((BATCH,), SEQ, jnp.int32)   # unused (matches reference)
    mask = jnp.ones((BATCH, SEQ), jnp.int32).at[1, SEQ - 2:].set(0)  # some padding
    x = (context, seq_len, mask)

    fwd = jax.jit(lambda c, m: bert_classifier_forward(params, c, m))
    out = jax.block_until_ready(fwd(x[0], x[2]))
    assert out.shape == (BATCH, NUM_CLASSES)
    assert bool(jnp.all(jnp.isfinite(out)))
    print("KERNEL_OK")
</pallas_src>

<mosaic_0001>
module attributes {stable_mosaic.version = 11 : i64} {
  func.func @_encoder_kernel(%arg0: i32, %arg1: memref<16x32xf32, #tpu.memory_space<vmem>>, %arg2: memref<2x8x8xf32, #tpu.memory_space<vmem>>, %arg3: memref<1x32xf32, #tpu.memory_space<vmem>>, %arg4: memref<1x32xf32, #tpu.memory_space<vmem>>, %arg5: memref<1x32x96xf32, #tpu.memory_space<vmem>>, %arg6: memref<1x1x96xf32, #tpu.memory_space<vmem>>, %arg7: memref<1x32x32xf32, #tpu.memory_space<vmem>>, %arg8: memref<1x1x32xf32, #tpu.memory_space<vmem>>, %arg9: memref<1x1x32xf32, #tpu.memory_space<vmem>>, %arg10: memref<1x1x32xf32, #tpu.memory_space<vmem>>, %arg11: memref<1x32x64xf32, #tpu.memory_space<vmem>>, %arg12: memref<1x1x64xf32, #tpu.memory_space<vmem>>, %arg13: memref<1x64x32xf32, #tpu.memory_space<vmem>>, %arg14: memref<1x1x32xf32, #tpu.memory_space<vmem>>, %arg15: memref<1x1x32xf32, #tpu.memory_space<vmem>>, %arg16: memref<1x1x32xf32, #tpu.memory_space<vmem>>, %arg17: memref<32x32xf32, #tpu.memory_space<vmem>>, %arg18: memref<1x32xf32, #tpu.memory_space<vmem>>, %arg19: memref<32x3xf32, #tpu.memory_space<vmem>>, %arg20: memref<1x3xf32, #tpu.memory_space<vmem>>, %arg21: memref<2x3xf32, #tpu.memory_space<vmem>>, %arg22: memref<16x32xf32, #tpu.memory_space<vmem>>) attributes {dimension_semantics = [#tpu.dimension_semantics<arbitrary>], iteration_bounds = array<i64: 2>, scalar_prefetch = 0 : i64, scratch_operands = 1 : i64, tpu.core_type = #tpu.core_type<tc>, window_params = [{pipeline_mode = #tpu.pipeline_mode<synchronous>, transform_indices = @transform_0, window_bounds = array<i64: 16, 32>}, {pipeline_mode = #tpu.pipeline_mode<synchronous>, transform_indices = @transform_1, window_bounds = array<i64: 2, 8, 8>}, {pipeline_mode = #tpu.pipeline_mode<synchronous>, transform_indices = @transform_2, window_bounds = array<i64: 1, 32>}, {pipeline_mode = #tpu.pipeline_mode<synchronous>, transform_indices = @transform_3, window_bounds = array<i64: 1, 32>}, {transform_indices = @transform_4, window_bounds = array<i64: 1, 32, 96>}, {transform_indices = @transform_5, window_bounds = array<i64: 1, 1, 96>}, {transform_indices = @transform_6, window_bounds = array<i64: 1, 32, 32>}, {transform_indices = @transform_7, window_bounds = array<i64: 1, 1, 32>}, {transform_indices = @transform_8, window_bounds = array<i64: 1, 1, 32>}, {transform_indices = @transform_9, window_bounds = array<i64: 1, 1, 32>}, {transform_indices = @transform_10, window_bounds = array<i64: 1, 32, 64>}, {transform_indices = @transform_11, window_bounds = array<i64: 1, 1, 64>}, {transform_indices = @transform_12, window_bounds = array<i64: 1, 64, 32>}, {transform_indices = @transform_13, window_bounds = array<i64: 1, 1, 32>}, {transform_indices = @transform_14, window_bounds = array<i64: 1, 1, 32>}, {transform_indices = @transform_15, window_bounds = array<i64: 1, 1, 32>}, {pipeline_mode = #tpu.pipeline_mode<synchronous>, transform_indices = @transform_16, window_bounds = array<i64: 32, 32>}, {pipeline_mode = #tpu.pipeline_mode<synchronous>, transform_indices = @transform_17, window_bounds = array<i64: 1, 32>}, {pipeline_mode = #tpu.pipeline_mode<synchronous>, transform_indices = @transform_18, window_bounds = array<i64: 32, 3>}, {pipeline_mode = #tpu.pipeline_mode<synchronous>, transform_indices = @transform_19, window_bounds = array<i64: 1, 3>}, {pipeline_mode = #tpu.pipeline_mode<synchronous>, transform_indices = @transform_20, window_bounds = array<i64: 2, 3>}]} {
    %c0_i32 = arith.constant 0 : i32
    %0 = arith.cmpi eq, %arg0, %c0_i32 : i32
    %1 = arith.extui %0 : i1 to i32
    %c0_i32_0 = arith.constant 0 : i32
    %2 = arith.cmpi ne, %1, %c0_i32_0 : i32
    scf.if %2 {
      %c0_95 = arith.constant 0 : index
      %c0_96 = arith.constant 0 : index
      %241 = vector.load %arg1[%c0_95, %c0_96] : memref<16x32xf32, #tpu.memory_space<vmem>>, vector<16x32xf32>
      %c0_97 = arith.constant 0 : index
      %c0_98 = arith.constant 0 : index
      %242 = vector.load %arg3[%c0_97, %c0_98] : memref<1x32xf32, #tpu.memory_space<vmem>>, vector<1x32xf32>
      %c0_99 = arith.constant 0 : index
      %c0_100 = arith.constant 0 : index
      %243 = vector.load %arg4[%c0_99, %c0_100] : memref<1x32xf32, #tpu.memory_space<vmem>>, vector<1x32xf32>
      %cst_101 = arith.constant dense<0.000000e+00> : vector<16xf32>
      %244 = vector.multi_reduction <add>, %241, %cst_101 [1] : vector<16x32xf32> to vector<16xf32>
      %245 = vector.shape_cast %244 : vector<16xf32> to vector<16x1xf32>
      %cst_102 = arith.constant 3.200000e+01 : f32
      %246 = vector.broadcast %cst_102 : f32 to vector<16x1xf32>
      %247 = arith.divf %245, %246 : vector<16x1xf32>
      %248 = vector.broadcast %247 : vector<16x1xf32> to vector<16x32xf32>
      %249 = arith.subf %241, %248 : vector<16x32xf32>
      %250 = arith.mulf %249, %249 : vector<16x32xf32>
      %cst_103 = arith.constant dense<0.000000e+00> : vector<16xf32>
      %251 = vector.multi_reduction <add>, %250, %cst_103 [1] : vector<16x32xf32> to vector<16xf32>
      %252 = vector.shape_cast %251 : vector<16xf32> to vector<16x1xf32>
      %cst_104 = arith.constant 3.200000e+01 : f32
      %253 = vector.broadcast %cst_104 : f32 to vector<16x1xf32>
      %254 = arith.divf %252, %253 : vector<16x1xf32>
      %255 = vector.broadcast %247 : vector<16x1xf32> to vector<16x32xf32>
      %256 = arith.subf %241, %255 : vector<16x32xf32>
      %cst_105 = arith.constant 9.99999996E-13 : f32
      %257 = vector.broadcast %cst_105 : f32 to vector<16x1xf32>
      %258 = arith.addf %254, %257 : vector<16x1xf32>
      %259 = math.rsqrt %258 : vector<16x1xf32>
      %260 = vector.broadcast %259 : vector<16x1xf32> to vector<16x32xf32>
      %261 = arith.mulf %256, %260 : vector<16x32xf32>
      %262 = vector.broadcast %242 : vector<1x32xf32> to vector<16x32xf32>
      %263 = arith.mulf %261, %262 : vector<16x32xf32>
      %264 = vector.broadcast %243 : vector<1x32xf32> to vector<16x32xf32>
      %265 = arith.addf %263, %264 : vector<16x32xf32>
      %c0_106 = arith.constant 0 : index
      %c0_107 = arith.constant 0 : index
      %266 = vector.load %arg22[%c0_106, %c0_107] : memref<16x32xf32, #tpu.memory_space<vmem>>, vector<16x32xf32>
      tpu.vector_store %arg22[%c0_106, %c0_107], %265 {strides = array<i32>} : memref<16x32xf32, #tpu.memory_space<vmem>>, vector<16x32xf32>,
    } else {
    }
    %c0 = arith.constant 0 : index
    %c0_1 = arith.constant 0 : index
    %3 = vector.load %arg22[%c0, %c0_1] : memref<16x32xf32, #tpu.memory_space<vmem>>, vector<16x32xf32>
    %c0_2 = arith.constant 0 : index
    %c0_3 = arith.constant 0 : index
    %c0_4 = arith.constant 0 : index
    %4 = vector.load %arg5[%c0_2, %c0_3, %c0_4] : memref<1x32x96xf32, #tpu.memory_space<vmem>>, vector<1x32x96xf32>
    %5 = vector.shape_cast %4 : vector<1x32x96xf32> to vector<32x96xf32>
    %cst = arith.constant dense<0.000000e+00> : vector<16x96xf32>
    %6 = tpu.matmul %3, %5, %cst {dimension_numbers = #tpu.dot_dimension_numbers<[1], [0], [0], [1], [0, 0, 1, 1], [], []>} : vector<16x32xf32>, vector<32x96xf32>, vector<16x96xf32> -> vector<16x96xf32>
    %c0_5 = arith.constant 0 : index
    %c0_6 = arith.constant 0 : index
    %c0_7 = arith.constant 0 : index
    %7 = vector.load %arg6[%c0_5, %c0_6, %c0_7] : memref<1x1x96xf32, #tpu.memory_space<vmem>>, vector<1x1x96xf32>
    %8 = vector.shape_cast %7 : vector<1x1x96xf32> to vector<1x96xf32>
    %9 = vector.broadcast %8 : vector<1x96xf32> to vector<16x96xf32>
    %10 = arith.addf %6, %9 : vector<16x96xf32>
    %11 = vector.extract_strided_slice %10 {offsets = [0, 0], sizes = [16, 32], strides = [1, 1]} : vector<16x96xf32> to vector<16x32xf32>
    %12 = vector.extract_strided_slice %10 {offsets = [0, 32], sizes = [16, 32], strides = [1, 1]} : vector<16x96xf32> to vector<16x32xf32>
    %13 = vector.extract_strided_slice %10 {offsets = [0, 64], sizes = [16, 32], strides = [1, 1]} : vector<16x96xf32> to vector<16x32xf32>
    %c0_8 = arith.constant 0 : index
    %c0_9 = arith.constant 0 : index
    %c0_10 = arith.constant 0 : index
    %14 = vector.load %arg2[%c0_8, %c0_9, %c0_10] : memref<2x8x8xf32, #tpu.memory_space<vmem>>, vector<1x8x8xf32>
    %15 = vector.shape_cast %14 : vector<1x8x8xf32> to vector<8x8xf32>
    %16 = vector.extract_strided_slice %11 {offsets = [0, 0], sizes = [8, 8], strides = [1, 1]} : vector<16x32xf32> to vector<8x8xf32>
    %17 = vector.extract_strided_slice %12 {offsets = [0, 0], sizes = [8, 8], strides = [1, 1]} : vector<16x32xf32> to vector<8x8xf32>
    %18 = vector.extract_strided_slice %13 {offsets = [0, 0], sizes = [8, 8], strides = [1, 1]} : vector<16x32xf32> to vector<8x8xf32>
    %cst_11 = arith.constant dense<0.000000e+00> : vector<8x8xf32>
    %19 = tpu.matmul %16, %17, %cst_11 {dimension_numbers = #tpu.dot_dimension_numbers<[1], [1], [0], [0], [0, 0, 1, 0], [], []>} : vector<8x8xf32>, vector<8x8xf32>, vector<8x8xf32> -> vector<8x8xf32>
    %20 = arith.addf %19, %15 : vector<8x8xf32>
    %cst_12 = arith.constant dense<0xFF800000> : vector<8xf32>
    %21 = vector.multi_reduction <maximumf>, %20, %cst_12 [1] : vector<8x8xf32> to vector<8xf32>
    %22 = vector.shape_cast %21 : vector<8xf32> to vector<8x1xf32>
    %23 = vector.broadcast %22 : vector<8x1xf32> to vector<8x8xf32>
    %24 = arith.subf %20, %23 : vector<8x8xf32>
    %25 = math.exp %24 : vector<8x8xf32>
    %cst_13 = arith.constant dense<0.000000e+00> : vector<8xf32>
    %26 = vector.multi_reduction <add>, %25, %cst_13 [1] : vector<8x8xf32> to vector<8xf32>
    %27 = vector.shape_cast %26 : vector<8xf32> to vector<8x1xf32>
    %28 = tpu.reciprocal %27 {approx = true} : vector<8x1xf32> -> vector<8x1xf32>
    %29 = vector.broadcast %28 : vector<8x1xf32> to vector<8x8xf32>
    %30 = arith.mulf %25, %29 : vector<8x8xf32>
    %cst_14 = arith.constant dense<0.000000e+00> : vector<8x8xf32>
    %31 = tpu.matmul %30, %18, %cst_14 {dimension_numbers = #tpu.dot_dimension_numbers<[1], [0], [0], [1], [0, 0, 1, 1], [], []>} : vector<8x8xf32>, vector<8x8xf32>, vector<8x8xf32> -> vector<8x8xf32>
    %32 = vector.extract_strided_slice %11 {offsets = [0, 8], sizes = [8, 8], strides = [1, 1]} : vector<16x32xf32> to vector<8x8xf32>
    %33 = vector.extract_strided_slice %12 {offsets = [0, 8], sizes = [8, 8], strides = [1, 1]} : vector<16x32xf32> to vector<8x8xf32>
    %34 = vector.extract_strided_slice %13 {offsets = [0, 8], sizes = [8, 8], strides = [1, 1]} : vector<16x32xf32> to vector<8x8xf32>
    %cst_15 = arith.constant dense<0.000000e+00> : vector<8x8xf32>
    %35 = tpu.matmul %32, %33, %cst_15 {dimension_numbers = #tpu.dot_dimension_numbers<[1], [1], [0], [0], [0, 0, 1, 0], [], []>} : vector<8x8xf32>, vector<8x8xf32>, vector<8x8xf32> -> vector<8x8xf32>
    %36 = arith.addf %35, %15 : vector<8x8xf32>
    %cst_16 = arith.constant dense<0xFF800000> : vector<8xf32>
    %37 = vector.multi_reduction <maximumf>, %36, %cst_16 [1] : vector<8x8xf32> to vector<8xf32>
    %38 = vector.shape_cast %37 : vector<8xf32> to vector<8x1xf32>
    %39 = vector.broadcast %38 : vector<8x1xf32> to vector<8x8xf32>
    %40 = arith.subf %36, %39 : vector<8x8xf32>
    %41 = math.exp %40 : vector<8x8xf32>
    %cst_17 = arith.constant dense<0.000000e+00> : vector<8xf32>
    %42 = vector.multi_reduction <add>, %41, %cst_17 [1] : vector<8x8xf32> to vector<8xf32>
    %43 = vector.shape_cast %42 : vector<8xf32> to vector<8x1xf32>
    %44 = tpu.reciprocal %43 {approx = true} : vector<8x1xf32> -> vector<8x1xf32>
    %45 = vector.broadcast %44 : vector<8x1xf32> to vector<8x8xf32>
    %46 = arith.mulf %41, %45 : vector<8x8xf32>
    %cst_18 = arith.constant dense<0.000000e+00> : vector<8x8xf32>
    %47 = tpu.matmul %46, %34, %cst_18 {dimension_numbers = #tpu.dot_dimension_numbers<[1], [0], [0], [1], [0, 0, 1, 1], [], []>} : vector<8x8xf32>, vector<8x8xf32>, vector<8x8xf32> -> vector<8x8xf32>
    %48 = vector.extract_strided_slice %11 {offsets = [0, 16], sizes = [8, 8], strides = [1, 1]} : vector<16x32xf32> to vector<8x8xf32>
    %49 = vector.extract_strided_slice %12 {offsets = [0, 16], sizes = [8, 8], strides = [1, 1]} : vector<16x32xf32> to vector<8x8xf32>
    %50 = vector.extract_strided_slice %13 {offsets = [0, 16], sizes = [8, 8], strides = [1, 1]} : vector<16x32xf32> to vector<8x8xf32>
    %cst_19 = arith.constant dense<0.000000e+00> : vector<8x8xf32>
    %51 = tpu.matmul %48, %49, %cst_19 {dimension_numbers = #tpu.dot_dimension_numbers<[1], [1], [0], [0], [0, 0, 1, 0], [], []>} : vector<8x8xf32>, vector<8x8xf32>, vector<8x8xf32> -> vector<8x8xf32>
    %52 = arith.addf %51, %15 : vector<8x8xf32>
    %cst_20 = arith.constant dense<0xFF800000> : vector<8xf32>
    %53 = vector.multi_reduction <maximumf>, %52, %cst_20 [1] : vector<8x8xf32> to vector<8xf32>
    %54 = vector.shape_cast %53 : vector<8xf32> to vector<8x1xf32>
    %55 = vector.broadcast %54 : vector<8x1xf32> to vector<8x8xf32>
    %56 = arith.subf %52, %55 : vector<8x8xf32>
    %57 = math.exp %56 : vector<8x8xf32>
    %cst_21 = arith.constant dense<0.000000e+00> : vector<8xf32>
    %58 = vector.multi_reduction <add>, %57, %cst_21 [1] : vector<8x8xf32> to vector<8xf32>
    %59 = vector.shape_cast %58 : vector<8xf32> to vector<8x1xf32>
    %60 = tpu.reciprocal %59 {approx = true} : vector<8x1xf32> -> vector<8x1xf32>
    %61 = vector.broadcast %60 : vector<8x1xf32> to vector<8x8xf32>
    %62 = arith.mulf %57, %61 : vector<8x8xf32>
    %cst_22 = arith.constant dense<0.000000e+00> : vector<8x8xf32>
    %63 = tpu.matmul %62, %50, %cst_22 {dimension_numbers = #tpu.dot_dimension_numbers<[1], [0], [0], [1], [0, 0, 1, 1], [], []>} : vector<8x8xf32>, vector<8x8xf32>, vector<8x8xf32> -> vector<8x8xf32>
    %64 = vector.extract_strided_slice %11 {offsets = [0, 24], sizes = [8, 8], strides = [1, 1]} : vector<16x32xf32> to vector<8x8xf32>
    %65 = vector.extract_strided_slice %12 {offsets = [0, 24], sizes = [8, 8], strides = [1, 1]} : vector<16x32xf32> to vector<8x8xf32>
    %66 = vector.extract_strided_slice %13 {offsets = [0, 24], sizes = [8, 8], strides = [1, 1]} : vector<16x32xf32> to vector<8x8xf32>
    %cst_23 = arith.constant dense<0.000000e+00> : vector<8x8xf32>
    %67 = tpu.matmul %64, %65, %cst_23 {dimension_numbers = #tpu.dot_dimension_numbers<[1], [1], [0], [0], [0, 0, 1, 0], [], []>} : vector<8x8xf32>, vector<8x8xf32>, vector<8x8xf32> -> vector<8x8xf32>
    %68 = arith.addf %67, %15 : vector<8x8xf32>
    %cst_24 = arith.constant dense<0xFF800000> : vector<8xf32>
    %69 = vector.multi_reduction <maximumf>, %68, %cst_24 [1] : vector<8x8xf32> to vector<8xf32>
    %70 = vector.shape_cast %69 : vector<8xf32> to vector<8x1xf32>
    %71 = vector.broadcast %70 : vector<8x1xf32> to vector<8x8xf32>
    %72 = arith.subf %68, %71 : vector<8x8xf32>
    %73 = math.exp %72 : vector<8x8xf32>
    %cst_25 = arith.constant dense<0.000000e+00> : vector<8xf32>
    %74 = vector.multi_reduction <add>, %73, %cst_25 [1] : vector<8x8xf32> to vector<8xf32>
    %75 = vector.shape_cast %74 : vector<8xf32> to vector<8x1xf32>
    %76 = tpu.reciprocal %75 {approx = true} : vector<8x1xf32> -> vector<8x1xf32>
    %77 = vector.broadcast %76 : vector<8x1xf32> to vector<8x8xf32>
    %78 = arith.mulf %73, %77 : vector<8x8xf32>
    %cst_26 = arith.constant dense<0.000000e+00> : vector<8x8xf32>
    %79 = tpu.matmul %78, %66, %cst_26 {dimension_numbers = #tpu.dot_dimension_numbers<[1], [0], [0], [1], [0, 0, 1, 1], [], []>} : vector<8x8xf32>, vector<8x8xf32>, vector<8x8xf32> -> vector<8x8xf32>
    %80 = tpu.concatenate %31, %47, %63, %79 in 1 : vector<8x8xf32>, vector<8x8xf32>, vector<8x8xf32>, vector<8x8xf32> -> vector<8x32xf32>
    %c1 = arith.constant 1 : index
    %c0_27 = arith.constant 0 : index
    %c0_28 = arith.constant 0 : index
    %81 = vector.load %arg2[%c1, %c0_27, %c0_28] : memref<2x8x8xf32, #tpu.memory_space<vmem>>, vector<1x8x8xf32>
    %82 = vector.shape_cast %81 : vector<1x8x8xf32> to vector<8x8xf32>
    %83 = vector.extract_strided_slice %11 {offsets = [8, 0], sizes = [8, 8], strides = [1, 1]} : vector<16x32xf32> to vector<8x8xf32>
    %84 = vector.extract_strided_slice %12 {offsets = [8, 0], sizes = [8, 8], strides = [1, 1]} : vector<16x32xf32> to vector<8x8xf32>
    %85 = vector.extract_strided_slice %13 {offsets = [8, 0], sizes = [8, 8], strides = [1, 1]} : vector<16x32xf32> to vector<8x8xf32>
    %cst_29 = arith.constant dense<0.000000e+00> : vector<8x8xf32>
    %86 = tpu.matmul %83, %84, %cst_29 {dimension_numbers = #tpu.dot_dimension_numbers<[1], [1], [0], [0], [0, 0, 1, 0], [], []>} : vector<8x8xf32>, vector<8x8xf32>, vector<8x8xf32> -> vector<8x8xf32>
    %87 = arith.addf %86, %82 : vector<8x8xf32>
    %cst_30 = arith.constant dense<0xFF800000> : vector<8xf32>
    %88 = vector.multi_reduction <maximumf>, %87, %cst_30 [1] : vector<8x8xf32> to vector<8xf32>
    %89 = vector.shape_cast %88 : vector<8xf32> to vector<8x1xf32>
    %90 = vector.broadcast %89 : vector<8x1xf32> to vector<8x8xf32>
    %91 = arith.subf %87, %90 : vector<8x8xf32>
    %92 = math.exp %91 : vector<8x8xf32>
    %cst_31 = arith.constant dense<0.000000e+00> : vector<8xf32>
    %93 = vector.multi_reduction <add>, %92, %cst_31 [1] : vector<8x8xf32> to vector<8xf32>
    %94 = vector.shape_cast %93 : vector<8xf32> to vector<8x1xf32>
    %95 = tpu.reciprocal %94 {approx = true} : vector<8x1xf32> -> vector<8x1xf32>
    %96 = vector.broadcast %95 : vector<8x1xf32> to vector<8x8xf32>
    %97 = arith.mulf %92, %96 : vector<8x8xf32>
    %cst_32 = arith.constant dense<0.000000e+00> : vector<8x8xf32>
    %98 = tpu.matmul %97, %85, %cst_32 {dimension_numbers = #tpu.dot_dimension_numbers<[1], [0], [0], [1], [0, 0, 1, 1], [], []>} : vector<8x8xf32>, vector<8x8xf32>, vector<8x8xf32> -> vector<8x8xf32>
    %99 = vector.extract_strided_slice %11 {offsets = [8, 8], sizes = [8, 8], strides = [1, 1]} : vector<16x32xf32> to vector<8x8xf32>
    %100 = vector.extract_strided_slice %12 {offsets = [8, 8], sizes = [8, 8], strides = [1, 1]} : vector<16x32xf32> to vector<8x8xf32>
    %101 = vector.extract_strided_slice %13 {offsets = [8, 8], sizes = [8, 8], strides = [1, 1]} : vector<16x32xf32> to vector<8x8xf32>
    %cst_33 = arith.constant dense<0.000000e+00> : vector<8x8xf32>
    %102 = tpu.matmul %99, %100, %cst_33 {dimension_numbers = #tpu.dot_dimension_numbers<[1], [1], [0], [0], [0, 0, 1, 0], [], []>} : vector<8x8xf32>, vector<8x8xf32>, vector<8x8xf32> -> vector<8x8xf32>
    %103 = arith.addf %102, %82 : vector<8x8xf32>
    %cst_34 = arith.constant dense<0xFF800000> : vector<8xf32>
    %104 = vector.multi_reduction <maximumf>, %103, %cst_34 [1] : vector<8x8xf32> to vector<8xf32>
    %105 = vector.shape_cast %104 : vector<8xf32> to vector<8x1xf32>
    %106 = vector.broadcast %105 : vector<8x1xf32> to vector<8x8xf32>
    %107 = arith.subf %103, %106 : vector<8x8xf32>
    %108 = math.exp %107 : vector<8x8xf32>
    %cst_35 = arith.constant dense<0.000000e+00> : vector<8xf32>
    %109 = vector.multi_reduction <add>, %108, %cst_35 [1] : vector<8x8xf32> to vector<8xf32>
    %110 = vector.shape_cast %109 : vector<8xf32> to vector<8x1xf32>
    %111 = tpu.reciprocal %110 {approx = true} : vector<8x1xf32> -> vector<8x1xf32>
    %112 = vector.broadcast %111 : vector<8x1xf32> to vector<8x8xf32>
    %113 = arith.mulf %108, %112 : vector<8x8xf32>
    %cst_36 = arith.constant dense<0.000000e+00> : vector<8x8xf32>
    %114 = tpu.matmul %113, %101, %cst_36 {dimension_numbers = #tpu.dot_dimension_numbers<[1], [0], [0], [1], [0, 0, 1, 1], [], []>} : vector<8x8xf32>, vector<8x8xf32>, vector<8x8xf32> -> vector<8x8xf32>
    %115 = vector.extract_strided_slice %11 {offsets = [8, 16], sizes = [8, 8], strides = [1, 1]} : vector<16x32xf32> to vector<8x8xf32>
    %116 = vector.extract_strided_slice %12 {offsets = [8, 16], sizes = [8, 8], strides = [1, 1]} : vector<16x32xf32> to vector<8x8xf32>
    %117 = vector.extract_strided_slice %13 {offsets = [8, 16], sizes = [8, 8], strides = [1, 1]} : vector<16x32xf32> to vector<8x8xf32>
    %cst_37 = arith.constant dense<0.000000e+00> : vector<8x8xf32>
    %118 = tpu.matmul %115, %116, %cst_37 {dimension_numbers = #tpu.dot_dimension_numbers<[1], [1], [0], [0], [0, 0, 1, 0], [], []>} : vector<8x8xf32>, vector<8x8xf32>, vector<8x8xf32> -> vector<8x8xf32>
    %119 = arith.addf %118, %82 : vector<8x8xf32>
    %cst_38 = arith.constant dense<0xFF800000> : vector<8xf32>
    %120 = vector.multi_reduction <maximumf>, %119, %cst_38 [1] : vector<8x8xf32> to vector<8xf32>
    %121 = vector.shape_cast %120 : vector<8xf32> to vector<8x1xf32>
    %122 = vector.broadcast %121 : vector<8x1xf32> to vector<8x8xf32>
    %123 = arith.subf %119, %122 : vector<8x8xf32>
    %124 = math.exp %123 : vector<8x8xf32>
    %cst_39 = arith.constant dense<0.000000e+00> : vector<8xf32>
    %125 = vector.multi_reduction <add>, %124, %cst_39 [1] : vector<8x8xf32> to vector<8xf32>
    %126 = vector.shape_cast %125 : vector<8xf32> to vector<8x1xf32>
    %127 = tpu.reciprocal %126 {approx = true} : vector<8x1xf32> -> vector<8x1xf32>
    %128 = vector.broadcast %127 : vector<8x1xf32> to vector<8x8xf32>
    %129 = arith.mulf %124, %128 : vector<8x8xf32>
    %cst_40 = arith.constant dense<0.000000e+00> : vector<8x8xf32>
    %130 = tpu.matmul %129, %117, %cst_40 {dimension_numbers = #tpu.dot_dimension_numbers<[1], [0], [0], [1], [0, 0, 1, 1], [], []>} : vector<8x8xf32>, vector<8x8xf32>, vector<8x8xf32> -> vector<8x8xf32>
    %131 = vector.extract_strided_slice %11 {offsets = [8, 24], sizes = [8, 8], strides = [1, 1]} : vector<16x32xf32> to vector<8x8xf32>
    %132 = vector.extract_strided_slice %12 {offsets = [8, 24], sizes = [8, 8], strides = [1, 1]} : vector<16x32xf32> to vector<8x8xf32>
    %133 = vector.extract_strided_slice %13 {offsets = [8, 24], sizes = [8, 8], strides = [1, 1]} : vector<16x32xf32> to vector<8x8xf32>
    %cst_41 = arith.constant dense<0.000000e+00> : vector<8x8xf32>
    %134 = tpu.matmul %131, %132, %cst_41 {dimension_numbers = #tpu.dot_dimension_numbers<[1], [1], [0], [0], [0, 0, 1, 0], [], []>} : vector<8x8xf32>, vector<8x8xf32>, vector<8x8xf32> -> vector<8x8xf32>
    %135 = arith.addf %134, %82 : vector<8x8xf32>
    %cst_42 = arith.constant dense<0xFF800000> : vector<8xf32>
    %136 = vector.multi_reduction <maximumf>, %135, %cst_42 [1] : vector<8x8xf32> to vector<8xf32>
    %137 = vector.shape_cast %136 : vector<8xf32> to vector<8x1xf32>
    %138 = vector.broadcast %137 : vector<8x1xf32> to vector<8x8xf32>
    %139 = arith.subf %135, %138 : vector<8x8xf32>
    %140 = math.exp %139 : vector<8x8xf32>
    %cst_43 = arith.constant dense<0.000000e+00> : vector<8xf32>
    %141 = vector.multi_reduction <add>, %140, %cst_43 [1] : vector<8x8xf32> to vector<8xf32>
    %142 = vector.shape_cast %141 : vector<8xf32> to vector<8x1xf32>
    %143 = tpu.reciprocal %142 {approx = true} : vector<8x1xf32> -> vector<8x1xf32>
    %144 = vector.broadcast %143 : vector<8x1xf32> to vector<8x8xf32>
    %145 = arith.mulf %140, %144 : vector<8x8xf32>
    %cst_44 = arith.constant dense<0.000000e+00> : vector<8x8xf32>
    %146 = tpu.matmul %145, %133, %cst_44 {dimension_numbers = #tpu.dot_dimension_numbers<[1], [0], [0], [1], [0, 0, 1, 1], [], []>} : vector<8x8xf32>, vector<8x8xf32>, vector<8x8xf32> -> vector<8x8xf32>
    %147 = tpu.concatenate %98, %114, %130, %146 in 1 : vector<8x8xf32>, vector<8x8xf32>, vector<8x8xf32>, vector<8x8xf32> -> vector<8x32xf32>
    %148 = tpu.concatenate %80, %147 in 0 : vector<8x32xf32>, vector<8x32xf32> -> vector<16x32xf32>
    %c0_45 = arith.constant 0 : index
    %c0_46 = arith.constant 0 : index
    %c0_47 = arith.constant 0 : index
    %149 = vector.load %arg7[%c0_45, %c0_46, %c0_47] : memref<1x32x32xf32, #tpu.memory_space<vmem>>, vector<1x32x32xf32>
    %150 = vector.shape_cast %149 : vector<1x32x32xf32> to vector<32x32xf32>
    %cst_48 = arith.constant dense<0.000000e+00> : vector<16x32xf32>
    %151 = tpu.matmul %148, %150, %cst_48 {dimension_numbers = #tpu.dot_dimension_numbers<[1], [0], [0], [1], [0, 0, 1, 1], [], []>} : vector<16x32xf32>, vector<32x32xf32>, vector<16x32xf32> -> vector<16x32xf32>
    %c0_49 = arith.constant 0 : index
    %c0_50 = arith.constant 0 : index
    %c0_51 = arith.constant 0 : index
    %152 = vector.load %arg8[%c0_49, %c0_50, %c0_51] : memref<1x1x32xf32, #tpu.memory_space<vmem>>, vector<1x1x32xf32>
    %153 = vector.shape_cast %152 : vector<1x1x32xf32> to vector<1x32xf32>
    %154 = vector.broadcast %153 : vector<1x32xf32> to vector<16x32xf32>
    %155 = arith.addf %151, %154 : vector<16x32xf32>
    %156 = arith.addf %155, %3 : vector<16x32xf32>
    %c0_52 = arith.constant 0 : index
    %c0_53 = arith.constant 0 : index
    %c0_54 = arith.constant 0 : index
    %157 = vector.load %arg9[%c0_52, %c0_53, %c0_54] : memref<1x1x32xf32, #tpu.memory_space<vmem>>, vector<1x1x32xf32>
    %158 = vector.shape_cast %157 : vector<1x1x32xf32> to vector<1x32xf32>
    %c0_55 = arith.constant 0 : index
    %c0_56 = arith.constant 0 : index
    %c0_57 = arith.constant 0 : index
    %159 = vector.load %arg10[%c0_55, %c0_56, %c0_57] : memref<1x1x32xf32, #tpu.memory_space<vmem>>, vector<1x1x32xf32>
    %160 = vector.shape_cast %159 : vector<1x1x32xf32> to vector<1x32xf32>
    %cst_58 = arith.constant dense<0.000000e+00> : vector<16xf32>
    %161 = vector.multi_reduction <add>, %156, %cst_58 [1] : vector<16x32xf32> to vector<16xf32>
    %162 = vector.shape_cast %161 : vector<16xf32> to vector<16x1xf32>
    %cst_59 = arith.constant 3.200000e+01 : f32
    %163 = vector.broadcast %cst_59 : f32 to vector<16x1xf32>
    %164 = arith.divf %162, %163 : vector<16x1xf32>
    %165 = vector.broadcast %164 : vector<16x1xf32> to vector<16x32xf32>
    %166 = arith.subf %156, %165 : vector<16x32xf32>
    %167 = arith.mulf %166, %166 : vector<16x32xf32>
    %cst_60 = arith.constant dense<0.000000e+00> : vector<16xf32>
    %168 = vector.multi_reduction <add>, %167, %cst_60 [1] : vector<16x32xf32> to vector<16xf32>
    %169 = vector.shape_cast %168 : vector<16xf32> to vector<16x1xf32>
    %cst_61 = arith.constant 3.200000e+01 : f32
    %170 = vector.broadcast %cst_61 : f32 to vector<16x1xf32>
    %171 = arith.divf %169, %170 : vector<16x1xf32>
    %172 = vector.broadcast %164 : vector<16x1xf32> to vector<16x32xf32>
    %173 = arith.subf %156, %172 : vector<16x32xf32>
    %cst_62 = arith.constant 9.99999996E-13 : f32
    %174 = vector.broadcast %cst_62 : f32 to vector<16x1xf32>
    %175 = arith.addf %171, %174 : vector<16x1xf32>
    %176 = math.rsqrt %175 : vector<16x1xf32>
    %177 = vector.broadcast %176 : vector<16x1xf32> to vector<16x32xf32>
    %178 = arith.mulf %173, %177 : vector<16x32xf32>
    %179 = vector.broadcast %158 : vector<1x32xf32> to vector<16x32xf32>
    %180 = arith.mulf %178, %179 : vector<16x32xf32>
    %181 = vector.broadcast %160 : vector<1x32xf32> to vector<16x32xf32>
    %182 = arith.addf %180, %181 : vector<16x32xf32>
    %c0_63 = arith.constant 0 : index
    %c0_64 = arith.constant 0 : index
    %c0_65 = arith.constant 0 : index
    %183 = vector.load %arg11[%c0_63, %c0_64, %c0_65] : memref<1x32x64xf32, #tpu.memory_space<vmem>>, vector<1x32x64xf32>
    %184 = vector.shape_cast %183 : vector<1x32x64xf32> to vector<32x64xf32>
    %cst_66 = arith.constant dense<0.000000e+00> : vector<16x64xf32>
    %185 = tpu.matmul %182, %184, %cst_66 {dimension_numbers = #tpu.dot_dimension_numbers<[1], [0], [0], [1], [0, 0, 1, 1], [], []>} : vector<16x32xf32>, vector<32x64xf32>, vector<16x64xf32> -> vector<16x64xf32>
    %c0_67 = arith.constant 0 : index
    %c0_68 = arith.constant 0 : index
    %c0_69 = arith.constant 0 : index
    %186 = vector.load %arg12[%c0_67, %c0_68, %c0_69] : memref<1x1x64xf32, #tpu.memory_space<vmem>>, vector<1x1x64xf32>
    %187 = vector.shape_cast %186 : vector<1x1x64xf32> to vector<1x64xf32>
    %188 = vector.broadcast %187 : vector<1x64xf32> to vector<16x64xf32>
    %189 = arith.addf %185, %188 : vector<16x64xf32>
    %cst_70 = arith.constant 5.000000e-01 : f32
    %190 = vector.broadcast %cst_70 : f32 to vector<16x64xf32>
    %191 = arith.mulf %190, %189 : vector<16x64xf32>
    %cst_71 = arith.constant 4.471500e-02 : f32
    %192 = vector.broadcast %cst_71 : f32 to vector<16x64xf32>
    %193 = arith.mulf %192, %189 : vector<16x64xf32>
    %194 = arith.mulf %193, %189 : vector<16x64xf32>
    %195 = arith.mulf %194, %189 : vector<16x64xf32>
    %196 = arith.addf %189, %195 : vector<16x64xf32>
    %cst_72 = arith.constant 0.797884583 : f32
    %197 = vector.broadcast %cst_72 : f32 to vector<16x64xf32>
    %198 = arith.mulf %197, %196 : vector<16x64xf32>
    %199 = math.tanh %198 : vector<16x64xf32>
    %cst_73 = arith.constant 1.000000e+00 : f32
    %200 = vector.broadcast %cst_73 : f32 to vector<16x64xf32>
    %201 = arith.addf %200, %199 : vector<16x64xf32>
    %202 = arith.mulf %191, %201 : vector<16x64xf32>
    %c0_74 = arith.constant 0 : index
    %c0_75 = arith.constant 0 : index
    %c0_76 = arith.constant 0 : index
    %203 = vector.load %arg13[%c0_74, %c0_75, %c0_76] : memref<1x64x32xf32, #tpu.memory_space<vmem>>, vector<1x64x32xf32>
    %204 = vector.shape_cast %203 : vector<1x64x32xf32> to vector<64x32xf32>
    %cst_77 = arith.constant dense<0.000000e+00> : vector<16x32xf32>
    %205 = tpu.matmul %202, %204, %cst_77 {dimension_numbers = #tpu.dot_dimension_numbers<[1], [0], [0], [1], [0, 0, 1, 1], [], []>} : vector<16x64xf32>, vector<64x32xf32>, vector<16x32xf32> -> vector<16x32xf32>
    %c0_78 = arith.constant 0 : index
    %c0_79 = arith.constant 0 : index
    %c0_80 = arith.constant 0 : index
    %206 = vector.load %arg14[%c0_78, %c0_79, %c0_80] : memref<1x1x32xf32, #tpu.memory_space<vmem>>, vector<1x1x32xf32>
    %207 = vector.shape_cast %206 : vector<1x1x32xf32> to vector<1x32xf32>
    %208 = vector.broadcast %207 : vector<1x32xf32> to vector<16x32xf32>
    %209 = arith.addf %205, %208 : vector<16x32xf32>
    %210 = arith.addf %209, %182 : vector<16x32xf32>
    %c0_81 = arith.constant 0 : index
    %c0_82 = arith.constant 0 : index
    %c0_83 = arith.constant 0 : index
    %211 = vector.load %arg15[%c0_81, %c0_82, %c0_83] : memref<1x1x32xf32, #tpu.memory_space<vmem>>, vector<1x1x32xf32>
    %212 = vector.shape_cast %211 : vector<1x1x32xf32> to vector<1x32xf32>
    %c0_84 = arith.constant 0 : index
    %c0_85 = arith.constant 0 : index
    %c0_86 = arith.constant 0 : index
    %213 = vector.load %arg16[%c0_84, %c0_85, %c0_86] : memref<1x1x32xf32, #tpu.memory_space<vmem>>, vector<1x1x32xf32>
    %214 = vector.shape_cast %213 : vector<1x1x32xf32> to vector<1x32xf32>
    %cst_87 = arith.constant dense<0.000000e+00> : vector<16xf32>
    %215 = vector.multi_reduction <add>, %210, %cst_87 [1] : vector<16x32xf32> to vector<16xf32>
    %216 = vector.shape_cast %215 : vector<16xf32> to vector<16x1xf32>
    %cst_88 = arith.constant 3.200000e+01 : f32
    %217 = vector.broadcast %cst_88 : f32 to vector<16x1xf32>
    %218 = arith.divf %216, %217 : vector<16x1xf32>
    %219 = vector.broadcast %218 : vector<16x1xf32> to vector<16x32xf32>
    %220 = arith.subf %210, %219 : vector<16x32xf32>
    %221 = arith.mulf %220, %220 : vector<16x32xf32>
    %cst_89 = arith.constant dense<0.000000e+00> : vector<16xf32>
    %222 = vector.multi_reduction <add>, %221, %cst_89 [1] : vector<16x32xf32> to vector<16xf32>
    %223 = vector.shape_cast %222 : vector<16xf32> to vector<16x1xf32>
    %cst_90 = arith.constant 3.200000e+01 : f32
    %224 = vector.broadcast %cst_90 : f32 to vector<16x1xf32>
    %225 = arith.divf %223, %224 : vector<16x1xf32>
    %226 = vector.broadcast %218 : vector<16x1xf32> to vector<16x32xf32>
    %227 = arith.subf %210, %226 : vector<16x32xf32>
    %cst_91 = arith.constant 9.99999996E-13 : f32
    %228 = vector.broadcast %cst_91 : f32 to vector<16x1xf32>
    %229 = arith.addf %225, %228 : vector<16x1xf32>
    %230 = math.rsqrt %229 : vector<16x1xf32>
    %231 = vector.broadcast %230 : vector<16x1xf32> to vector<16x32xf32>
    %232 = arith.mulf %227, %231 : vector<16x32xf32>
    %233 = vector.broadcast %212 : vector<1x32xf32> to vector<16x32xf32>
    %234 = arith.mulf %232, %233 : vector<16x32xf32>
    %235 = vector.broadcast %214 : vector<1x32xf32> to vector<16x32xf32>
    %236 = arith.addf %234, %235 : vector<16x32xf32>
    %c0_92 = arith.constant 0 : index
    %c0_93 = arith.constant 0 : index
    %237 = vector.load %arg22[%c0_92, %c0_93] : memref<16x32xf32, #tpu.memory_space<vmem>>, vector<16x32xf32>
    tpu.vector_store %arg22[%c0_92, %c0_93], %236 {strides = array<i32>} : memref<16x32xf32, #tpu.memory_space<vmem>>, vector<16x32xf32>,
    %c1_i32 = arith.constant 1 : i32
    %238 = arith.cmpi eq, %arg0, %c1_i32 : i32
    %239 = arith.extui %238 : i1 to i32
    %c0_i32_94 = arith.constant 0 : i32
    %240 = arith.cmpi ne, %239, %c0_i32_94 : i32
    scf.if %240 {
      %241 = vector.extract_strided_slice %236 {offsets = [0, 0], sizes = [1, 32], strides = [1, 1]} : vector<16x32xf32> to vector<1x32xf32>
      %242 = vector.extract_strided_slice %236 {offsets = [8, 0], sizes = [1, 32], strides = [1, 1]} : vector<16x32xf32> to vector<1x32xf32>
      %243 = tpu.concatenate %241, %242 in 0 : vector<1x32xf32>, vector<1x32xf32> -> vector<2x32xf32>
      %c0_95 = arith.constant 0 : index
      %c0_96 = arith.constant 0 : index
      %244 = vector.load %arg17[%c0_95, %c0_96] : memref<32x32xf32, #tpu.memory_space<vmem>>, vector<32x32xf32>
      %cst_97 = arith.constant dense<0.000000e+00> : vector<2x32xf32>
      %245 = tpu.matmul %243, %244, %cst_97 {dimension_numbers = #tpu.dot_dimension_numbers<[1], [0], [0], [1], [0, 0, 1, 1], [], []>} : vector<2x32xf32>, vector<32x32xf32>, vector<2x32xf32> -> vector<2x32xf32>
      %c0_98 = arith.constant 0 : index
      %c0_99 = arith.constant 0 : index
      %246 = vector.load %arg18[%c0_98, %c0_99] : memref<1x32xf32, #tpu.memory_space<vmem>>, vector<1x32xf32>
      %247 = vector.broadcast %246 : vector<1x32xf32> to vector<2x32xf32>
      %248 = arith.addf %245, %247 : vector<2x32xf32>
      %249 = math.tanh %248 : vector<2x32xf32>
      %c0_100 = arith.constant 0 : index
      %c0_101 = arith.constant 0 : index
      %250 = vector.load %arg19[%c0_100, %c0_101] : memref<32x3xf32, #tpu.memory_space<vmem>>, vector<32x3xf32>
      %cst_102 = arith.constant dense<0.000000e+00> : vector<2x3xf32>
      %251 = tpu.matmul %249, %250, %cst_102 {dimension_numbers = #tpu.dot_dimension_numbers<[1], [0], [0], [1], [0, 0, 1, 1], [], []>} : vector<2x32xf32>, vector<32x3xf32>, vector<2x3xf32> -> vector<2x3xf32>
      %c0_103 = arith.constant 0 : index
      %c0_104 = arith.constant 0 : index
      %252 = vector.load %arg20[%c0_103, %c0_104] : memref<1x3xf32, #tpu.memory_space<vmem>>, vector<1x3xf32>
      %253 = vector.broadcast %252 : vector<1x3xf32> to vector<2x3xf32>
      %254 = arith.addf %251, %253 : vector<2x3xf32>
      %c0_105 = arith.constant 0 : index
      %c0_106 = arith.constant 0 : index
      %255 = vector.load %arg21[%c0_105, %c0_106] : memref<2x3xf32, #tpu.memory_space<vmem>>, vector<2x3xf32>
      tpu.vector_store %arg21[%c0_105, %c0_106], %254 {strides = array<i32>} : memref<2x3xf32, #tpu.memory_space<vmem>>, vector<2x3xf32>,
    } else {
    }
    return
  }
  func.func @transform_0(%arg0: i32) -> (i32, i32) {
    %c0_i32 = arith.constant 0 : i32
    %c0_i32_0 = arith.constant 0 : i32
    %c0_i32_1 = arith.constant 0 : i32
    return %c0_i32, %c0_i32_0 : i32, i32
  }
  func.func @transform_1(%arg0: i32) -> (i32, i32, i32) {
    %c0_i32 = arith.constant 0 : i32
    %c0_i32_0 = arith.constant 0 : i32
    %c0_i32_1 = arith.constant 0 : i32
    %c0_i32_2 = arith.constant 0 : i32
    return %c0_i32, %c0_i32_0, %c0_i32_1 : i32, i32, i32
  }
  func.func @transform_2(%arg0: i32) -> (i32, i32) {
    %c0_i32 = arith.constant 0 : i32
    %c0_i32_0 = arith.constant 0 : i32
    %c0_i32_1 = arith.constant 0 : i32
    return %c0_i32, %c0_i32_0 : i32, i32
  }
  func.func @transform_3(%arg0: i32) -> (i32, i32) {
    %c0_i32 = arith.constant 0 : i32
    %c0_i32_0 = arith.constant 0 : i32
    %c0_i32_1 = arith.constant 0 : i32
    return %c0_i32, %c0_i32_0 : i32, i32
  }
  func.func @transform_4(%arg0: i32) -> (i32, i32, i32) {
    %c0_i32 = arith.constant 0 : i32
    %c0_i32_0 = arith.constant 0 : i32
    %c0_i32_1 = arith.constant 0 : i32
    return %arg0, %c0_i32, %c0_i32_0 : i32, i32, i32
  }
  func.func @transform_5(%arg0: i32) -> (i32, i32, i32) {
    %c0_i32 = arith.constant 0 : i32
    %c0_i32_0 = arith.constant 0 : i32
    %c0_i32_1 = arith.constant 0 : i32
    return %arg0, %c0_i32, %c0_i32_0 : i32, i32, i32
  }
  func.func @transform_6(%arg0: i32) -> (i32, i32, i32) {
    %c0_i32 = arith.constant 0 : i32
    %c0_i32_0 = arith.constant 0 : i32
    %c0_i32_1 = arith.constant 0 : i32
    return %arg0, %c0_i32, %c0_i32_0 : i32, i32, i32
  }
  func.func @transform_7(%arg0: i32) -> (i32, i32, i32) {
    %c0_i32 = arith.constant 0 : i32
    %c0_i32_0 = arith.constant 0 : i32
    %c0_i32_1 = arith.constant 0 : i32
    return %arg0, %c0_i32, %c0_i32_0 : i32, i32, i32
  }
  func.func @transform_8(%arg0: i32) -> (i32, i32, i32) {
    %c0_i32 = arith.constant 0 : i32
    %c0_i32_0 = arith.constant 0 : i32
    %c0_i32_1 = arith.constant 0 : i32
    return %arg0, %c0_i32, %c0_i32_0 : i32, i32, i32
  }
  func.func @transform_9(%arg0: i32) -> (i32, i32, i32) {
    %c0_i32 = arith.constant 0 : i32
    %c0_i32_0 = arith.constant 0 : i32
    %c0_i32_1 = arith.constant 0 : i32
    return %arg0, %c0_i32, %c0_i32_0 : i32, i32, i32
  }
  func.func @transform_10(%arg0: i32) -> (i32, i32, i32) {
    %c0_i32 = arith.constant 0 : i32
    %c0_i32_0 = arith.constant 0 : i32
    %c0_i32_1 = arith.constant 0 : i32
    return %arg0, %c0_i32, %c0_i32_0 : i32, i32, i32
  }
  func.func @transform_11(%arg0: i32) -> (i32, i32, i32) {
    %c0_i32 = arith.constant 0 : i32
    %c0_i32_0 = arith.constant 0 : i32
    %c0_i32_1 = arith.constant 0 : i32
    return %arg0, %c0_i32, %c0_i32_0 : i32, i32, i32
  }
  func.func @transform_12(%arg0: i32) -> (i32, i32, i32) {
    %c0_i32 = arith.constant 0 : i32
    %c0_i32_0 = arith.constant 0 : i32
    %c0_i32_1 = arith.constant 0 : i32
    return %arg0, %c0_i32, %c0_i32_0 : i32, i32, i32
  }
  func.func @transform_13(%arg0: i32) -> (i32, i32, i32) {
    %c0_i32 = arith.constant 0 : i32
    %c0_i32_0 = arith.constant 0 : i32
    %c0_i32_1 = arith.constant 0 : i32
    return %arg0, %c0_i32, %c0_i32_0 : i32, i32, i32
  }
  func.func @transform_14(%arg0: i32) -> (i32, i32, i32) {
    %c0_i32 = arith.constant 0 : i32
    %c0_i32_0 = arith.constant 0 : i32
    %c0_i32_1 = arith.constant 0 : i32
    return %arg0, %c0_i32, %c0_i32_0 : i32, i32, i32
  }
  func.func @transform_15(%arg0: i32) -> (i32, i32, i32) {
    %c0_i32 = arith.constant 0 : i32
    %c0_i32_0 = arith.constant 0 : i32
    %c0_i32_1 = arith.constant 0 : i32
    return %arg0, %c0_i32, %c0_i32_0 : i32, i32, i32
  }
  func.func @transform_16(%arg0: i32) -> (i32, i32) {
    %c0_i32 = arith.constant 0 : i32
    %c0_i32_0 = arith.constant 0 : i32
    %c0_i32_1 = arith.constant 0 : i32
    return %c0_i32, %c0_i32_0 : i32, i32
  }
  func.func @transform_17(%arg0: i32) -> (i32, i32) {
    %c0_i32 = arith.constant 0 : i32
    %c0_i32_0 = arith.constant 0 : i32
    %c0_i32_1 = arith.constant 0 : i32
    return %c0_i32, %c0_i32_0 : i32, i32
  }
  func.func @transform_18(%arg0: i32) -> (i32, i32) {
    %c0_i32 = arith.constant 0 : i32
    %c0_i32_0 = arith.constant 0 : i32
    %c0_i32_1 = arith.constant 0 : i32
    return %c0_i32, %c0_i32_0 : i32, i32
  }
  func.func @transform_19(%arg0: i32) -> (i32, i32) {
    %c0_i32 = arith.constant 0 : i32
    %c0_i32_0 = arith.constant 0 : i32
    %c0_i32_1 = arith.constant 0 : i32
    return %c0_i32, %c0_i32_0 : i32, i32
  }
  func.func @transform_20(%arg0: i32) -> (i32, i32) {
    %c0_i32 = arith.constant 0 : i32
    %c0_i32_0 = arith.constant 0 : i32
    %c0_i32_1 = arith.constant 0 : i32
    return %c0_i32, %c0_i32_0 : i32, i32
  }
}

</mosaic_0001>

<llo_original>
// kernel: _lambda_.1
$region0: #{_lambda_.1}
  #allocation0 [shape = 'u32[]', space=smem, size = 0x4, offset = 0x4, fixed_abs, tag = 'smem constant byte address 0x4 - core index']
  #allocation1 [shape = 'u32[144,128]{1,0:T(1,128)}', space=vmem, size = 0x12000, scoped, tag = 'internal scratch']
  #allocation2 [shape = 'f32[16,32]{1,0:T(8,128)}', space=vmem, size = 0x2000, scoped, tag = 'scratch operand']
  %s0 = inlined_call_operand.vmem [shape: f32[16,32], index: 0, kind: input, shape index: {}]
  %s1 = inlined_call_operand.vmem [shape: f32[2,8,8], index: 1, kind: input, shape index: {}]
  %s2 = inlined_call_operand.vmem [shape: f32[1,32], index: 2, kind: input, shape index: {}]
  %s3 = inlined_call_operand.vmem [shape: f32[1,32], index: 3, kind: input, shape index: {}, may-alias: {3,17}]
  %s4 = inlined_call_operand.hbm [shape: f32[2,32,96], index: 4, kind: input, shape index: {}]
  %s5 = inlined_call_operand.vmem [shape: f32[2,1,96], index: 5, kind: input, shape index: {}]
  %s6 = inlined_call_operand.vmem [shape: f32[2,32,32], index: 6, kind: input, shape index: {}]
  %s7 = inlined_call_operand.vmem [shape: f32[2,1,32], index: 7, kind: input, shape index: {}, may-alias: {7,9,13,15}]
  %s8 = inlined_call_operand.vmem [shape: f32[2,1,32], index: 8, kind: input, shape index: {}, may-alias: {8,14}]
  %s9 = inlined_call_operand.vmem [shape: f32[2,1,32], index: 9, kind: input, shape index: {}, may-alias: {7,9,13,15}]
  %s10 = inlined_call_operand.vmem [shape: f32[2,32,64], index: 10, kind: input, shape index: {}]
  %s11 = inlined_call_operand.vmem [shape: f32[2,1,64], index: 11, kind: input, shape index: {}]
  %s12 = inlined_call_operand.vmem [shape: f32[2,64,32], index: 12, kind: input, shape index: {}]
  %s13 = inlined_call_operand.vmem [shape: f32[2,1,32], index: 13, kind: input, shape index: {}, may-alias: {7,9,13,15}]
  %s14 = inlined_call_operand.vmem [shape: f32[2,1,32], index: 14, kind: input, shape index: {}, may-alias: {8,14}]
  %s15 = inlined_call_operand.vmem [shape: f32[2,1,32], index: 15, kind: input, shape index: {}, may-alias: {7,9,13,15}]
  %s16 = inlined_call_operand.hbm [shape: f32[32,32], index: 16, kind: input, shape index: {}]
  %s17 = inlined_call_operand.vmem [shape: f32[1,32], index: 17, kind: input, shape index: {}, may-alias: {3,17}]
  %s18 = inlined_call_operand.vmem [shape: f32[32,3], index: 18, kind: input, shape index: {}]
  %s19 = inlined_call_operand.vmem [shape: f32[1,3], index: 19, kind: input, shape index: {}]
  %s20 = inlined_call_operand.hbm [shape: f32[2,3], index: 20, kind: output, shape index: {}]
  %s21 = sld [smem:[#allocation0]]
  $region129: #{_lambda_.1} parent=0
    _
  %s23 = ssub.s32 1, %s21
  %s24 = scalar_select 0, %s23, %s21
  $region1: #{_lambda_.1} parent=0
    #allocation3 [shape = 'u8[32768]{0}', space=vmem, size = 0x8000, scoped, tag = 'input window, operand 4']
    #allocation4 [shape = 's32[2]{0}', space=sflag, size = 0x8, scoped, tag = 'scoped memory for _lambda_.1']
    #allocation5 [shape = 's32[2]{0}', space=sflag, size = 0x8, scoped, tag = 'scoped memory for _lambda_.1']
    #allocation6 [shape = 'u8[16384]{0}', space=vmem, size = 0x4000, scoped, tag = 'input window, operand 16, single buffered']
    #allocation7 [shape = 's32[1]{0}', space=sflag, size = 0x4, scoped, tag = 'scoped memory for _lambda_.1']
    #allocation8 [shape = 'u8[1024]{0}', space=vmem, size = 0x400, scoped, tag = 'output window, operand 0, single buffered']
    %25 = vsyncpa [#allocation4], 0
    %s26 = scalar_lea.sflag [#allocation4], 1
    %27 = vsyncpa %s26, 0
    %28 = vsyncpa [#allocation7], 0
    %29 = vsyncpa [#allocation5], 0
    loop: start=0, step=1, limit=4
    $region2: #{_lambda_.1} parent=1 // loop_pre_header
      _
    $region3: #{_lambda_.1} parent=1 // loop_header
      %s31 = sphi 0, %s35
      %p32 = scmp.ge.s32.totalorder %s31, 4
      %s39 = sphi 0, %s39
      %s41 = sphi 0, %s39
      %s42 = sphi 0, %s41
      %s56 = sphi 0, %s42
      %s60 = sphi 0, %s60
      %s62 = sphi 0, %s60
      %s63 = sphi 0, %s62
      %s77 = sphi 0, %s63
      %s81 = sphi 0, %s81
      %s83 = sphi 0, %s81
      %s84 = sphi 0, %s83
      %s98 = sphi 0, %s84
      %s102 = sphi 0, %s102
      %s104 = sphi 0, %s102
      %s105 = sphi 0, %s104
      %s119 = sphi 0, %s105
      %s125 = sphi 0, %s127
      %s128 = sphi 0, %s125
      %s129 = sphi 0, %s128
      %s145 = sphi 0, %s129
      %s151 = sphi 0, %s153
      %s154 = sphi 0, %s151
      %s155 = sphi 0, %s154
      %s171 = sphi 0, %s155
      %s177 = sphi 0, %s179
      %s180 = sphi 0, %s177
      %s181 = sphi 0, %s180
      %s197 = sphi 0, %s181
      %s203 = sphi 0, %s205
      %s206 = sphi 0, %s203
      %s207 = sphi 0, %s206
      %s223 = sphi 0, %s207
      %s229 = sphi 0, %s231
      %s232 = sphi 0, %s229
      %s233 = sphi 0, %s232
      %s249 = sphi 0, %s233
      %s255 = sphi 0, %s257
      %s258 = sphi 0, %s255
      %s259 = sphi 0, %s258
      %s275 = sphi 0, %s259
      %s281 = sphi 0, %s283
      %s284 = sphi 0, %s281
      %s285 = sphi 0, %s284
      %s301 = sphi 0, %s285
      %s307 = sphi 0, %s309
      %s310 = sphi 0, %s307
      %s311 = sphi 0, %s310
      %s327 = sphi 0, %s311
      %s333 = sphi 0, %s335
      %s336 = sphi 0, %s333
      %s337 = sphi 0, %s336
      %s353 = sphi 0, %s337
      %s359 = sphi 0, %s361
      %s362 = sphi 0, %s359
      %s363 = sphi 0, %s362
      %s379 = sphi 0, %s363
      %s385 = sphi 0, %s387
      %s388 = sphi 0, %s385
      %s389 = sphi 0, %s388
      %s405 = sphi 0, %s389
      %s411 = sphi 0, %s413
      %s414 = sphi 0, %s411
      %s415 = sphi 0, %s414
      %s431 = sphi 0, %s415
      %s435 = sphi 0, %s435
      %s437 = sphi 0, %s435
      %s438 = sphi 0, %s437
      %s452 = sphi 0, %s438
      %s456 = sphi 0, %s456
      %s458 = sphi 0, %s456
      %s459 = sphi 0, %s458
      %s473 = sphi 0, %s459
      %s477 = sphi 0, %s477
      %s479 = sphi 0, %s477
      %s480 = sphi 0, %s479
      %s494 = sphi 0, %s480
      %s498 = sphi 0, %s498
      %s500 = sphi 0, %s498
      %s501 = sphi 0, %s500
      %s515 = sphi 0, %s501
      %s519 = sphi 0, %s519
      %s521 = sphi 0, %s519
      %s522 = sphi 0, %s521
      %s536 = sphi 0, %s522
    $region4: #{_lambda_.1} parent=1 // loop_header_branch
      %34 = sbr.rel (%p32) target = $region8
    $region5: #{_lambda_.1} parent=1 // loop_body
      %s36 = ssub.s32 %s31, 1
      %s37 = ssub.s32 %s31, 2
      %s38 = sadd.s32 %s31, 1
      %s40 = sadd.s32 %s39, 1
      %p43 = scmp.eq.s32.totalorder %s31, 1
      %p44 = scmp.ne.s32.totalorder %s39, %s41
      %p45 = scmp.eq.s32.totalorder %s31, 0
      %p46 = por %p44, %p45
      %p47 = scmp.ne.s32.totalorder %s39, %s41
      %p48 = scmp.eq.s32.totalorder %s36, 1
      %p49 = por %p47, %p48
      %p50 = scmp.ne.s32.totalorder %s41, %s42
      %p51 = scmp.eq.s32.totalorder %s36, 0
      %p52 = por %p50, %p51
      %p53 = scmp.ne.s32.totalorder %s41, %s42
      %p54 = scmp.eq.s32.totalorder %s37, 1
      %p55 = por %p53, %p54
      %p57 = scmp.ne.s32.totalorder %s42, %s56
      %p58 = scmp.eq.s32.totalorder %s37, 0
      %p59 = por %p57, %p58
      %s61 = sadd.s32 %s60, 1
      %p64 = scmp.eq.s32.totalorder %s31, 1
      %p65 = scmp.ne.s32.totalorder %s60, %s62
      %p66 = scmp.eq.s32.totalorder %s31, 0
      %p67 = por %p65, %p66
      %p68 = scmp.ne.s32.totalorder %s60, %s62
      %p69 = scmp.eq.s32.totalorder %s36, 1
      %p70 = por %p68, %p69
      %p71 = scmp.ne.s32.totalorder %s62, %s63
      %p72 = scmp.eq.s32.totalorder %s36, 0
      %p73 = por %p71, %p72
      %p74 = scmp.ne.s32.totalorder %s62, %s63
      %p75 = scmp.eq.s32.totalorder %s37, 1
      %p76 = por %p74, %p75
      %p78 = scmp.ne.s32.totalorder %s63, %s77
      %p79 = scmp.eq.s32.totalorder %s37, 0
      %p80 = por %p78, %p79
      %s82 = sadd.s32 %s81, 1
      %p85 = scmp.eq.s32.totalorder %s31, 1
      %p86 = scmp.ne.s32.totalorder %s81, %s83
      %p87 = scmp.eq.s32.totalorder %s31, 0
      %p88 = por %p86, %p87
      %p89 = scmp.ne.s32.totalorder %s81, %s83
      %p90 = scmp.eq.s32.totalorder %s36, 1
      %p91 = por %p89, %p90
      %p92 = scmp.ne.s32.totalorder %s83, %s84
      %p93 = scmp.eq.s32.totalorder %s36, 0
      %p94 = por %p92, %p93
      %p95 = scmp.ne.s32.totalorder %s83, %s84
      %p96 = scmp.eq.s32.totalorder %s37, 1
      %p97 = por %p95, %p96
      %p99 = scmp.ne.s32.totalorder %s84, %s98
      %p100 = scmp.eq.s32.totalorder %s37, 0
      %p101 = por %p99, %p100
      %s103 = sadd.s32 %s102, 1
      %p106 = scmp.eq.s32.totalorder %s31, 1
      %p107 = scmp.ne.s32.totalorder %s102, %s104
      %p108 = scmp.eq.s32.totalorder %s31, 0
      %p109 = por %p107, %p108
      %p110 = scmp.ne.s32.totalorder %s102, %s104
      %p111 = scmp.eq.s32.totalorder %s36, 1
      %p112 = por %p110, %p111
      %p113 = scmp.ne.s32.totalorder %s104, %s105
      %p114 = scmp.eq.s32.totalorder %s36, 0
      %p115 = por %p113, %p114
      %p116 = scmp.ne.s32.totalorder %s104, %s105
      %p117 = scmp.eq.s32.totalorder %s37, 1
      %p118 = por %p116, %p117
      %p120 = scmp.ne.s32.totalorder %s105, %s119
      %p121 = scmp.eq.s32.totalorder %s37, 0
      %p122 = por %p120, %p121
      %s123 = ssub.s32 %s31, %s38
      %p124 = scmp.eq.s32.totalorder %s123, 0
      %s126 = sadd.s32 %s125, 1
      %s127 = scalar_select %p124, %s125, %s126
      %p130 = pneg %p124
      %p131 = scmp.eq.s32.totalorder %s31, 1
      %p132 = por %p130, %p131
      %p133 = scmp.ne.s32.totalorder %s125, %s128
      %p134 = scmp.eq.s32.totalorder %s31, 0
      %p135 = por %p133, %p134
      %p136 = scmp.ne.s32.totalorder %s125, %s128
      %p137 = scmp.eq.s32.totalorder %s36, 1
      %p138 = por %p136, %p137
      %p139 = scmp.ne.s32.totalorder %s128, %s129
      %p140 = scmp.eq.s32.totalorder %s36, 0
      %p141 = por %p139, %p140
      %p142 = scmp.ne.s32.totalorder %s128, %s129
      %p143 = scmp.eq.s32.totalorder %s37, 1
      %p144 = por %p142, %p143
      %p146 = scmp.ne.s32.totalorder %s129, %s145
      %p147 = scmp.eq.s32.totalorder %s37, 0
      %p148 = por %p146, %p147
      %s149 = ssub.s32 %s31, %s38
      %p150 = scmp.eq.s32.totalorder %s149, 0
      %s152 = sadd.s32 %s151, 1
      %s153 = scalar_select %p150, %s151, %s152
      %p156 = pneg %p150
      %p157 = scmp.eq.s32.totalorder %s31, 1
      %p158 = por %p156, %p157
      %p159 = scmp.ne.s32.totalorder %s151, %s154
      %p160 = scmp.eq.s32.totalorder %s31, 0
      %p161 = por %p159, %p160
      %p162 = scmp.ne.s32.totalorder %s151, %s154
      %p163 = scmp.eq.s32.totalorder %s36, 1
      %p164 = por %p162, %p163
      %p165 = scmp.ne.s32.totalorder %s154, %s155
      %p166 = scmp.eq.s32.totalorder %s36, 0
      %p167 = por %p165, %p166
      %p168 = scmp.ne.s32.totalorder %s154, %s155
      %p169 = scmp.eq.s32.totalorder %s37, 1
      %p170 = por %p168, %p169
      %p172 = scmp.ne.s32.totalorder %s155, %s171
      %p173 = scmp.eq.s32.totalorder %s37, 0
      %p174 = por %p172, %p173
      %s175 = ssub.s32 %s31, %s38
      %p176 = scmp.eq.s32.totalorder %s175, 0
      %s178 = sadd.s32 %s177, 1
      %s179 = scalar_select %p176, %s177, %s178
      %p182 = pneg %p176
      %p183 = scmp.eq.s32.totalorder %s31, 1
      %p184 = por %p182, %p183
      %p185 = scmp.ne.s32.totalorder %s177, %s180
      %p186 = scmp.eq.s32.totalorder %s31, 0
      %p187 = por %p185, %p186
      %p188 = scmp.ne.s32.totalorder %s177, %s180
      %p189 = scmp.eq.s32.totalorder %s36, 1
      %p190 = por %p188, %p189
      %p191 = scmp.ne.s32.totalorder %s180, %s181
      %p192 = scmp.eq.s32.totalorder %s36, 0
      %p193 = por %p191, %p192
      %p194 = scmp.ne.s32.totalorder %s180, %s181
      %p195 = scmp.eq.s32.totalorder %s37, 1
      %p196 = por %p194, %p195
      %p198 = scmp.ne.s32.totalorder %s181, %s197
      %p199 = scmp.eq.s32.totalorder %s37, 0
      %p200 = por %p198, %p199
      %s201 = ssub.s32 %s31, %s38
      %p202 = scmp.eq.s32.totalorder %s201, 0
      %s204 = sadd.s32 %s203, 1
      %s205 = scalar_select %p202, %s203, %s204
      %p208 = pneg %p202
      %p209 = scmp.eq.s32.totalorder %s31, 1
      %p210 = por %p208, %p209
      %p211 = scmp.ne.s32.totalorder %s203, %s206
      %p212 = scmp.eq.s32.totalorder %s31, 0
      %p213 = por %p211, %p212
      %p214 = scmp.ne.s32.totalorder %s203, %s206
      %p215 = scmp.eq.s32.totalorder %s36, 1
      %p216 = por %p214, %p215
      %p217 = scmp.ne.s32.totalorder %s206, %s207
      %p218 = scmp.eq.s32.totalorder %s36, 0
      %p219 = por %p217, %p218
      %p220 = scmp.ne.s32.totalorder %s206, %s207
      %p221 = scmp.eq.s32.totalorder %s37, 1
      %p222 = por %p220, %p221
      %p224 = scmp.ne.s32.totalorder %s207, %s223
      %p225 = scmp.eq.s32.totalorder %s37, 0
      %p226 = por %p224, %p225
      %s227 = ssub.s32 %s31, %s38
      %p228 = scmp.eq.s32.totalorder %s227, 0
      %s230 = sadd.s32 %s229, 1
      %s231 = scalar_select %p228, %s229, %s230
      %p234 = pneg %p228
      %p235 = scmp.eq.s32.totalorder %s31, 1
      %p236 = por %p234, %p235
      %p237 = scmp.ne.s32.totalorder %s229, %s232
      %p238 = scmp.eq.s32.totalorder %s31, 0
      %p239 = por %p237, %p238
      %p240 = scmp.ne.s32.totalorder %s229, %s232
      %p241 = scmp.eq.s32.totalorder %s36, 1
      %p242 = por %p240, %p241
      %p243 = scmp.ne.s32.totalorder %s232, %s233
      %p244 = scmp.eq.s32.totalorder %s36, 0
      %p245 = por %p243, %p244
      %p246 = scmp.ne.s32.totalorder %s232, %s233
      %p247 = scmp.eq.s32.totalorder %s37, 1
      %p248 = por %p246, %p247
      %p250 = scmp.ne.s32.totalorder %s233, %s249
      %p251 = scmp.eq.s32.totalorder %s37, 0
      %p252 = por %p250, %p251
      %s253 = ssub.s32 %s31, %s38
      %p254 = scmp.eq.s32.totalorder %s253, 0
      %s256 = sadd.s32 %s255, 1
      %s257 = scalar_select %p254, %s255, %s256
      %p260 = pneg %p254
      %p261 = scmp.eq.s32.totalorder %s31, 1
      %p262 = por %p260, %p261
      %p263 = scmp.ne.s32.totalorder %s255, %s258
      %p264 = scmp.eq.s32.totalorder %s31, 0
      %p265 = por %p263, %p264
      %p266 = scmp.ne.s32.totalorder %s255, %s258
      %p267 = scmp.eq.s32.totalorder %s36, 1
      %p268 = por %p266, %p267
      %p269 = scmp.ne.s32.totalorder %s258, %s259
      %p270 = scmp.eq.s32.totalorder %s36, 0
      %p271 = por %p269, %p270
      %p272 = scmp.ne.s32.totalorder %s258, %s259
      %p273 = scmp.eq.s32.totalorder %s37, 1
      %p274 = por %p272, %p273
      %p276 = scmp.ne.s32.totalorder %s259, %s275
      %p277 = scmp.eq.s32.totalorder %s37, 0
      %p278 = por %p276, %p277
      %s279 = ssub.s32 %s31, %s38
      %p280 = scmp.eq.s32.totalorder %s279, 0
      %s282 = sadd.s32 %s281, 1
      %s283 = scalar_select %p280, %s281, %s282
      %p286 = pneg %p280
      %p287 = scmp.eq.s32.totalorder %s31, 1
      %p288 = por %p286, %p287
      %p289 = scmp.ne.s32.totalorder %s281, %s284
      %p290 = scmp.eq.s32.totalorder %s31, 0
      %p291 = por %p289, %p290
      %p292 = scmp.ne.s32.totalorder %s281, %s284
      %p293 = scmp.eq.s32.totalorder %s36, 1
      %p294 = por %p292, %p293
      %p295 = scmp.ne.s32.totalorder %s284, %s285
      %p296 = scmp.eq.s32.totalorder %s36, 0
      %p297 = por %p295, %p296
      %p298 = scmp.ne.s32.totalorder %s284, %s285
      %p299 = scmp.eq.s32.totalorder %s37, 1
      %p300 = por %p298, %p299
      %p302 = scmp.ne.s32.totalorder %s285, %s301
      %p303 = scmp.eq.s32.totalorder %s37, 0
      %p304 = por %p302, %p303
      %s305 = ssub.s32 %s31, %s38
      %p306 = scmp.eq.s32.totalorder %s305, 0
      %s308 = sadd.s32 %s307, 1
      %s309 = scalar_select %p306, %s307, %s308
      %p312 = pneg %p306
      %p313 = scmp.eq.s32.totalorder %s31, 1
      %p314 = por %p312, %p313
      %p315 = scmp.ne.s32.totalorder %s307, %s310
      %p316 = scmp.eq.s32.totalorder %s31, 0
      %p317 = por %p315, %p316
      %p318 = scmp.ne.s32.totalorder %s307, %s310
      %p319 = scmp.eq.s32.totalorder %s36, 1
      %p320 = por %p318, %p319
      %p321 = scmp.ne.s32.totalorder %s310, %s311
      %p322 = scmp.eq.s32.totalorder %s36, 0
      %p323 = por %p321, %p322
      %p324 = scmp.ne.s32.totalorder %s310, %s311
      %p325 = scmp.eq.s32.totalorder %s37, 1
      %p326 = por %p324, %p325
      %p328 = scmp.ne.s32.totalorder %s311, %s327
      %p329 = scmp.eq.s32.totalorder %s37, 0
      %p330 = por %p328, %p329
      %s331 = ssub.s32 %s31, %s38
      %p332 = scmp.eq.s32.totalorder %s331, 0
      %s334 = sadd.s32 %s333, 1
      %s335 = scalar_select %p332, %s333, %s334
      %p338 = pneg %p332
      %p339 = scmp.eq.s32.totalorder %s31, 1
      %p340 = por %p338, %p339
      %p341 = scmp.ne.s32.totalorder %s333, %s336
      %p342 = scmp.eq.s32.totalorder %s31, 0
      %p343 = por %p341, %p342
      %p344 = scmp.ne.s32.totalorder %s333, %s336
      %p345 = scmp.eq.s32.totalorder %s36, 1
      %p346 = por %p344, %p345
      %p347 = scmp.ne.s32.totalorder %s336, %s337
      %p348 = scmp.eq.s32.totalorder %s36, 0
      %p349 = por %p347, %p348
      %p350 = scmp.ne.s32.totalorder %s336, %s337
      %p351 = scmp.eq.s32.totalorder %s37, 1
      %p352 = por %p350, %p351
      %p354 = scmp.ne.s32.totalorder %s337, %s353
      %p355 = scmp.eq.s32.totalorder %s37, 0
      %p356 = por %p354, %p355
      %s357 = ssub.s32 %s31, %s38
      %p358 = scmp.eq.s32.totalorder %s357, 0
      %s360 = sadd.s32 %s359, 1
      %s361 = scalar_select %p358, %s359, %s360
      %p364 = pneg %p358
      %p365 = scmp.eq.s32.totalorder %s31, 1
      %p366 = por %p364, %p365
      %p367 = scmp.ne.s32.totalorder %s359, %s362
      %p368 = scmp.eq.s32.totalorder %s31, 0
      %p369 = por %p367, %p368
      %p370 = scmp.ne.s32.totalorder %s359, %s362
      %p371 = scmp.eq.s32.totalorder %s36, 1
      %p372 = por %p370, %p371
      %p373 = scmp.ne.s32.totalorder %s362, %s363
      %p374 = scmp.eq.s32.totalorder %s36, 0
      %p375 = por %p373, %p374
      %p376 = scmp.ne.s32.totalorder %s362, %s363
      %p377 = scmp.eq.s32.totalorder %s37, 1
      %p378 = por %p376, %p377
      %p380 = scmp.ne.s32.totalorder %s363, %s379
      %p381 = scmp.eq.s32.totalorder %s37, 0
      %p382 = por %p380, %p381
      %s383 = ssub.s32 %s31, %s38
      %p384 = scmp.eq.s32.totalorder %s383, 0
      %s386 = sadd.s32 %s385, 1
      %s387 = scalar_select %p384, %s385, %s386
      %p390 = pneg %p384
      %p391 = scmp.eq.s32.totalorder %s31, 1
      %p392 = por %p390, %p391
      %p393 = scmp.ne.s32.totalorder %s385, %s388
      %p394 = scmp.eq.s32.totalorder %s31, 0
      %p395 = por %p393, %p394
      %p396 = scmp.ne.s32.totalorder %s385, %s388
      %p397 = scmp.eq.s32.totalorder %s36, 1
      %p398 = por %p396, %p397
      %p399 = scmp.ne.s32.totalorder %s388, %s389
      %p400 = scmp.eq.s32.totalorder %s36, 0
      %p401 = por %p399, %p400
      %p402 = scmp.ne.s32.totalorder %s388, %s389
      %p403 = scmp.eq.s32.totalorder %s37, 1
      %p404 = por %p402, %p403
      %p406 = scmp.ne.s32.totalorder %s389, %s405
      %p407 = scmp.eq.s32.totalorder %s37, 0
      %p408 = por %p406, %p407
      %s409 = ssub.s32 %s31, %s38
      %p410 = scmp.eq.s32.totalorder %s409, 0
      %s412 = sadd.s32 %s411, 1
      %s413 = scalar_select %p410, %s411, %s412
      %p416 = pneg %p410
      %p417 = scmp.eq.s32.totalorder %s31, 1
      %p418 = por %p416, %p417
      %p419 = scmp.ne.s32.totalorder %s411, %s414
      %p420 = scmp.eq.s32.totalorder %s31, 0
      %p421 = por %p419, %p420
      %p422 = scmp.ne.s32.totalorder %s411, %s414
      %p423 = scmp.eq.s32.totalorder %s36, 1
      %p424 = por %p422, %p423
      %p425 = scmp.ne.s32.totalorder %s414, %s415
      %p426 = scmp.eq.s32.totalorder %s36, 0
      %p427 = por %p425, %p426
      %p428 = scmp.ne.s32.totalorder %s414, %s415
      %p429 = scmp.eq.s32.totalorder %s37, 1
      %p430 = por %p428, %p429
      %p432 = scmp.ne.s32.totalorder %s415, %s431
      %p433 = scmp.eq.s32.totalorder %s37, 0
      %p434 = por %p432, %p433
      %s436 = sadd.s32 %s435, 1
      %p439 = scmp.eq.s32.totalorder %s31, 1
      %p440 = scmp.ne.s32.totalorder %s435, %s437
      %p441 = scmp.eq.s32.totalorder %s31, 0
      %p442 = por %p440, %p441
      %p443 = scmp.ne.s32.totalorder %s435, %s437
      %p444 = scmp.eq.s32.totalorder %s36, 1
      %p445 = por %p443, %p444
      %p446 = scmp.ne.s32.totalorder %s437, %s438
      %p447 = scmp.eq.s32.totalorder %s36, 0
      %p448 = por %p446, %p447
      %p449 = scmp.ne.s32.totalorder %s437, %s438
      %p450 = scmp.eq.s32.totalorder %s37, 1
      %p451 = por %p449, %p450
      %p453 = scmp.ne.s32.totalorder %s438, %s452
      %p454 = scmp.eq.s32.totalorder %s37, 0
      %p455 = por %p453, %p454
      %s457 = sadd.s32 %s456, 1
      %p460 = scmp.eq.s32.totalorder %s31, 1
      %p461 = scmp.ne.s32.totalorder %s456, %s458
      %p462 = scmp.eq.s32.totalorder %s31, 0
      %p463 = por %p461, %p462
      %p464 = scmp.ne.s32.totalorder %s456, %s458
      %p465 = scmp.eq.s32.totalorder %s36, 1
      %p466 = por %p464, %p465
      %p467 = scmp.ne.s32.totalorder %s458, %s459
      %p468 = scmp.eq.s32.totalorder %s36, 0
      %p469 = por %p467, %p468
      %p470 = scmp.ne.s32.totalorder %s458, %s459
      %p471 = scmp.eq.s32.totalorder %s37, 1
      %p472 = por %p470, %p471
      %p474 = scmp.ne.s32.totalorder %s459, %s473
      %p475 = scmp.eq.s32.totalorder %s37, 0
      %p476 = por %p474, %p475
      %s478 = sadd.s32 %s477, 1
      %p481 = scmp.eq.s32.totalorder %s31, 1
      %p482 = scmp.ne.s32.totalorder %s477, %s479
      %p483 = scmp.eq.s32.totalorder %s31, 0
      %p484 = por %p482, %p483
      %p485 = scmp.ne.s32.totalorder %s477, %s479
      %p486 = scmp.eq.s32.totalorder %s36, 1
      %p487 = por %p485, %p486
      %p488 = scmp.ne.s32.totalorder %s479, %s480
      %p489 = scmp.eq.s32.totalorder %s36, 0
      %p490 = por %p488, %p489
      %p491 = scmp.ne.s32.totalorder %s479, %s480
      %p492 = scmp.eq.s32.totalorder %s37, 1
      %p493 = por %p491, %p492
      %p495 = scmp.ne.s32.totalorder %s480, %s494
      %p496 = scmp.eq.s32.totalorder %s37, 0
      %p497 = por %p495, %p496
      %s499 = sadd.s32 %s498, 1
      %p502 = scmp.eq.s32.totalorder %s31, 1
      %p503 = scmp.ne.s32.totalorder %s498, %s500
      %p504 = scmp.eq.s32.totalorder %s31, 0
      %p505 = por %p503, %p504
      %p506 = scmp.ne.s32.totalorder %s498, %s500
      %p507 = scmp.eq.s32.totalorder %s36, 1
      %p508 = por %p506, %p507
      %p509 = scmp.ne.s32.totalorder %s500, %s501
      %p510 = scmp.eq.s32.totalorder %s36, 0
      %p511 = por %p509, %p510
      %p512 = scmp.ne.s32.totalorder %s500, %s501
      %p513 = scmp.eq.s32.totalorder %s37, 1
      %p514 = por %p512, %p513
      %p516 = scmp.ne.s32.totalorder %s501, %s515
      %p517 = scmp.eq.s32.totalorder %s37, 0
      %p518 = por %p516, %p517
      %s520 = sadd.s32 %s519, 1
      %p523 = scmp.eq.s32.totalorder %s31, 1
      %p524 = scmp.ne.s32.totalorder %s519, %s521
      %p525 = scmp.eq.s32.totalorder %s31, 0
      %p526 = por %p524, %p525
      %p527 = scmp.ne.s32.totalorder %s519, %s521
      %p528 = scmp.eq.s32.totalorder %s36, 1
      %p529 = por %p527, %p528
      %p530 = scmp.ne.s32.totalorder %s521, %s522
      %p531 = scmp.eq.s32.totalorder %s36, 0
      %p532 = por %p530, %p531
      %p533 = scmp.ne.s32.totalorder %s521, %s522
      %p534 = scmp.eq.s32.totalorder %s37, 1
      %p535 = por %p533, %p534
      %p537 = scmp.ne.s32.totalorder %s522, %s536
      %p538 = scmp.eq.s32.totalorder %s37, 0
      %p539 = por %p537, %p538
      %p540 = scmp.le.s32.totalorder 1, %s31
      %p541 = scmp.lt.s32.totalorder %s31, 3
      %p542 = pnand %p540, %p541
      %p543 = pneg %p542
      // Predicated region
      $region9: #{_lambda_.1} parent=5 // pred_check
        _
      $region10: #{_lambda_.1} parent=5 // pred_check_branch
        %545 = sbr.rel (%p542) target = $region12
      $region11: #{_lambda_.1} parent=5 // pred_region
        %s546 = ssub.s32 %s31, 1
        // Predicated region
        $region13: #{_lambda_.1} parent=11 // pred_check
          %p547 = pneg %p52
        $region14: #{_lambda_.1} parent=11 // pred_check_branch
          %549 = sbr.rel (%p547) target = $region16
        $region15: #{_lambda_.1} parent=11 // pred_region
          _
        $region16: #{_lambda_.1} parent=11 // pred_fallthru
          _
        // Predicated region
        $region17: #{_lambda_.1} parent=11 // pred_check
          %p550 = pneg %p73
        $region18: #{_lambda_.1} parent=11 // pred_check_branch
          %552 = sbr.rel (%p550) target = $region20
        $region19: #{_lambda_.1} parent=11 // pred_region
          _
        $region20: #{_lambda_.1} parent=11 // pred_fallthru
          _
        // Predicated region
        $region21: #{_lambda_.1} parent=11 // pred_check
          %p553 = pneg %p94
        $region22: #{_lambda_.1} parent=11 // pred_check_branch
          %555 = sbr.rel (%p553) target = $region24
        $region23: #{_lambda_.1} parent=11 // pred_region
          _
        $region24: #{_lambda_.1} parent=11 // pred_fallthru
          _
        // Predicated region
        $region25: #{_lambda_.1} parent=11 // pred_check
          %p556 = pneg %p115
        $region26: #{_lambda_.1} parent=11 // pred_check_branch
          %558 = sbr.rel (%p556) target = $region28
        $region27: #{_lambda_.1} parent=11 // pred_region
          _
        $region28: #{_lambda_.1} parent=11 // pred_fallthru
          _
        // Predicated region
        $region29: #{_lambda_.1} parent=11 // pred_check
          %p559 = pneg %p448
        $region30: #{_lambda_.1} parent=11 // pred_check_branch
          %561 = sbr.rel (%p559) target = $region32
        $region31: #{_lambda_.1} parent=11 // pred_region
          %s563 = ssub.s32 512, 512
          %564 = vsyncadd [#allocation7], %s563
          %s565 = sshll.u32 [#allocation6], 4
          %s566 = int_to_ptr.vmem [resolvable:$true] %s565
          %571 = dma.hbm_to_vmem [thread:$0]  %s16, 512, %s566, [#allocation7], 128, 128, 8
        $region32: #{_lambda_.1} parent=11 // pred_fallthru
          _
        // Predicated region
        $region33: #{_lambda_.1} parent=11 // pred_check
          %p572 = pneg %p469
        $region34: #{_lambda_.1} parent=11 // pred_check_branch
          %574 = sbr.rel (%p572) target = $region36
        $region35: #{_lambda_.1} parent=11 // pred_region
          _
        $region36: #{_lambda_.1} parent=11 // pred_fallthru
          _
        // Predicated region
        $region37: #{_lambda_.1} parent=11 // pred_check
          %p575 = pneg %p490
        $region38: #{_lambda_.1} parent=11 // pred_check_branch
          %577 = sbr.rel (%p575) target = $region40
        $region39: #{_lambda_.1} parent=11 // pred_region
          _
        $region40: #{_lambda_.1} parent=11 // pred_fallthru
          _
        // Predicated region
        $region41: #{_lambda_.1} parent=11 // pred_check
          %p578 = pneg %p511
        $region42: #{_lambda_.1} parent=11 // pred_check_branch
          %580 = sbr.rel (%p578) target = $region44
        $region43: #{_lambda_.1} parent=11 // pred_region
          _
        $region44: #{_lambda_.1} parent=11 // pred_fallthru
          _
      $region12: #{_lambda_.1} parent=5 // pred_fallthru
        _
      %p581 = scmp.lt.s32.totalorder %s31, 2
      // Predicated region
      $region45: #{_lambda_.1} parent=5 // pred_check
        %p582 = pneg %p581
      $region46: #{_lambda_.1} parent=5 // pred_check_branch
        %584 = sbr.rel (%p582) target = $region48
      $region47: #{_lambda_.1} parent=5 // pred_region
        // Predicated region
        $region49: #{_lambda_.1} parent=47 // pred_check
          %p585 = pneg %p135
        $region50: #{_lambda_.1} parent=47 // pred_check_branch
          %587 = sbr.rel (%p585) target = $region52
        $region51: #{_lambda_.1} parent=47 // pred_region
          %s588 = sand.u32 %s125, 1
          %s589 = scalar_lea.sflag [#allocation4], %s588
          %s590 = sand.u32 %s125, 1
          %s591 = smul.addr %s590, 32
          %s592 = scalar_lea.vmem [#allocation3], %s591
          %s594 = ssub.s32 512, 512
          %595 = vsyncadd %s589, %s594
          %s596 = smul.addr %s31, 4
          %s597 = smul.addr %s596, 128
          %s598 = scalar_lea.hbm %s4, %s597
          %s599 = sshll.u32 %s592, 4
          %s600 = int_to_ptr.vmem [resolvable:$true] %s599
          %605 = dma.hbm_to_vmem [thread:$0]  %s598, 512, %s600, %s589, 128, 128, 8
        $region52: #{_lambda_.1} parent=47 // pred_fallthru
          _
        // Predicated region
        $region53: #{_lambda_.1} parent=47 // pred_check
          %p606 = pneg %p161
        $region54: #{_lambda_.1} parent=47 // pred_check_branch
          %608 = sbr.rel (%p606) target = $region56
        $region55: #{_lambda_.1} parent=47 // pred_region
          %p609 = scmp.lt.s32.totalorder %s31, 1
          %s610 = scalar_select %p609, %s31, 1
          %s611 = scalar_lea.vmem %s5, %s610
        $region56: #{_lambda_.1} parent=47 // pred_fallthru
          _
        // Predicated region
        $region57: #{_lambda_.1} parent=47 // pred_check
          %p612 = pneg %p187
        $region58: #{_lambda_.1} parent=47 // pred_check_branch
          %614 = sbr.rel (%p612) target = $region60
        $region59: #{_lambda_.1} parent=47 // pred_region
          %p615 = scmp.lt.s32.totalorder %s31, 1
          %s616 = scalar_select %p615, %s31, 1
          %s617 = smul.addr %s616, 4
          %s618 = smul.addr %s617, 8
          %s619 = scalar_lea.vmem %s6, %s618
        $region60: #{_lambda_.1} parent=47 // pred_fallthru
          _
        // Predicated region
        $region61: #{_lambda_.1} parent=47 // pred_check
          %p620 = pneg %p213
        $region62: #{_lambda_.1} parent=47 // pred_check_branch
          %622 = sbr.rel (%p620) target = $region64
        $region63: #{_lambda_.1} parent=47 // pred_region
          %p623 = scmp.lt.s32.totalorder %s31, 1
          %s624 = scalar_select %p623, %s31, 1
          %s625 = scalar_lea.vmem %s7, %s624
        $region64: #{_lambda_.1} parent=47 // pred_fallthru
          _
        // Predicated region
        $region65: #{_lambda_.1} parent=47 // pred_check
          %p626 = pneg %p239
        $region66: #{_lambda_.1} parent=47 // pred_check_branch
          %628 = sbr.rel (%p626) target = $region68
        $region67: #{_lambda_.1} parent=47 // pred_region
          %p629 = scmp.lt.s32.totalorder %s31, 1
          %s630 = scalar_select %p629, %s31, 1
          %s631 = scalar_lea.vmem %s8, %s630
        $region68: #{_lambda_.1} parent=47 // pred_fallthru
          _
        // Predicated region
        $region69: #{_lambda_.1} parent=47 // pred_check
          %p632 = pneg %p265
        $region70: #{_lambda_.1} parent=47 // pred_check_branch
          %634 = sbr.rel (%p632) target = $region72
        $region71: #{_lambda_.1} parent=47 // pred_region
          %p635 = scmp.lt.s32.totalorder %s31, 1
          %s636 = scalar_select %p635, %s31, 1
          %s637 = scalar_lea.vmem %s9, %s636
        $region72: #{_lambda_.1} parent=47 // pred_fallthru
          _
        // Predicated region
        $region73: #{_lambda_.1} parent=47 // pred_check
          %p638 = pneg %p291
        $region74: #{_lambda_.1} parent=47 // pred_check_branch
          %640 = sbr.rel (%p638) target = $region76
        $region75: #{_lambda_.1} parent=47 // pred_region
          %p641 = scmp.lt.s32.totalorder %s31, 1
          %s642 = scalar_select %p641, %s31, 1
          %s643 = smul.addr %s642, 4
          %s644 = smul.addr %s643, 8
          %s645 = scalar_lea.vmem %s10, %s644
        $region76: #{_lambda_.1} parent=47 // pred_fallthru
          _
        // Predicated region
        $region77: #{_lambda_.1} parent=47 // pred_check
          %p646 = pneg %p317
        $region78: #{_lambda_.1} parent=47 // pred_check_branch
          %648 = sbr.rel (%p646) target = $region80
        $region79: #{_lambda_.1} parent=47 // pred_region
          %p649 = scmp.lt.s32.totalorder %s31, 1
          %s650 = scalar_select %p649, %s31, 1
          %s651 = scalar_lea.vmem %s11, %s650
        $region80: #{_lambda_.1} parent=47 // pred_fallthru
          _
        // Predicated region
        $region81: #{_lambda_.1} parent=47 // pred_check
          %p652 = pneg %p343
        $region82: #{_lambda_.1} parent=47 // pred_check_branch
          %654 = sbr.rel (%p652) target = $region84
        $region83: #{_lambda_.1} parent=47 // pred_region
          %p655 = scmp.lt.s32.totalorder %s31, 1
          %s656 = scalar_select %p655, %s31, 1
          %s657 = smul.addr %s656, 8
          %s658 = smul.addr %s657, 8
          %s659 = scalar_lea.vmem %s12, %s658
        $region84: #{_lambda_.1} parent=47 // pred_fallthru
          _
        // Predicated region
        $region85: #{_lambda_.1} parent=47 // pred_check
          %p660 = pneg %p369
        $region86: #{_lambda_.1} parent=47 // pred_check_branch
          %662 = sbr.rel (%p660) target = $region88
        $region87: #{_lambda_.1} parent=47 // pred_region
          %p663 = scmp.lt.s32.totalorder %s31, 1
          %s664 = scalar_select %p663, %s31, 1
          %s665 = scalar_lea.vmem %s13, %s664
        $region88: #{_lambda_.1} parent=47 // pred_fallthru
          _
        // Predicated region
        $region89: #{_lambda_.1} parent=47 // pred_check
          %p666 = pneg %p395
        $region90: #{_lambda_.1} parent=47 // pred_check_branch
          %668 = sbr.rel (%p666) target = $region92
        $region91: #{_lambda_.1} parent=47 // pred_region
          %p669 = scmp.lt.s32.totalorder %s31, 1
          %s670 = scalar_select %p669, %s31, 1
          %s671 = scalar_lea.vmem %s14, %s670
        $region92: #{_lambda_.1} parent=47 // pred_fallthru
          _
        // Predicated region
        $region93: #{_lambda_.1} parent=47 // pred_check
          %p672 = pneg %p421
        $region94: #{_lambda_.1} parent=47 // pred_check_branch
          %674 = sbr.rel (%p672) target = $region96
        $region95: #{_lambda_.1} parent=47 // pred_region
          %p675 = scmp.lt.s32.totalorder %s31, 1
          %s676 = scalar_select %p675, %s31, 1
          %s677 = scalar_lea.vmem %s15, %s676
        $region96: #{_lambda_.1} parent=47 // pred_fallthru
          _
      $region48: #{_lambda_.1} parent=5 // pred_fallthru
        _
      %p678 = scmp.le.s32.totalorder 1, %s31
      %p679 = scmp.lt.s32.totalorder %s31, 3
      %p680 = pnand %p678, %p679
      %p681 = pneg %p680
      // Predicated region
      $region97: #{_lambda_.1} parent=5 // pred_check
        _
      $region98: #{_lambda_.1} parent=5 // pred_check_branch
        %683 = sbr.rel (%p680) target = $region100
      $region99: #{_lambda_.1} parent=5 // pred_region
        %s684 = ssub.s32 %s31, 1
        %s685 = sand.u32 %s128, 1
        %s686 = scalar_lea.sflag [#allocation4], %s685
        %s687 = sand.u32 %s128, 1
        %s688 = smul.addr %s687, 32
        %s689 = scalar_lea.vmem [#allocation3], %s688
        // Predicated region
        $region101: #{_lambda_.1} parent=99 // pred_check
          %p690 = pneg %p141
        $region102: #{_lambda_.1} parent=99 // pred_check_branch
          %692 = sbr.rel (%p690) target = $region104
        $region103: #{_lambda_.1} parent=99 // pred_region
          %693 = dma.done %s686, 512
        $region104: #{_lambda_.1} parent=99 // pred_fallthru
          _
        // Predicated region
        $region105: #{_lambda_.1} parent=99 // pred_check
          %p694 = pneg %p448
        $region106: #{_lambda_.1} parent=99 // pred_check_branch
          %696 = sbr.rel (%p694) target = $region108
        $region107: #{_lambda_.1} parent=99 // pred_region
          %697 = dma.done [#allocation7], 512
        $region108: #{_lambda_.1} parent=99 // pred_fallthru
          _
        %p698 = pneg %p52
        %p699 = pneg %p49
        %p700 = pneg %p73
        %p701 = pneg %p70
        %p702 = pneg %p94
        %p703 = pneg %p91
        %p704 = pneg %p115
        %p705 = pneg %p112
        %s706 = sand.u32 %s128, 1
        %s707 = scalar_lea.sflag [#allocation4], %s706
        %s708 = sand.u32 %s128, 1
        %s709 = smul.addr %s708, 32
        %s710 = scalar_lea.vmem [#allocation3], %s709
        %p711 = pneg %p141
        %p712 = pneg %p138
        %p713 = scmp.lt.s32.totalorder %s36, 1
        %s714 = scalar_select %p713, %s36, 1
        %s715 = scalar_lea.vmem %s5, %s714
        %p716 = pneg %p167
        %p717 = pneg %p164
        %p718 = scmp.lt.s32.totalorder %s36, 1
        %s719 = scalar_select %p718, %s36, 1
        %s720 = smul.addr %s719, 4
        %s721 = smul.addr %s720, 8
        %s722 = scalar_lea.vmem %s6, %s721
        %p723 = pneg %p193
        %p724 = pneg %p190
        %p725 = scmp.lt.s32.totalorder %s36, 1
        %s726 = scalar_select %p725, %s36, 1
        %s727 = scalar_lea.vmem %s7, %s726
        %p728 = pneg %p219
        %p729 = pneg %p216
        %p730 = scmp.lt.s32.totalorder %s36, 1
        %s731 = scalar_select %p730, %s36, 1
        %s732 = scalar_lea.vmem %s8, %s731
        %p733 = pneg %p245
        %p734 = pneg %p242
        %p735 = scmp.lt.s32.totalorder %s36, 1
        %s736 = scalar_select %p735, %s36, 1
        %s737 = scalar_lea.vmem %s9, %s736
        %p738 = pneg %p271
        %p739 = pneg %p268
        %p740 = scmp.lt.s32.totalorder %s36, 1
        %s741 = scalar_select %p740, %s36, 1
        %s742 = smul.addr %s741, 4
        %s743 = smul.addr %s742, 8
        %s744 = scalar_lea.vmem %s10, %s743
        %p745 = pneg %p297
        %p746 = pneg %p294
        %p747 = scmp.lt.s32.totalorder %s36, 1
        %s748 = scalar_select %p747, %s36, 1
        %s749 = scalar_lea.vmem %s11, %s748
        %p750 = pneg %p323
        %p751 = pneg %p320
        %p752 = scmp.lt.s32.totalorder %s36, 1
        %s753 = scalar_select %p752, %s36, 1
        %s754 = smul.addr %s753, 8
        %s755 = smul.addr %s754, 8
        %s756 = scalar_lea.vmem %s12, %s755
        %p757 = pneg %p349
        %p758 = pneg %p346
        %p759 = scmp.lt.s32.totalorder %s36, 1
        %s760 = scalar_select %p759, %s36, 1
        %s761 = scalar_lea.vmem %s13, %s760
        %p762 = pneg %p375
        %p763 = pneg %p372
        %p764 = scmp.lt.s32.totalorder %s36, 1
        %s765 = scalar_select %p764, %s36, 1
        %s766 = scalar_lea.vmem %s14, %s765
        %p767 = pneg %p401
        %p768 = pneg %p398
        %p769 = scmp.lt.s32.totalorder %s36, 1
        %s770 = scalar_select %p769, %s36, 1
        %s771 = scalar_lea.vmem %s15, %s770
        %p772 = pneg %p427
        %p773 = pneg %p424
        %p774 = pneg %p448
        %p775 = pneg %p445
        %p776 = pneg %p469
        %p777 = pneg %p466
        %p778 = pneg %p490
        %p779 = pneg %p487
        %p780 = pneg %p511
        %p781 = pneg %p508
        %p782 = pneg %p532
        %p783 = pneg %p529
        %p784 = scmp.lt.s32.totalorder %s36, 1
        %s785 = scalar_select %p784, %s36, 1
        %s786 = scalar_lea.vmem %s5, %s785
        %p787 = scmp.lt.s32.totalorder %s36, 1
        %s788 = scalar_select %p787, %s36, 1
        %s789 = smul.addr %s788, 4
        %s790 = smul.addr %s789, 8
        %s791 = scalar_lea.vmem %s6, %s790
        %p792 = scmp.lt.s32.totalorder %s36, 1
        %s793 = scalar_select %p792, %s36, 1
        %s794 = scalar_lea.vmem %s7, %s793
        %p795 = scmp.lt.s32.totalorder %s36, 1
        %s796 = scalar_select %p795, %s36, 1
        %s797 = scalar_lea.vmem %s8, %s796
        %p798 = scmp.lt.s32.totalorder %s36, 1
        %s799 = scalar_select %p798, %s36, 1
        %s800 = scalar_lea.vmem %s9, %s799
        %p801 = scmp.lt.s32.totalorder %s36, 1
        %s802 = scalar_select %p801, %s36, 1
        %s803 = smul.addr %s802, 4
        %s804 = smul.addr %s803, 8
        %s805 = scalar_lea.vmem %s10, %s804
        %p806 = scmp.lt.s32.totalorder %s36, 1
        %s807 = scalar_select %p806, %s36, 1
        %s808 = scalar_lea.vmem %s11, %s807
        %p809 = scmp.lt.s32.totalorder %s36, 1
        %s810 = scalar_select %p809, %s36, 1
        %s811 = smul.addr %s810, 8
        %s812 = smul.addr %s811, 8
        %s813 = scalar_lea.vmem %s12, %s812
        %p814 = scmp.lt.s32.totalorder %s36, 1
        %s815 = scalar_select %p814, %s36, 1
        %s816 = scalar_lea.vmem %s13, %s815
        %p817 = scmp.lt.s32.totalorder %s36, 1
        %s818 = scalar_select %p817, %s36, 1
        %s819 = scalar_lea.vmem %s14, %s818
        %p820 = scmp.lt.s32.totalorder %s36, 1
        %s821 = scalar_select %p820, %s36, 1
        %s822 = scalar_lea.vmem %s15, %s821
        %p823 = scmp.eq.s32.totalorder %s36, 0
        // Predicated region
        $region109: #{_lambda_.1} parent=99 // pred_check
          %p824 = pneg %p823
        $region110: #{_lambda_.1} parent=99 // pred_check_branch
          %826 = sbr.rel (%p824) target = $region112
        $region111: #{_lambda_.1} parent=99 // pred_region
          %v827 = vld [vmem:[%s0] sm:$0xff]
          %v828 = vld [vmem:[%s0 + $0x8] sm:$0xff]
          %v829 = vld [vmem:[%s2] sm:$0x1]
          %v830 = vld [vmem:[%s3] sm:$0x1]
          %vm831 = vcmask 261120
          %v832 = vsel %vm831, %v827, 0.0
          %833 = vadd.xlane.f32.xlu0 %v832
          %v834 = vpop.xlane.xlu0 %833
          %v835 = vsel %vm831, %v828, 0.0
          %836 = vadd.xlane.f32.xlu0 %v835
          %v837 = vpop.xlane.xlu0 %836
          %v838 = vrcp.pop 32.0
          %v839 = vmul.f32 %v834, %v838
          %v840 = vmul.f32 %v837, %v838
          %v841 = vsub.f32 %v827, %v839
          %v842 = vsub.f32 %v828, %v840
          %v843 = vmul.f32 %v841, %v841
          %v844 = vmul.f32 %v842, %v842
          %v845 = vsel %vm831, %v843, 0.0
          %846 = vadd.xlane.f32.xlu0 %v845
          %v847 = vpop.xlane.xlu0 %846
          %v848 = vsel %vm831, %v844, 0.0
          %849 = vadd.xlane.f32.xlu0 %v848
          %v850 = vpop.xlane.xlu0 %849
          %v851 = vmul.f32 %v847, %v838
          %v852 = vmul.f32 %v850, %v838
          %v853 = vadd.f32 %v851, 1e-12
          %v854 = vadd.f32 %v852, 1e-12
          %v855 = vrsqrt.pop %v853
          %v856 = vrsqrt.pop %v854
          %v857 = vmul.f32 %v841, %v855
          %v858 = vmul.f32 %v842, %v856
          %v860 = vlaneseq
          %v861 = vshrl.u32 %v860, 7
          %v862 = vsub.s32 0, %v861
          %v863 = vrot.slane %v829, %v862
          %v865 = vmul.f32 %v857, %v863
          %v866 = vmul.f32 %v858, %v863
          %v868 = vlaneseq
          %v869 = vshrl.u32 %v868, 7
          %v870 = vsub.s32 0, %v869
          %v871 = vrot.slane %v830, %v870
          %v873 = vadd.f32 %v865, %v871
          %v874 = vadd.f32 %v866, %v871
          %875 = vst.msk [vmem:[#allocation2] sm:$0xff] %vm831, %v873
          %876 = vst.msk [vmem:[#allocation2 + $0x8] sm:$0xff] %vm831, %v874
        $region112: #{_lambda_.1} parent=99 // pred_fallthru
          _
        %v877 = vld [vmem:[#allocation2] sm:$0xff]
        %v878 = vld [vmem:[#allocation2 + $0x8] sm:$0xff]
        %v879 = vld [vmem:[%s689] sm:$0xff]
        %v880 = vld [vmem:[%s689 + $0x8] sm:$0xff]
        %v881 = vld [vmem:[%s689 + $0x10] sm:$0xff]
        %v882 = vld [vmem:[%s689 + $0x18] sm:$0xff]
        %v883 = vld [vmem:[%s786] sm:$0x1]
        %v885 = vlaneseq
        %v886 = vshrl.u32 %v885, 7
        %v887 = vsub.s32 0, %v886
        %v888 = vrot.slane %v883, %v887
        %vm890 = vcmask 261120
        %v892 = vsel %vm890, %v877, 0
        %v895 = vsel %vm890, %v878, 0
        %897 = vmatprep.subr.mxu0 0.0
        %898 = vmatpush1.msra.mxu0 %v879
        %899 = vmatprep.subr.mxu0 0.0
        %900 = vmatpush1.msra.mxu0 %v880
        %901 = vmatprep.subr.mxu0 0.0
        %902 = vmatpush1.msra.mxu0 %v881
        %903 = vmatprep.subr.mxu0 0.0
        %904 = vmatpush1.msra.mxu0 %v882
        %905 = vmatprep.subr.mxu0 0.0
        %906 = vmatpush1.msra.mxu0 0.0
        %907 = vmatprep.subr.mxu0 0.0
        %908 = vmatpush1.msra.mxu0 0.0
        %909 = vmatprep.subr.mxu0 0.0
        %910 = vmatpush1.msra.mxu0 0.0
        %911 = vmatprep.subr.mxu0 0.0
        %912 = vmatpush1.msra.mxu0 0.0
        %913 = vmatprep.subr.mxu0 0.0
        %914 = vmatpush1.msra.mxu0 0.0
        %915 = vmatprep.subr.mxu0 0.0
        %916 = vmatpush1.msra.mxu0 0.0
        %917 = vmatprep.subr.mxu0 0.0
        %918 = vmatpush1.msra.mxu0 0.0
        %919 = vmatprep.subr.mxu0 0.0
        %920 = vmatpush1.msra.mxu0 0.0
        %921 = vmatprep.subr.mxu0 0.0
        %922 = vmatpush1.msra.mxu0 0.0
        %923 = vmatprep.subr.mxu0 0.0
        %924 = vmatpush1.msra.mxu0 0.0
        %925 = vmatprep.subr.mxu0 0.0
        %926 = vmatpush1.msra.mxu0 0.0
        %927 = vmatprep.subr.mxu0 0.0
        %928 = vmatpush1.msra.mxu0 0.0
        %929 = vmatprep.subr.mxu0 0.0
        %930 = vmatpush1.msra.mxu0 0.0
        %931 = vmatprep.subr.mxu0 0.0
        %932 = vmatpush1.msra.mxu0 0.0
        %933 = vmatprep.subr.mxu0 0.0
        %934 = vmatpush1.msra.mxu0 0.0
        %935 = vmatprep.subr.mxu0 0.0
        %936 = vmatpush1.msra.mxu0 0.0
        %937 = vmatprep.subr.mxu0 0.0
        %938 = vmatpush1.msra.mxu0 0.0
        %939 = vmatprep.subr.mxu0 0.0
        %940 = vmatpush1.msra.mxu0 0.0
        %941 = vmatprep.subr.mxu0 0.0
        %942 = vmatpush1.msra.mxu0 0.0
        %943 = vmatprep.subr.mxu0 0.0
        %944 = vmatpush1.msra.mxu0 0.0
        %945 = vmatprep.subr.mxu0 0.0
        %946 = vmatpush1.msra.mxu0 0.0
        %947 = vmatprep.subr.mxu0 0.0
        %948 = vmatpush1.msra.mxu0 0.0
        %949 = vmatprep.subr.mxu0 0.0
        %950 = vmatpush1.msra.mxu0 0.0
        %951 = vmatprep.subr.mxu0 0.0
        %952 = vmatpush1.msra.mxu0 0.0
        %953 = vmatprep.subr.mxu0 0.0
        %954 = vmatpush1.msra.mxu0 0.0
        %955 = vmatprep.subr.mxu0 0.0
        %956 = vmatpush1.msra.mxu0 0.0
        %957 = vmatprep.subr.mxu0 0.0
        %958 = vmatpush1.msra.mxu0 0.0
        %959 = vmatprep.subr.mxu0 0.0
        %960 = vmatpush1.msra.mxu0 0.0
        %961 = vmatprep.mubr.f32.mxu0 0.0
        %962 = vmatmul.mubr.f32.gmra.mrb[0].mxu0 %v892
        %v963 = vpop.f32.mrb[0].mxu0
        %v964 = vadd.f32 %v888, %v963
        %v965 = vpop.f32.mrb[0].mxu0
        %966 = vmatprep.mubr.f32.mxu0 0.0
        %967 = vmatmul.mubr.f32.gmra.mrb[0].mxu0 %v895
        %v968 = vpop.f32.mrb[0].mxu0
        %v969 = vadd.f32 %v888, %v968
        %v970 = vpop.f32.mrb[0].mxu0
        %971 = vdwg.mxu0
        %v972 = vld [vmem:[%s1] sm:$0xff]
        %974 = vrot.lane.b32.xlu0 %v964, 96
        %v975 = vpop.permute.xlu0 %974
        %vm976 = vcmask 64512
        %v977 = vsel %vm976, %v964, 0
        %v979 = vsel %vm976, %v975, 0
        %981 = vmatprep.subr.mxu0 0.0
        %982 = vmatpush1.xpose.msra.mxu0 %v979
        %983 = vmatprep.subr.mxu0 0.0
        %984 = vmatpush1.xpose.msra.mxu0 0.0
        %985 = vmatprep.subr.mxu0 0.0
        %986 = vmatpush1.xpose.msra.mxu0 0.0
        %987 = vmatprep.subr.mxu0 0.0
        %988 = vmatpush1.xpose.msra.mxu0 0.0
        %989 = vmatprep.subr.mxu0 0.0
        %990 = vmatpush1.xpose.msra.mxu0 0.0
        %991 = vmatprep.subr.mxu0 0.0
        %992 = vmatpush1.xpose.msra.mxu0 0.0
        %993 = vmatprep.subr.mxu0 0.0
        %994 = vmatpush1.xpose.msra.mxu0 0.0
        %995 = vmatprep.subr.mxu0 0.0
        %996 = vmatpush1.xpose.msra.mxu0 0.0
        %997 = vmatprep.subr.mxu0 0.0
        %998 = vmatpush1.xpose.msra.mxu0 0.0
        %999 = vmatprep.subr.mxu0 0.0
        %1000 = vmatpush1.xpose.msra.mxu0 0.0
        %1001 = vmatprep.subr.mxu0 0.0
        %1002 = vmatpush1.xpose.msra.mxu0 0.0
        %1003 = vmatprep.subr.mxu0 0.0
        %1004 = vmatpush1.xpose.msra.mxu0 0.0
        %1005 = vmatprep.subr.mxu0 0.0
        %1006 = vmatpush1.xpose.msra.mxu0 0.0
        %1007 = vmatprep.subr.mxu0 0.0
        %1008 = vmatpush1.xpose.msra.mxu0 0.0
        %1009 = vmatprep.subr.mxu0 0.0
        %1010 = vmatpush1.xpose.msra.mxu0 0.0
        %1011 = vmatprep.subr.mxu0 0.0
        %1012 = vmatpush1.xpose.msra.mxu0 0.0
        %1013 = vmatprep.subr.mxu0 0.0
        %1014 = vmatpush1.xpose.msra.mxu0 0.0
        %1015 = vmatprep.subr.mxu0 0.0
        %1016 = vmatpush1.xpose.msra.mxu0 0.0
        %1017 = vmatprep.subr.mxu0 0.0
        %1018 = vmatpush1.xpose.msra.mxu0 0.0
        %1019 = vmatprep.subr.mxu0 0.0
        %1020 = vmatpush1.xpose.msra.mxu0 0.0
        %1021 = vmatprep.subr.mxu0 0.0
        %1022 = vmatpush1.xpose.msra.mxu0 0.0
        %1023 = vmatprep.subr.mxu0 0.0
        %1024 = vmatpush1.xpose.msra.mxu0 0.0
        %1025 = vmatprep.subr.mxu0 0.0
        %1026 = vmatpush1.xpose.msra.mxu0 0.0
        %1027 = vmatprep.subr.mxu0 0.0
        %1028 = vmatpush1.xpose.msra.mxu0 0.0
        %1029 = vmatprep.subr.mxu0 0.0
        %1030 = vmatpush1.xpose.msra.mxu0 0.0
        %1031 = vmatprep.subr.mxu0 0.0
        %1032 = vmatpush1.xpose.msra.mxu0 0.0
        %1033 = vmatprep.subr.mxu0 0.0
        %1034 = vmatpush1.xpose.msra.mxu0 0.0
        %1035 = vmatprep.subr.mxu0 0.0
        %1036 = vmatpush1.xpose.msra.mxu0 0.0
        %1037 = vmatprep.subr.mxu0 0.0
        %1038 = vmatpush1.xpose.msra.mxu0 0.0
        %1039 = vmatprep.subr.mxu0 0.0
        %1040 = vmatpush1.xpose.msra.mxu0 0.0
        %1041 = vmatprep.subr.mxu0 0.0
        %1042 = vmatpush1.xpose.msra.mxu0 0.0
        %1043 = vmatprep.subr.mxu0 0.0
        %1044 = vmatpush1.xpose.msra.mxu0 0.0
        %1045 = vmatprep.mubr.f32.mxu0 0.0
        %1046 = vmatmul.mubr.f32.gmra.mrb[0].mxu0 %v977
        %v1047 = vpop.f32.mrb[0].mxu0
        %v1048 = vadd.f32 %v972, %v1047
        %v1049 = vpop.f32.mrb[0].mxu0
        %1050 = vdwg.mxu0
        %v1051 = vsel %vm976, %v1048, -inf
        %1052 = vmax.xlane.f32.xlu0 %v1051
        %v1053 = vpop.xlane.xlu0 %1052
        %v1054 = vsub.f32 %v1048, %v1053
        %v1055 = vmul.f32 %v1054, 1.442695
        %v1056 = vpow.pop %v1055
        %v1057 = vsel %vm976, %v1056, 0.0
        %1058 = vadd.xlane.f32.xlu0 %v1057
        %v1059 = vpop.xlane.xlu0 %1058
        %v1060 = vrcp.pop %v1059
        %v1061 = vmul.f32 %v1056, %v1060
        %1062 = vrot.lane.b32.xlu0 %v964, 64
        %v1063 = vpop.permute.xlu0 %1062
        %v1066 = vsel %vm976, %v1061, 0
        %1068 = vmatprep.subr.mxu0 0.0
        %1069 = vmatpush1.msra.mxu0 %v1063
        %1070 = vmatprep.subr.mxu0 0.0
        %1071 = vmatpush1.msra.mxu0 0.0
        %1072 = vmatprep.subr.mxu0 0.0
        %1073 = vmatpush1.msra.mxu0 0.0
        %1074 = vmatprep.subr.mxu0 0.0
        %1075 = vmatpush1.msra.mxu0 0.0
        %1076 = vmatprep.subr.mxu0 0.0
        %1077 = vmatpush1.msra.mxu0 0.0
        %1078 = vmatprep.subr.mxu0 0.0
        %1079 = vmatpush1.msra.mxu0 0.0
        %1080 = vmatprep.subr.mxu0 0.0
        %1081 = vmatpush1.msra.mxu0 0.0
        %1082 = vmatprep.subr.mxu0 0.0
        %1083 = vmatpush1.msra.mxu0 0.0
        %1084 = vmatprep.subr.mxu0 0.0
        %1085 = vmatpush1.msra.mxu0 0.0
        %1086 = vmatprep.subr.mxu0 0.0
        %1087 = vmatpush1.msra.mxu0 0.0
        %1088 = vmatprep.subr.mxu0 0.0
        %1089 = vmatpush1.msra.mxu0 0.0
        %1090 = vmatprep.subr.mxu0 0.0
        %1091 = vmatpush1.msra.mxu0 0.0
        %1092 = vmatprep.subr.mxu0 0.0
        %1093 = vmatpush1.msra.mxu0 0.0
        %1094 = vmatprep.subr.mxu0 0.0
        %1095 = vmatpush1.msra.mxu0 0.0
        %1096 = vmatprep.subr.mxu0 0.0
        %1097 = vmatpush1.msra.mxu0 0.0
        %1098 = vmatprep.subr.mxu0 0.0
        %1099 = vmatpush1.msra.mxu0 0.0
        %1100 = vmatprep.subr.mxu0 0.0
        %1101 = vmatpush1.msra.mxu0 0.0
        %1102 = vmatprep.subr.mxu0 0.0
        %1103 = vmatpush1.msra.mxu0 0.0
        %1104 = vmatprep.subr.mxu0 0.0
        %1105 = vmatpush1.msra.mxu0 0.0
        %1106 = vmatprep.subr.mxu0 0.0
        %1107 = vmatpush1.msra.mxu0 0.0
        %1108 = vmatprep.subr.mxu0 0.0
        %1109 = vmatpush1.msra.mxu0 0.0
        %1110 = vmatprep.subr.mxu0 0.0
        %1111 = vmatpush1.msra.mxu0 0.0
        %1112 = vmatprep.subr.mxu0 0.0
        %1113 = vmatpush1.msra.mxu0 0.0
        %1114 = vmatprep.subr.mxu0 0.0
        %1115 = vmatpush1.msra.mxu0 0.0
        %1116 = vmatprep.subr.mxu0 0.0
        %1117 = vmatpush1.msra.mxu0 0.0
        %1118 = vmatprep.subr.mxu0 0.0
        %1119 = vmatpush1.msra.mxu0 0.0
        %1120 = vmatprep.subr.mxu0 0.0
        %1121 = vmatpush1.msra.mxu0 0.0
        %1122 = vmatprep.subr.mxu0 0.0
        %1123 = vmatpush1.msra.mxu0 0.0
        %1124 = vmatprep.subr.mxu0 0.0
        %1125 = vmatpush1.msra.mxu0 0.0
        %1126 = vmatprep.subr.mxu0 0.0
        %1127 = vmatpush1.msra.mxu0 0.0
        %1128 = vmatprep.subr.mxu0 0.0
        %1129 = vmatpush1.msra.mxu0 0.0
        %1130 = vmatprep.subr.mxu0 0.0
        %1131 = vmatpush1.msra.mxu0 0.0
        %1132 = vmatprep.mubr.f32.mxu0 0.0
        %1133 = vmatmul.mubr.f32.gmra.mrb[0].mxu0 %v1066
        %v1134 = vpop.f32.mrb[0].mxu0
        %v1135 = vadd.f32 0.0, %v1134
        %v1136 = vpop.f32.mrb[0].mxu0
        %1137 = vdwg.mxu0
        %1138 = vrot.lane.b32.xlu0 %v964, 120
        %v1139 = vpop.permute.xlu0 %1138
        %1140 = vrot.lane.b32.xlu0 %v964, 88
        %v1141 = vpop.permute.xlu0 %1140
        %v1142 = vsel %vm976, %v1139, 0
        %v1144 = vsel %vm976, %v1141, 0
        %1146 = vmatprep.subr.mxu0 0.0
        %1147 = vmatpush1.xpose.msra.mxu0 %v1144
        %1148 = vmatprep.subr.mxu0 0.0
        %1149 = vmatpush1.xpose.msra.mxu0 0.0
        %1150 = vmatprep.subr.mxu0 0.0
        %1151 = vmatpush1.xpose.msra.mxu0 0.0
        %1152 = vmatprep.subr.mxu0 0.0
        %1153 = vmatpush1.xpose.msra.mxu0 0.0
        %1154 = vmatprep.subr.mxu0 0.0
        %1155 = vmatpush1.xpose.msra.mxu0 0.0
        %1156 = vmatprep.subr.mxu0 0.0
        %1157 = vmatpush1.xpose.msra.mxu0 0.0
        %1158 = vmatprep.subr.mxu0 0.0
        %1159 = vmatpush1.xpose.msra.mxu0 0.0
        %1160 = vmatprep.subr.mxu0 0.0
        %1161 = vmatpush1.xpose.msra.mxu0 0.0
        %1162 = vmatprep.subr.mxu0 0.0
        %1163 = vmatpush1.xpose.msra.mxu0 0.0
        %1164 = vmatprep.subr.mxu0 0.0
        %1165 = vmatpush1.xpose.msra.mxu0 0.0
        %1166 = vmatprep.subr.mxu0 0.0
        %1167 = vmatpush1.xpose.msra.mxu0 0.0
        %1168 = vmatprep.subr.mxu0 0.0
        %1169 = vmatpush1.xpose.msra.mxu0 0.0
        %1170 = vmatprep.subr.mxu0 0.0
        %1171 = vmatpush1.xpose.msra.mxu0 0.0
        %1172 = vmatprep.subr.mxu0 0.0
        %1173 = vmatpush1.xpose.msra.mxu0 0.0
        %1174 = vmatprep.subr.mxu0 0.0
        %1175 = vmatpush1.xpose.msra.mxu0 0.0
        %1176 = vmatprep.subr.mxu0 0.0
        %1177 = vmatpush1.xpose.msra.mxu0 0.0
        %1178 = vmatprep.subr.mxu0 0.0
        %1179 = vmatpush1.xpose.msra.mxu0 0.0
        %1180 = vmatprep.subr.mxu0 0.0
        %1181 = vmatpush1.xpose.msra.mxu0 0.0
        %1182 = vmatprep.subr.mxu0 0.0
        %1183 = vmatpush1.xpose.msra.mxu0 0.0
        %1184 = vmatprep.subr.mxu0 0.0
        %1185 = vmatpush1.xpose.msra.mxu0 0.0
        %1186 = vmatprep.subr.mxu0 0.0
        %1187 = vmatpush1.xpose.msra.mxu0 0.0
        %1188 = vmatprep.subr.mxu0 0.0
        %1189 = vmatpush1.xpose.msra.mxu0 0.0
        %1190 = vmatprep.subr.mxu0 0.0
        %1191 = vmatpush1.xpose.msra.mxu0 0.0
        %1192 = vmatprep.subr.mxu0 0.0
        %1193 = vmatpush1.xpose.msra.mxu0 0.0
        %1194 = vmatprep.subr.mxu0 0.0
        %1195 = vmatpush1.xpose.msra.mxu0 0.0
        %1196 = vmatprep.subr.mxu0 0.0
        %1197 = vmatpush1.xpose.msra.mxu0 0.0
        %1198 = vmatprep.subr.mxu0 0.0
        %1199 = vmatpush1.xpose.msra.mxu0 0.0
        %1200 = vmatprep.subr.mxu0 0.0
        %1201 = vmatpush1.xpose.msra.mxu0 0.0
        %1202 = vmatprep.subr.mxu0 0.0
        %1203 = vmatpush1.xpose.msra.mxu0 0.0
        %1204 = vmatprep.subr.mxu0 0.0
        %1205 = vmatpush1.xpose.msra.mxu0 0.0
        %1206 = vmatprep.subr.mxu0 0.0
        %1207 = vmatpush1.xpose.msra.mxu0 0.0
        %1208 = vmatprep.subr.mxu0 0.0
        %1209 = vmatpush1.xpose.msra.mxu0 0.0
        %1210 = vmatprep.mubr.f32.mxu0 0.0
        %1211 = vmatmul.mubr.f32.gmra.mrb[0].mxu0 %v1142
        %v1212 = vpop.f32.mrb[0].mxu0
        %v1213 = vadd.f32 %v972, %v1212
        %v1214 = vpop.f32.mrb[0].mxu0
        %1215 = vdwg.mxu0
        %v1216 = vsel %vm976, %v1213, -inf
        %1217 = vmax.xlane.f32.xlu0 %v1216
        %v1218 = vpop.xlane.xlu0 %1217
        %v1219 = vsub.f32 %v1213, %v1218
        %v1220 = vmul.f32 %v1219, 1.442695
        %v1221 = vpow.pop %v1220
        %v1222 = vsel %vm976, %v1221, 0.0
        %1223 = vadd.xlane.f32.xlu0 %v1222
        %v1224 = vpop.xlane.xlu0 %1223
        %v1225 = vrcp.pop %v1224
        %v1226 = vmul.f32 %v1221, %v1225
        %1227 = vrot.lane.b32.xlu0 %v964, 56
        %v1228 = vpop.permute.xlu0 %1227
        %v1231 = vsel %vm976, %v1226, 0
        %1233 = vmatprep.subr.mxu0 0.0
        %1234 = vmatpush1.msra.mxu0 %v1228
        %1235 = vmatprep.subr.mxu0 0.0
        %1236 = vmatpush1.msra.mxu0 0.0
        %1237 = vmatprep.subr.mxu0 0.0
        %1238 = vmatpush1.msra.mxu0 0.0
        %1239 = vmatprep.subr.mxu0 0.0
        %1240 = vmatpush1.msra.mxu0 0.0
        %1241 = vmatprep.subr.mxu0 0.0
        %1242 = vmatpush1.msra.mxu0 0.0
        %1243 = vmatprep.subr.mxu0 0.0
        %1244 = vmatpush1.msra.mxu0 0.0
        %1245 = vmatprep.subr.mxu0 0.0
        %1246 = vmatpush1.msra.mxu0 0.0
        %1247 = vmatprep.subr.mxu0 0.0
        %1248 = vmatpush1.msra.mxu0 0.0
        %1249 = vmatprep.subr.mxu0 0.0
        %1250 = vmatpush1.msra.mxu0 0.0
        %1251 = vmatprep.subr.mxu0 0.0
        %1252 = vmatpush1.msra.mxu0 0.0
        %1253 = vmatprep.subr.mxu0 0.0
        %1254 = vmatpush1.msra.mxu0 0.0
        %1255 = vmatprep.subr.mxu0 0.0
        %1256 = vmatpush1.msra.mxu0 0.0
        %1257 = vmatprep.subr.mxu0 0.0
        %1258 = vmatpush1.msra.mxu0 0.0
        %1259 = vmatprep.subr.mxu0 0.0
        %1260 = vmatpush1.msra.mxu0 0.0
        %1261 = vmatprep.subr.mxu0 0.0
        %1262 = vmatpush1.msra.mxu0 0.0
        %1263 = vmatprep.subr.mxu0 0.0
        %1264 = vmatpush1.msra.mxu0 0.0
        %1265 = vmatprep.subr.mxu0 0.0
        %1266 = vmatpush1.msra.mxu0 0.0
        %1267 = vmatprep.subr.mxu0 0.0
        %1268 = vmatpush1.msra.mxu0 0.0
        %1269 = vmatprep.subr.mxu0 0.0
        %1270 = vmatpush1.msra.mxu0 0.0
        %1271 = vmatprep.subr.mxu0 0.0
        %1272 = vmatpush1.msra.mxu0 0.0
        %1273 = vmatprep.subr.mxu0 0.0
        %1274 = vmatpush1.msra.mxu0 0.0
        %1275 = vmatprep.subr.mxu0 0.0
        %1276 = vmatpush1.msra.mxu0 0.0
        %1277 = vmatprep.subr.mxu0 0.0
        %1278 = vmatpush1.msra.mxu0 0.0
        %1279 = vmatprep.subr.mxu0 0.0
        %1280 = vmatpush1.msra.mxu0 0.0
        %1281 = vmatprep.subr.mxu0 0.0
        %1282 = vmatpush1.msra.mxu0 0.0
        %1283 = vmatprep.subr.mxu0 0.0
        %1284 = vmatpush1.msra.mxu0 0.0
        %1285 = vmatprep.subr.mxu0 0.0
        %1286 = vmatpush1.msra.mxu0 0.0
        %1287 = vmatprep.subr.mxu0 0.0
        %1288 = vmatpush1.msra.mxu0 0.0
        %1289 = vmatprep.subr.mxu0 0.0
        %1290 = vmatpush1.msra.mxu0 0.0
        %1291 = vmatprep.subr.mxu0 0.0
        %1292 = vmatpush1.msra.mxu0 0.0
        %1293 = vmatprep.subr.mxu0 0.0
        %1294 = vmatpush1.msra.mxu0 0.0
        %1295 = vmatprep.subr.mxu0 0.0
        %1296 = vmatpush1.msra.mxu0 0.0
        %1297 = vmatprep.mubr.f32.mxu0 0.0
        %1298 = vmatmul.mubr.f32.gmra.mrb[0].mxu0 %v1231
        %v1299 = vpop.f32.mrb[0].mxu0
        %v1300 = vadd.f32 0.0, %v1299
        %v1301 = vpop.f32.mrb[0].mxu0
        %1302 = vdwg.mxu0
        %1303 = vrot.lane.b32.xlu0 %v964, 112
        %v1304 = vpop.permute.xlu0 %1303
        %1305 = vrot.lane.b32.xlu0 %v964, 80
        %v1306 = vpop.permute.xlu0 %1305
        %v1307 = vsel %vm976, %v1304, 0
        %v1309 = vsel %vm976, %v1306, 0
        %1311 = vmatprep.subr.mxu0 0.0
        %1312 = vmatpush1.xpose.msra.mxu0 %v1309
        %1313 = vmatprep.subr.mxu0 0.0
        %1314 = vmatpush1.xpose.msra.mxu0 0.0
        %1315 = vmatprep.subr.mxu0 0.0
        %1316 = vmatpush1.xpose.msra.mxu0 0.0
        %1317 = vmatprep.subr.mxu0 0.0
        %1318 = vmatpush1.xpose.msra.mxu0 0.0
        %1319 = vmatprep.subr.mxu0 0.0
        %1320 = vmatpush1.xpose.msra.mxu0 0.0
        %1321 = vmatprep.subr.mxu0 0.0
        %1322 = vmatpush1.xpose.msra.mxu0 0.0
        %1323 = vmatprep.subr.mxu0 0.0
        %1324 = vmatpush1.xpose.msra.mxu0 0.0
        %1325 = vmatprep.subr.mxu0 0.0
        %1326 = vmatpush1.xpose.msra.mxu0 0.0
        %1327 = vmatprep.subr.mxu0 0.0
        %1328 = vmatpush1.xpose.msra.mxu0 0.0
        %1329 = vmatprep.subr.mxu0 0.0
        %1330 = vmatpush1.xpose.msra.mxu0 0.0
        %1331 = vmatprep.subr.mxu0 0.0
        %1332 = vmatpush1.xpose.msra.mxu0 0.0
        %1333 = vmatprep.subr.mxu0 0.0
        %1334 = vmatpush1.xpose.msra.mxu0 0.0
        %1335 = vmatprep.subr.mxu0 0.0
        %1336 = vmatpush1.xpose.msra.mxu0 0.0
        %1337 = vmatprep.subr.mxu0 0.0
        %1338 = vmatpush1.xpose.msra.mxu0 0.0
        %1339 = vmatprep.subr.mxu0 0.0
        %1340 = vmatpush1.xpose.msra.mxu0 0.0
        %1341 = vmatprep.subr.mxu0 0.0
        %1342 = vmatpush1.xpose.msra.mxu0 0.0
        %1343 = vmatprep.subr.mxu0 0.0
        %1344 = vmatpush1.xpose.msra.mxu0 0.0
        %1345 = vmatprep.subr.mxu0 0.0
        %1346 = vmatpush1.xpose.msra.mxu0 0.0
        %1347 = vmatprep.subr.mxu0 0.0
        %1348 = vmatpush1.xpose.msra.mxu0 0.0
        %1349 = vmatprep.subr.mxu0 0.0
        %1350 = vmatpush1.xpose.msra.mxu0 0.0
        %1351 = vmatprep.subr.mxu0 0.0
        %1352 = vmatpush1.xpose.msra.mxu0 0.0
        %1353 = vmatprep.subr.mxu0 0.0
        %1354 = vmatpush1.xpose.msra.mxu0 0.0
        %1355 = vmatprep.subr.mxu0 0.0
        %1356 = vmatpush1.xpose.msra.mxu0 0.0
        %1357 = vmatprep.subr.mxu0 0.0
        %1358 = vmatpush1.xpose.msra.mxu0 0.0
        %1359 = vmatprep.subr.mxu0 0.0
        %1360 = vmatpush1.xpose.msra.mxu0 0.0
        %1361 = vmatprep.subr.mxu0 0.0
        %1362 = vmatpush1.xpose.msra.mxu0 0.0
        %1363 = vmatprep.subr.mxu0 0.0
        %1364 = vmatpush1.xpose.msra.mxu0 0.0
        %1365 = vmatprep.subr.mxu0 0.0
        %1366 = vmatpush1.xpose.msra.mxu0 0.0
        %1367 = vmatprep.subr.mxu0 0.0
        %1368 = vmatpush1.xpose.msra.mxu0 0.0
        %1369 = vmatprep.subr.mxu0 0.0
        %1370 = vmatpush1.xpose.msra.mxu0 0.0
        %1371 = vmatprep.subr.mxu0 0.0
        %1372 = vmatpush1.xpose.msra.mxu0 0.0
        %1373 = vmatprep.subr.mxu0 0.0
        %1374 = vmatpush1.xpose.msra.mxu0 0.0
        %1375 = vmatprep.mubr.f32.mxu0 0.0
        %1376 = vmatmul.mubr.f32.gmra.mrb[0].mxu0 %v1307
        %v1377 = vpop.f32.mrb[0].mxu0
        %v1378 = vadd.f32 %v972, %v1377
        %v1379 = vpop.f32.mrb[0].mxu0
        %1380 = vdwg.mxu0
        %v1381 = vsel %vm976, %v1378, -inf
        %1382 = vmax.xlane.f32.xlu0 %v1381
        %v1383 = vpop.xlane.xlu0 %1382
        %v1384 = vsub.f32 %v1378, %v1383
        %v1385 = vmul.f32 %v1384, 1.442695
        %v1386 = vpow.pop %v1385
        %v1387 = vsel %vm976, %v1386, 0.0
        %1388 = vadd.xlane.f32.xlu0 %v1387
        %v1389 = vpop.xlane.xlu0 %1388
        %v1390 = vrcp.pop %v1389
        %v1391 = vmul.f32 %v1386, %v1390
        %1392 = vrot.lane.b32.xlu0 %v964, 48
        %v1393 = vpop.permute.xlu0 %1392
        %v1396 = vsel %vm976, %v1391, 0
        %1398 = vmatprep.subr.mxu0 0.0
        %1399 = vmatpush1.msra.mxu0 %v1393
        %1400 = vmatprep.subr.mxu0 0.0
        %1401 = vmatpush1.msra.mxu0 0.0
        %1402 = vmatprep.subr.mxu0 0.0
        %1403 = vmatpush1.msra.mxu0 0.0
        %1404 = vmatprep.subr.mxu0 0.0
        %1405 = vmatpush1.msra.mxu0 0.0
        %1406 = vmatprep.subr.mxu0 0.0
        %1407 = vmatpush1.msra.mxu0 0.0
        %1408 = vmatprep.subr.mxu0 0.0
        %1409 = vmatpush1.msra.mxu0 0.0
        %1410 = vmatprep.subr.mxu0 0.0
        %1411 = vmatpush1.msra.mxu0 0.0
        %1412 = vmatprep.subr.mxu0 0.0
        %1413 = vmatpush1.msra.mxu0 0.0
        %1414 = vmatprep.subr.mxu0 0.0
        %1415 = vmatpush1.msra.mxu0 0.0
        %1416 = vmatprep.subr.mxu0 0.0
        %1417 = vmatpush1.msra.mxu0 0.0
        %1418 = vmatprep.subr.mxu0 0.0
        %1419 = vmatpush1.msra.mxu0 0.0
        %1420 = vmatprep.subr.mxu0 0.0
        %1421 = vmatpush1.msra.mxu0 0.0
        %1422 = vmatprep.subr.mxu0 0.0
        %1423 = vmatpush1.msra.mxu0 0.0
        %1424 = vmatprep.subr.mxu0 0.0
        %1425 = vmatpush1.msra.mxu0 0.0
        %1426 = vmatprep.subr.mxu0 0.0
        %1427 = vmatpush1.msra.mxu0 0.0
        %1428 = vmatprep.subr.mxu0 0.0
        %1429 = vmatpush1.msra.mxu0 0.0
        %1430 = vmatprep.subr.mxu0 0.0
        %1431 = vmatpush1.msra.mxu0 0.0
        %1432 = vmatprep.subr.mxu0 0.0
        %1433 = vmatpush1.msra.mxu0 0.0
        %1434 = vmatprep.subr.mxu0 0.0
        %1435 = vmatpush1.msra.mxu0 0.0
        %1436 = vmatprep.subr.mxu0 0.0
        %1437 = vmatpush1.msra.mxu0 0.0
        %1438 = vmatprep.subr.mxu0 0.0
        %1439 = vmatpush1.msra.mxu0 0.0
        %1440 = vmatprep.subr.mxu0 0.0
        %1441 = vmatpush1.msra.mxu0 0.0
        %1442 = vmatprep.subr.mxu0 0.0
        %1443 = vmatpush1.msra.mxu0 0.0
        %1444 = vmatprep.subr.mxu0 0.0
        %1445 = vmatpush1.msra.mxu0 0.0
        %1446 = vmatprep.subr.mxu0 0.0
        %1447 = vmatpush1.msra.mxu0 0.0
        %1448 = vmatprep.subr.mxu0 0.0
        %1449 = vmatpush1.msra.mxu0 0.0
        %1450 = vmatprep.subr.mxu0 0.0
        %1451 = vmatpush1.msra.mxu0 0.0
        %1452 = vmatprep.subr.mxu0 0.0
        %1453 = vmatpush1.msra.mxu0 0.0
        %1454 = vmatprep.subr.mxu0 0.0
        %1455 = vmatpush1.msra.mxu0 0.0
        %1456 = vmatprep.subr.mxu0 0.0
        %1457 = vmatpush1.msra.mxu0 0.0
        %1458 = vmatprep.subr.mxu0 0.0
        %1459 = vmatpush1.msra.mxu0 0.0
        %1460 = vmatprep.subr.mxu0 0.0
        %1461 = vmatpush1.msra.mxu0 0.0
        %1462 = vmatprep.mubr.f32.mxu0 0.0
        %1463 = vmatmul.mubr.f32.gmra.mrb[0].mxu0 %v1396
        %v1464 = vpop.f32.mrb[0].mxu0
        %v1465 = vadd.f32 0.0, %v1464
        %v1466 = vpop.f32.mrb[0].mxu0
        %1467 = vdwg.mxu0
        %1468 = vrot.lane.b32.xlu0 %v964, 104
        %v1469 = vpop.permute.xlu0 %1468
        %1470 = vrot.lane.b32.xlu0 %v964, 72
        %v1471 = vpop.permute.xlu0 %1470
        %v1472 = vsel %vm976, %v1469, 0
        %v1474 = vsel %vm976, %v1471, 0
        %1476 = vmatprep.subr.mxu0 0.0
        %1477 = vmatpush1.xpose.msra.mxu0 %v1474
        %1478 = vmatprep.subr.mxu0 0.0
        %1479 = vmatpush1.xpose.msra.mxu0 0.0
        %1480 = vmatprep.subr.mxu0 0.0
        %1481 = vmatpush1.xpose.msra.mxu0 0.0
        %1482 = vmatprep.subr.mxu0 0.0
        %1483 = vmatpush1.xpose.msra.mxu0 0.0
        %1484 = vmatprep.subr.mxu0 0.0
        %1485 = vmatpush1.xpose.msra.mxu0 0.0
        %1486 = vmatprep.subr.mxu0 0.0
        %1487 = vmatpush1.xpose.msra.mxu0 0.0
        %1488 = vmatprep.subr.mxu0 0.0
        %1489 = vmatpush1.xpose.msra.mxu0 0.0
        %1490 = vmatprep.subr.mxu0 0.0
        %1491 = vmatpush1.xpose.msra.mxu0 0.0
        %1492 = vmatprep.subr.mxu0 0.0
        %1493 = vmatpush1.xpose.msra.mxu0 0.0
        %1494 = vmatprep.subr.mxu0 0.0
        %1495 = vmatpush1.xpose.msra.mxu0 0.0
        %1496 = vmatprep.subr.mxu0 0.0
        %1497 = vmatpush1.xpose.msra.mxu0 0.0
        %1498 = vmatprep.subr.mxu0 0.0
        %1499 = vmatpush1.xpose.msra.mxu0 0.0
        %1500 = vmatprep.subr.mxu0 0.0
        %1501 = vmatpush1.xpose.msra.mxu0 0.0
        %1502 = vmatprep.subr.mxu0 0.0
        %1503 = vmatpush1.xpose.msra.mxu0 0.0
        %1504 = vmatprep.subr.mxu0 0.0
        %1505 = vmatpush1.xpose.msra.mxu0 0.0
        %1506 = vmatprep.subr.mxu0 0.0
        %1507 = vmatpush1.xpose.msra.mxu0 0.0
        %1508 = vmatprep.subr.mxu0 0.0
        %1509 = vmatpush1.xpose.msra.mxu0 0.0
        %1510 = vmatprep.subr.mxu0 0.0
        %1511 = vmatpush1.xpose.msra.mxu0 0.0
        %1512 = vmatprep.subr.mxu0 0.0
        %1513 = vmatpush1.xpose.msra.mxu0 0.0
        %1514 = vmatprep.subr.mxu0 0.0
        %1515 = vmatpush1.xpose.msra.mxu0 0.0
        %1516 = vmatprep.subr.mxu0 0.0
        %1517 = vmatpush1.xpose.msra.mxu0 0.0
        %1518 = vmatprep.subr.mxu0 0.0
        %1519 = vmatpush1.xpose.msra.mxu0 0.0
        %1520 = vmatprep.subr.mxu0 0.0
        %1521 = vmatpush1.xpose.msra.mxu0 0.0
        %1522 = vmatprep.subr.mxu0 0.0
        %1523 = vmatpush1.xpose.msra.mxu0 0.0
        %1524 = vmatprep.subr.mxu0 0.0
        %1525 = vmatpush1.xpose.msra.mxu0 0.0
        %1526 = vmatprep.subr.mxu0 0.0
        %1527 = vmatpush1.xpose.msra.mxu0 0.0
        %1528 = vmatprep.subr.mxu0 0.0
        %1529 = vmatpush1.xpose.msra.mxu0 0.0
        %1530 = vmatprep.subr.mxu0 0.0
        %1531 = vmatpush1.xpose.msra.mxu0 0.0
        %1532 = vmatprep.subr.mxu0 0.0
        %1533 = vmatpush1.xpose.msra.mxu0 0.0
        %1534 = vmatprep.subr.mxu0 0.0
        %1535 = vmatpush1.xpose.msra.mxu0 0.0
        %1536 = vmatprep.subr.mxu0 0.0
        %1537 = vmatpush1.xpose.msra.mxu0 0.0
        %1538 = vmatprep.subr.mxu0 0.0
        %1539 = vmatpush1.xpose.msra.mxu0 0.0
        %1540 = vmatprep.mubr.f32.mxu0 0.0
        %1541 = vmatmul.mubr.f32.gmra.mrb[0].mxu0 %v1472
        %v1542 = vpop.f32.mrb[0].mxu0
        %v1543 = vadd.f32 %v972, %v1542
        %v1544 = vpop.f32.mrb[0].mxu0
        %1545 = vdwg.mxu0
        %v1546 = vsel %vm976, %v1543, -inf
        %1547 = vmax.xlane.f32.xlu0 %v1546
        %v1548 = vpop.xlane.xlu0 %1547
        %v1549 = vsub.f32 %v1543, %v1548
        %v1550 = vmul.f32 %v1549, 1.442695
        %v1551 = vpow.pop %v1550
        %v1552 = vsel %vm976, %v1551, 0.0
        %1553 = vadd.xlane.f32.xlu0 %v1552
        %v1554 = vpop.xlane.xlu0 %1553
        %v1555 = vrcp.pop %v1554
        %v1556 = vmul.f32 %v1551, %v1555
        %1557 = vrot.lane.b32.xlu0 %v964, 40
        %v1558 = vpop.permute.xlu0 %1557
        %v1561 = vsel %vm976, %v1556, 0
        %1563 = vmatprep.subr.mxu0 0.0
        %1564 = vmatpush1.msra.mxu0 %v1558
        %1565 = vmatprep.subr.mxu0 0.0
        %1566 = vmatpush1.msra.mxu0 0.0
        %1567 = vmatprep.subr.mxu0 0.0
        %1568 = vmatpush1.msra.mxu0 0.0
        %1569 = vmatprep.subr.mxu0 0.0
        %1570 = vmatpush1.msra.mxu0 0.0
        %1571 = vmatprep.subr.mxu0 0.0
        %1572 = vmatpush1.msra.mxu0 0.0
        %1573 = vmatprep.subr.mxu0 0.0
        %1574 = vmatpush1.msra.mxu0 0.0
        %1575 = vmatprep.subr.mxu0 0.0
        %1576 = vmatpush1.msra.mxu0 0.0
        %1577 = vmatprep.subr.mxu0 0.0
        %1578 = vmatpush1.msra.mxu0 0.0
        %1579 = vmatprep.subr.mxu0 0.0
        %1580 = vmatpush1.msra.mxu0 0.0
        %1581 = vmatprep.subr.mxu0 0.0
        %1582 = vmatpush1.msra.mxu0 0.0
        %1583 = vmatprep.subr.mxu0 0.0
        %1584 = vmatpush1.msra.mxu0 0.0
        %1585 = vmatprep.subr.mxu0 0.0
        %1586 = vmatpush1.msra.mxu0 0.0
        %1587 = vmatprep.subr.mxu0 0.0
        %1588 = vmatpush1.msra.mxu0 0.0
        %1589 = vmatprep.subr.mxu0 0.0
        %1590 = vmatpush1.msra.mxu0 0.0
        %1591 = vmatprep.subr.mxu0 0.0
        %1592 = vmatpush1.msra.mxu0 0.0
        %1593 = vmatprep.subr.mxu0 0.0
        %1594 = vmatpush1.msra.mxu0 0.0
        %1595 = vmatprep.subr.mxu0 0.0
        %1596 = vmatpush1.msra.mxu0 0.0
        %1597 = vmatprep.subr.mxu0 0.0
        %1598 = vmatpush1.msra.mxu0 0.0
        %1599 = vmatprep.subr.mxu0 0.0
        %1600 = vmatpush1.msra.mxu0 0.0
        %1601 = vmatprep.subr.mxu0 0.0
        %1602 = vmatpush1.msra.mxu0 0.0
        %1603 = vmatprep.subr.mxu0 0.0
        %1604 = vmatpush1.msra.mxu0 0.0
        %1605 = vmatprep.subr.mxu0 0.0
        %1606 = vmatpush1.msra.mxu0 0.0
        %1607 = vmatprep.subr.mxu0 0.0
        %1608 = vmatpush1.msra.mxu0 0.0
        %1609 = vmatprep.subr.mxu0 0.0
        %1610 = vmatpush1.msra.mxu0 0.0
        %1611 = vmatprep.subr.mxu0 0.0
        %1612 = vmatpush1.msra.mxu0 0.0
        %1613 = vmatprep.subr.mxu0 0.0
        %1614 = vmatpush1.msra.mxu0 0.0
        %1615 = vmatprep.subr.mxu0 0.0
        %1616 = vmatpush1.msra.mxu0 0.0
        %1617 = vmatprep.subr.mxu0 0.0
        %1618 = vmatpush1.msra.mxu0 0.0
        %1619 = vmatprep.subr.mxu0 0.0
        %1620 = vmatpush1.msra.mxu0 0.0
        %1621 = vmatprep.subr.mxu0 0.0
        %1622 = vmatpush1.msra.mxu0 0.0
        %1623 = vmatprep.subr.mxu0 0.0
        %1624 = vmatpush1.msra.mxu0 0.0
        %1625 = vmatprep.subr.mxu0 0.0
        %1626 = vmatpush1.msra.mxu0 0.0
        %1627 = vmatprep.mubr.f32.mxu0 0.0
        %1628 = vmatmul.mubr.f32.gmra.mrb[0].mxu0 %v1561
        %v1629 = vpop.f32.mrb[0].mxu0
        %v1630 = vadd.f32 0.0, %v1629
        %v1631 = vpop.f32.mrb[0].mxu0
        %1632 = vdwg.mxu0
        %1634 = vrot.lane.b32.xlu0 %v1300, 8
        %v1635 = vpop.permute.xlu0 %1634
        %1638 = vrot.lane.b32.xlu0 %v1465, 16
        %v1639 = vpop.permute.xlu0 %1638
        %1642 = vrot.lane.b32.xlu0 %v1630, 24
        %v1643 = vpop.permute.xlu0 %1642
        %v1645 = vsel %vm976, %v1135, %v1635
        %vm1646 = vcmask 130048
        %v1647 = vsel %vm1646, %v1645, %v1639
        %vm1648 = vcmask 195584
        %v1649 = vsel %vm1648, %v1647, %v1643
        %s1650 = scalar_lea.vmem %s1, 8
        %v1651 = vld [vmem:[%s1650] sm:$0xff]
        %1653 = vrot.lane.b32.xlu0 %v969, 96
        %v1654 = vpop.permute.xlu0 %1653
        %v1655 = vsel %vm976, %v969, 0
        %v1657 = vsel %vm976, %v1654, 0
        %1659 = vmatprep.subr.mxu0 0.0
        %1660 = vmatpush1.xpose.msra.mxu0 %v1657
        %1661 = vmatprep.subr.mxu0 0.0
        %1662 = vmatpush1.xpose.msra.mxu0 0.0
        %1663 = vmatprep.subr.mxu0 0.0
        %1664 = vmatpush1.xpose.msra.mxu0 0.0
        %1665 = vmatprep.subr.mxu0 0.0
        %1666 = vmatpush1.xpose.msra.mxu0 0.0
        %1667 = vmatprep.subr.mxu0 0.0
        %1668 = vmatpush1.xpose.msra.mxu0 0.0
        %1669 = vmatprep.subr.mxu0 0.0
        %1670 = vmatpush1.xpose.msra.mxu0 0.0
        %1671 = vmatprep.subr.mxu0 0.0
        %1672 = vmatpush1.xpose.msra.mxu0 0.0
        %1673 = vmatprep.subr.mxu0 0.0
        %1674 = vmatpush1.xpose.msra.mxu0 0.0
        %1675 = vmatprep.subr.mxu0 0.0
        %1676 = vmatpush1.xpose.msra.mxu0 0.0
        %1677 = vmatprep.subr.mxu0 0.0
        %1678 = vmatpush1.xpose.msra.mxu0 0.0
        %1679 = vmatprep.subr.mxu0 0.0
        %1680 = vmatpush1.xpose.msra.mxu0 0.0
        %1681 = vmatprep.subr.mxu0 0.0
        %1682 = vmatpush1.xpose.msra.mxu0 0.0
        %1683 = vmatprep.subr.mxu0 0.0
        %1684 = vmatpush1.xpose.msra.mxu0 0.0
        %1685 = vmatprep.subr.mxu0 0.0
        %1686 = vmatpush1.xpose.msra.mxu0 0.0
        %1687 = vmatprep.subr.mxu0 0.0
        %1688 = vmatpush1.xpose.msra.mxu0 0.0
        %1689 = vmatprep.subr.mxu0 0.0
        %1690 = vmatpush1.xpose.msra.mxu0 0.0
        %1691 = vmatprep.subr.mxu0 0.0
        %1692 = vmatpush1.xpose.msra.mxu0 0.0
        %1693 = vmatprep.subr.mxu0 0.0
        %1694 = vmatpush1.xpose.msra.mxu0 0.0
        %1695 = vmatprep.subr.mxu0 0.0
        %1696 = vmatpush1.xpose.msra.mxu0 0.0
        %1697 = vmatprep.subr.mxu0 0.0
        %1698 = vmatpush1.xpose.msra.mxu0 0.0
        %1699 = vmatprep.subr.mxu0 0.0
        %1700 = vmatpush1.xpose.msra.mxu0 0.0
        %1701 = vmatprep.subr.mxu0 0.0
        %1702 = vmatpush1.xpose.msra.mxu0 0.0
        %1703 = vmatprep.subr.mxu0 0.0
        %1704 = vmatpush1.xpose.msra.mxu0 0.0
        %1705 = vmatprep.subr.mxu0 0.0
        %1706 = vmatpush1.xpose.msra.mxu0 0.0
        %1707 = vmatprep.subr.mxu0 0.0
        %1708 = vmatpush1.xpose.msra.mxu0 0.0
        %1709 = vmatprep.subr.mxu0 0.0
        %1710 = vmatpush1.xpose.msra.mxu0 0.0
        %1711 = vmatprep.subr.mxu0 0.0
        %1712 = vmatpush1.xpose.msra.mxu0 0.0
        %1713 = vmatprep.subr.mxu0 0.0
        %1714 = vmatpush1.xpose.msra.mxu0 0.0
        %1715 = vmatprep.subr.mxu0 0.0
        %1716 = vmatpush1.xpose.msra.mxu0 0.0
        %1717 = vmatprep.subr.mxu0 0.0
        %1718 = vmatpush1.xpose.msra.mxu0 0.0
        %1719 = vmatprep.subr.mxu0 0.0
        %1720 = vmatpush1.xpose.msra.mxu0 0.0
        %1721 = vmatprep.subr.mxu0 0.0
        %1722 = vmatpush1.xpose.msra.mxu0 0.0
        %1723 = vmatprep.mubr.f32.mxu0 0.0
        %1724 = vmatmul.mubr.f32.gmra.mrb[0].mxu0 %v1655
        %v1725 = vpop.f32.mrb[0].mxu0
        %v1726 = vadd.f32 %v1651, %v1725
        %v1727 = vpop.f32.mrb[0].mxu0
        %1728 = vdwg.mxu0
        %v1729 = vsel %vm976, %v1726, -inf
        %1730 = vmax.xlane.f32.xlu0 %v1729
        %v1731 = vpop.xlane.xlu0 %1730
        %v1732 = vsub.f32 %v1726, %v1731
        %v1733 = vmul.f32 %v1732, 1.442695
        %v1734 = vpow.pop %v1733
        %v1735 = vsel %vm976, %v1734, 0.0
        %1736 = vadd.xlane.f32.xlu0 %v1735
        %v1737 = vpop.xlane.xlu0 %1736
        %v1738 = vrcp.pop %v1737
        %v1739 = vmul.f32 %v1734, %v1738
        %1740 = vrot.lane.b32.xlu0 %v969, 64
        %v1741 = vpop.permute.xlu0 %1740
        %v1744 = vsel %vm976, %v1739, 0
        %1746 = vmatprep.subr.mxu0 0.0
        %1747 = vmatpush1.msra.mxu0 %v1741
        %1748 = vmatprep.subr.mxu0 0.0
        %1749 = vmatpush1.msra.mxu0 0.0
        %1750 = vmatprep.subr.mxu0 0.0
        %1751 = vmatpush1.msra.mxu0 0.0
        %1752 = vmatprep.subr.mxu0 0.0
        %1753 = vmatpush1.msra.mxu0 0.0
        %1754 = vmatprep.subr.mxu0 0.0
        %1755 = vmatpush1.msra.mxu0 0.0
        %1756 = vmatprep.subr.mxu0 0.0
        %1757 = vmatpush1.msra.mxu0 0.0
        %1758 = vmatprep.subr.mxu0 0.0
        %1759 = vmatpush1.msra.mxu0 0.0
        %1760 = vmatprep.subr.mxu0 0.0
        %1761 = vmatpush1.msra.mxu0 0.0
        %1762 = vmatprep.subr.mxu0 0.0
        %1763 = vmatpush1.msra.mxu0 0.0
        %1764 = vmatprep.subr.mxu0 0.0
        %1765 = vmatpush1.msra.mxu0 0.0
        %1766 = vmatprep.subr.mxu0 0.0
        %1767 = vmatpush1.msra.mxu0 0.0
        %1768 = vmatprep.subr.mxu0 0.0
        %1769 = vmatpush1.msra.mxu0 0.0
        %1770 = vmatprep.subr.mxu0 0.0
        %1771 = vmatpush1.msra.mxu0 0.0
        %1772 = vmatprep.subr.mxu0 0.0
        %1773 = vmatpush1.msra.mxu0 0.0
        %1774 = vmatprep.subr.mxu0 0.0
        %1775 = vmatpush1.msra.mxu0 0.0
        %1776 = vmatprep.subr.mxu0 0.0
        %1777 = vmatpush1.msra.mxu0 0.0
        %1778 = vmatprep.subr.mxu0 0.0
        %1779 = vmatpush1.msra.mxu0 0.0
        %1780 = vmatprep.subr.mxu0 0.0
        %1781 = vmatpush1.msra.mxu0 0.0
        %1782 = vmatprep.subr.mxu0 0.0
        %1783 = vmatpush1.msra.mxu0 0.0
        %1784 = vmatprep.subr.mxu0 0.0
        %1785 = vmatpush1.msra.mxu0 0.0
        %1786 = vmatprep.subr.mxu0 0.0
        %1787 = vmatpush1.msra.mxu0 0.0
        %1788 = vmatprep.subr.mxu0 0.0
        %1789 = vmatpush1.msra.mxu0 0.0
        %1790 = vmatprep.subr.mxu0 0.0
        %1791 = vmatpush1.msra.mxu0 0.0
        %1792 = vmatprep.subr.mxu0 0.0
        %1793 = vmatpush1.msra.mxu0 0.0
        %1794 = vmatprep.subr.mxu0 0.0
        %1795 = vmatpush1.msra.mxu0 0.0
        %1796 = vmatprep.subr.mxu0 0.0
        %1797 = vmatpush1.msra.mxu0 0.0
        %1798 = vmatprep.subr.mxu0 0.0
        %1799 = vmatpush1.msra.mxu0 0.0
        %1800 = vmatprep.subr.mxu0 0.0
        %1801 = vmatpush1.msra.mxu0 0.0
        %1802 = vmatprep.subr.mxu0 0.0
        %1803 = vmatpush1.msra.mxu0 0.0
        %1804 = vmatprep.subr.mxu0 0.0
        %1805 = vmatpush1.msra.mxu0 0.0
        %1806 = vmatprep.subr.mxu0 0.0
        %1807 = vmatpush1.msra.mxu0 0.0
        %1808 = vmatprep.subr.mxu0 0.0
        %1809 = vmatpush1.msra.mxu0 0.0
        %1810 = vmatprep.mubr.f32.mxu0 0.0
        %1811 = vmatmul.mubr.f32.gmra.mrb[0].mxu0 %v1744
        %v1812 = vpop.f32.mrb[0].mxu0
        %v1813 = vadd.f32 0.0, %v1812
        %v1814 = vpop.f32.mrb[0].mxu0
        %1815 = vdwg.mxu0
        %1816 = vrot.lane.b32.xlu0 %v969, 120
        %v1817 = vpop.permute.xlu0 %1816
        %1818 = vrot.lane.b32.xlu0 %v969, 88
        %v1819 = vpop.permute.xlu0 %1818
        %v1820 = vsel %vm976, %v1817, 0
        %v1822 = vsel %vm976, %v1819, 0
        %1824 = vmatprep.subr.mxu0 0.0
        %1825 = vmatpush1.xpose.msra.mxu0 %v1822
        %1826 = vmatprep.subr.mxu0 0.0
        %1827 = vmatpush1.xpose.msra.mxu0 0.0
        %1828 = vmatprep.subr.mxu0 0.0
        %1829 = vmatpush1.xpose.msra.mxu0 0.0
        %1830 = vmatprep.subr.mxu0 0.0
        %1831 = vmatpush1.xpose.msra.mxu0 0.0
        %1832 = vmatprep.subr.mxu0 0.0
        %1833 = vmatpush1.xpose.msra.mxu0 0.0
        %1834 = vmatprep.subr.mxu0 0.0
        %1835 = vmatpush1.xpose.msra.mxu0 0.0
        %1836 = vmatprep.subr.mxu0 0.0
        %1837 = vmatpush1.xpose.msra.mxu0 0.0
        %1838 = vmatprep.subr.mxu0 0.0
        %1839 = vmatpush1.xpose.msra.mxu0 0.0
        %1840 = vmatprep.subr.mxu0 0.0
        %1841 = vmatpush1.xpose.msra.mxu0 0.0
        %1842 = vmatprep.subr.mxu0 0.0
        %1843 = vmatpush1.xpose.msra.mxu0 0.0
        %1844 = vmatprep.subr.mxu0 0.0
        %1845 = vmatpush1.xpose.msra.mxu0 0.0
        %1846 = vmatprep.subr.mxu0 0.0
        %1847 = vmatpush1.xpose.msra.mxu0 0.0
        %1848 = vmatprep.subr.mxu0 0.0
        %1849 = vmatpush1.xpose.msra.mxu0 0.0
        %1850 = vmatprep.subr.mxu0 0.0
        %1851 = vmatpush1.xpose.msra.mxu0 0.0
        %1852 = vmatprep.subr.mxu0 0.0
        %1853 = vmatpush1.xpose.msra.mxu0 0.0
        %1854 = vmatprep.subr.mxu0 0.0
        %1855 = vmatpush1.xpose.msra.mxu0 0.0
        %1856 = vmatprep.subr.mxu0 0.0
        %1857 = vmatpush1.xpose.msra.mxu0 0.0
        %1858 = vmatprep.subr.mxu0 0.0
        %1859 = vmatpush1.xpose.msra.mxu0 0.0
        %1860 = vmatprep.subr.mxu0 0.0
        %1861 = vmatpush1.xpose.msra.mxu0 0.0
        %1862 = vmatprep.subr.mxu0 0.0
        %1863 = vmatpush1.xpose.msra.mxu0 0.0
        %1864 = vmatprep.subr.mxu0 0.0
        %1865 = vmatpush1.xpose.msra.mxu0 0.0
        %1866 = vmatprep.subr.mxu0 0.0
        %1867 = vmatpush1.xpose.msra.mxu0 0.0
        %1868 = vmatprep.subr.mxu0 0.0
        %1869 = vmatpush1.xpose.msra.mxu0 0.0
        %1870 = vmatprep.subr.mxu0 0.0
        %1871 = vmatpush1.xpose.msra.mxu0 0.0
        %1872 = vmatprep.subr.mxu0 0.0
        %1873 = vmatpush1.xpose.msra.mxu0 0.0
        %1874 = vmatprep.subr.mxu0 0.0
        %1875 = vmatpush1.xpose.msra.mxu0 0.0
        %1876 = vmatprep.subr.mxu0 0.0
        %1877 = vmatpush1.xpose.msra.mxu0 0.0
        %1878 = vmatprep.subr.mxu0 0.0
        %1879 = vmatpush1.xpose.msra.mxu0 0.0
        %1880 = vmatprep.subr.mxu0 0.0
        %1881 = vmatpush1.xpose.msra.mxu0 0.0
        %1882 = vmatprep.subr.mxu0 0.0
        %1883 = vmatpush1.xpose.msra.mxu0 0.0
        %1884 = vmatprep.subr.mxu0 0.0
        %1885 = vmatpush1.xpose.msra.mxu0 0.0
        %1886 = vmatprep.subr.mxu0 0.0
        %1887 = vmatpush1.xpose.msra.mxu0 0.0
        %1888 = vmatprep.mubr.f32.mxu0 0.0
        %1889 = vmatmul.mubr.f32.gmra.mrb[0].mxu0 %v1820
        %v1890 = vpop.f32.mrb[0].mxu0
        %v1891 = vadd.f32 %v1651, %v1890
        %v1892 = vpop.f32.mrb[0].mxu0
        %1893 = vdwg.mxu0
        %v1894 = vsel %vm976, %v1891, -inf
        %1895 = vmax.xlane.f32.xlu0 %v1894
        %v1896 = vpop.xlane.xlu0 %1895
        %v1897 = vsub.f32 %v1891, %v1896
        %v1898 = vmul.f32 %v1897, 1.442695
        %v1899 = vpow.pop %v1898
        %v1900 = vsel %vm976, %v1899, 0.0
        %1901 = vadd.xlane.f32.xlu0 %v1900
        %v1902 = vpop.xlane.xlu0 %1901
        %v1903 = vrcp.pop %v1902
        %v1904 = vmul.f32 %v1899, %v1903
        %1905 = vrot.lane.b32.xlu0 %v969, 56
        %v1906 = vpop.permute.xlu0 %1905
        %v1909 = vsel %vm976, %v1904, 0
        %1911 = vmatprep.subr.mxu0 0.0
        %1912 = vmatpush1.msra.mxu0 %v1906
        %1913 = vmatprep.subr.mxu0 0.0
        %1914 = vmatpush1.msra.mxu0 0.0
        %1915 = vmatprep.subr.mxu0 0.0
        %1916 = vmatpush1.msra.mxu0 0.0
        %1917 = vmatprep.subr.mxu0 0.0
        %1918 = vmatpush1.msra.mxu0 0.0
        %1919 = vmatprep.subr.mxu0 0.0
        %1920 = vmatpush1.msra.mxu0 0.0
        %1921 = vmatprep.subr.mxu0 0.0
        %1922 = vmatpush1.msra.mxu0 0.0
        %1923 = vmatprep.subr.mxu0 0.0
        %1924 = vmatpush1.msra.mxu0 0.0
        %1925 = vmatprep.subr.mxu0 0.0
        %1926 = vmatpush1.msra.mxu0 0.0
        %1927 = vmatprep.subr.mxu0 0.0
        %1928 = vmatpush1.msra.mxu0 0.0
        %1929 = vmatprep.subr.mxu0 0.0
        %1930 = vmatpush1.msra.mxu0 0.0
        %1931 = vmatprep.subr.mxu0 0.0
        %1932 = vmatpush1.msra.mxu0 0.0
        %1933 = vmatprep.subr.mxu0 0.0
        %1934 = vmatpush1.msra.mxu0 0.0
        %1935 = vmatprep.subr.mxu0 0.0
        %1936 = vmatpush1.msra.mxu0 0.0
        %1937 = vmatprep.subr.mxu0 0.0
        %1938 = vmatpush1.msra.mxu0 0.0
        %1939 = vmatprep.subr.mxu0 0.0
        %1940 = vmatpush1.msra.mxu0 0.0
        %1941 = vmatprep.subr.mxu0 0.0
        %1942 = vmatpush1.msra.mxu0 0.0
        %1943 = vmatprep.subr.mxu0 0.0
        %1944 = vmatpush1.msra.mxu0 0.0
        %1945 = vmatprep.subr.mxu0 0.0
        %1946 = vmatpush1.msra.mxu0 0.0
        %1947 = vmatprep.subr.mxu0 0.0
        %1948 = vmatpush1.msra.mxu0 0.0
        %1949 = vmatprep.subr.mxu0 0.0
        %1950 = vmatpush1.msra.mxu0 0.0
        %1951 = vmatprep.subr.mxu0 0.0
        %1952 = vmatpush1.msra.mxu0 0.0
        %1953 = vmatprep.subr.mxu0 0.0
        %1954 = vmatpush1.msra.mxu0 0.0
        %1955 = vmatprep.subr.mxu0 0.0
        %1956 = vmatpush1.msra.mxu0 0.0
        %1957 = vmatprep.subr.mxu0 0.0
        %1958 = vmatpush1.msra.mxu0 0.0
        %1959 = vmatprep.subr.mxu0 0.0
        %1960 = vmatpush1.msra.mxu0 0.0
        %1961 = vmatprep.subr.mxu0 0.0
        %1962 = vmatpush1.msra.mxu0 0.0
        %1963 = vmatprep.subr.mxu0 0.0
        %1964 = vmatpush1.msra.mxu0 0.0
        %1965 = vmatprep.subr.mxu0 0.0
        %1966 = vmatpush1.msra.mxu0 0.0
        %1967 = vmatprep.subr.mxu0 0.0
        %1968 = vmatpush1.msra.mxu0 0.0
        %1969 = vmatprep.subr.mxu0 0.0
        %1970 = vmatpush1.msra.mxu0 0.0
        %1971 = vmatprep.subr.mxu0 0.0
        %1972 = vmatpush1.msra.mxu0 0.0
        %1973 = vmatprep.subr.mxu0 0.0
        %1974 = vmatpush1.msra.mxu0 0.0
        %1975 = vmatprep.mubr.f32.mxu0 0.0
        %1976 = vmatmul.mubr.f32.gmra.mrb[0].mxu0 %v1909
        %v1977 = vpop.f32.mrb[0].mxu0
        %v1978 = vadd.f32 0.0, %v1977
        %v1979 = vpop.f32.mrb[0].mxu0
        %1980 = vdwg.mxu0
        %1981 = vrot.lane.b32.xlu0 %v969, 112
        %v1982 = vpop.permute.xlu0 %1981
        %1983 = vrot.lane.b32.xlu0 %v969, 80
        %v1984 = vpop.permute.xlu0 %1983
        %v1985 = vsel %vm976, %v1982, 0
        %v1987 = vsel %vm976, %v1984, 0
        %1989 = vmatprep.subr.mxu0 0.0
        %1990 = vmatpush1.xpose.msra.mxu0 %v1987
        %1991 = vmatprep.subr.mxu0 0.0
        %1992 = vmatpush1.xpose.msra.mxu0 0.0
        %1993 = vmatprep.subr.mxu0 0.0
        %1994 = vmatpush1.xpose.msra.mxu0 0.0
        %1995 = vmatprep.subr.mxu0 0.0
        %1996 = vmatpush1.xpose.msra.mxu0 0.0
        %1997 = vmatprep.subr.mxu0 0.0
        %1998 = vmatpush1.xpose.msra.mxu0 0.0
        %1999 = vmatprep.subr.mxu0 0.0
        %2000 = vmatpush1.xpose.msra.mxu0 0.0
        %2001 = vmatprep.subr.mxu0 0.0
        %2002 = vmatpush1.xpose.msra.mxu0 0.0
        %2003 = vmatprep.subr.mxu0 0.0
        %2004 = vmatpush1.xpose.msra.mxu0 0.0
        %2005 = vmatprep.subr.mxu0 0.0
        %2006 = vmatpush1.xpose.msra.mxu0 0.0
        %2007 = vmatprep.subr.mxu0 0.0
        %2008 = vmatpush1.xpose.msra.mxu0 0.0
        %2009 = vmatprep.subr.mxu0 0.0
        %2010 = vmatpush1.xpose.msra.mxu0 0.0
        %2011 = vmatprep.subr.mxu0 0.0
        %2012 = vmatpush1.xpose.msra.mxu0 0.0
        %2013 = vmatprep.subr.mxu0 0.0
        %2014 = vmatpush1.xpose.msra.mxu0 0.0
        %2015 = vmatprep.subr.mxu0 0.0
        %2016 = vmatpush1.xpose.msra.mxu0 0.0
        %2017 = vmatprep.subr.mxu0 0.0
        %2018 = vmatpush1.xpose.msra.mxu0 0.0
        %2019 = vmatprep.subr.mxu0 0.0
        %2020 = vmatpush1.xpose.msra.mxu0 0.0
        %2021 = vmatprep.subr.mxu0 0.0
        %2022 = vmatpush1.xpose.msra.mxu0 0.0
        %2023 = vmatprep.subr.mxu0 0.0
        %2024 = vmatpush1.xpose.msra.mxu0 0.0
        %2025 = vmatprep.subr.mxu0 0.0
        %2026 = vmatpush1.xpose.msra.mxu0 0.0
        %2027 = vmatprep.subr.mxu0 0.0
        %2028 = vmatpush1.xpose.msra.mxu0 0.0
        %2029 = vmatprep.subr.mxu0 0.0
        %2030 = vmatpush1.xpose.msra.mxu0 0.0
        %2031 = vmatprep.subr.mxu0 0.0
        %2032 = vmatpush1.xpose.msra.mxu0 0.0
        %2033 = vmatprep.subr.mxu0 0.0
        %2034 = vmatpush1.xpose.msra.mxu0 0.0
        %2035 = vmatprep.subr.mxu0 0.0
        %2036 = vmatpush1.xpose.msra.mxu0 0.0
        %2037 = vmatprep.subr.mxu0 0.0
        %2038 = vmatpush1.xpose.msra.mxu0 0.0
        %2039 = vmatprep.subr.mxu0 0.0
        %2040 = vmatpush1.xpose.msra.mxu0 0.0
        %2041 = vmatprep.subr.mxu0 0.0
        %2042 = vmatpush1.xpose.msra.mxu0 0.0
        %2043 = vmatprep.subr.mxu0 0.0
        %2044 = vmatpush1.xpose.msra.mxu0 0.0
        %2045 = vmatprep.subr.mxu0 0.0
        %2046 = vmatpush1.xpose.msra.mxu0 0.0
        %2047 = vmatprep.subr.mxu0 0.0
        %2048 = vmatpush1.xpose.msra.mxu0 0.0
        %2049 = vmatprep.subr.mxu0 0.0
        %2050 = vmatpush1.xpose.msra.mxu0 0.0
        %2051 = vmatprep.subr.mxu0 0.0
        %2052 = vmatpush1.xpose.msra.mxu0 0.0
        %2053 = vmatprep.mubr.f32.mxu0 0.0
        %2054 = vmatmul.mubr.f32.gmra.mrb[0].mxu0 %v1985
        %v2055 = vpop.f32.mrb[0].mxu0
        %v2056 = vadd.f32 %v1651, %v2055
        %v2057 = vpop.f32.mrb[0].mxu0
        %2058 = vdwg.mxu0
        %v2059 = vsel %vm976, %v2056, -inf
        %2060 = vmax.xlane.f32.xlu0 %v2059
        %v2061 = vpop.xlane.xlu0 %2060
        %v2062 = vsub.f32 %v2056, %v2061
        %v2063 = vmul.f32 %v2062, 1.442695
        %v2064 = vpow.pop %v2063
        %v2065 = vsel %vm976, %v2064, 0.0
        %2066 = vadd.xlane.f32.xlu0 %v2065
        %v2067 = vpop.xlane.xlu0 %2066
        %v2068 = vrcp.pop %v2067
        %v2069 = vmul.f32 %v2064, %v2068
        %2070 = vrot.lane.b32.xlu0 %v969, 48
        %v2071 = vpop.permute.xlu0 %2070
        %v2074 = vsel %vm976, %v2069, 0
        %2076 = vmatprep.subr.mxu0 0.0
        %2077 = vmatpush1.msra.mxu0 %v2071
        %2078 = vmatprep.subr.mxu0 0.0
        %2079 = vmatpush1.msra.mxu0 0.0
        %2080 = vmatprep.subr.mxu0 0.0
        %2081 = vmatpush1.msra.mxu0 0.0
        %2082 = vmatprep.subr.mxu0 0.0
        %2083 = vmatpush1.msra.mxu0 0.0
        %2084 = vmatprep.subr.mxu0 0.0
        %2085 = vmatpush1.msra.mxu0 0.0
        %2086 = vmatprep.subr.mxu0 0.0
        %2087 = vmatpush1.msra.mxu0 0.0
        %2088 = vmatprep.subr.mxu0 0.0
        %2089 = vmatpush1.msra.mxu0 0.0
        %2090 = vmatprep.subr.mxu0 0.0
        %2091 = vmatpush1.msra.mxu0 0.0
        %2092 = vmatprep.subr.mxu0 0.0
        %2093 = vmatpush1.msra.mxu0 0.0
        %2094 = vmatprep.subr.mxu0 0.0
        %2095 = vmatpush1.msra.mxu0 0.0
        %2096 = vmatprep.subr.mxu0 0.0
        %2097 = vmatpush1.msra.mxu0 0.0
        %2098 = vmatprep.subr.mxu0 0.0
        %2099 = vmatpush1.msra.mxu0 0.0
        %2100 = vmatprep.subr.mxu0 0.0
        %2101 = vmatpush1.msra.mxu0 0.0
        %2102 = vmatprep.subr.mxu0 0.0
        %2103 = vmatpush1.msra.mxu0 0.0
        %2104 = vmatprep.subr.mxu0 0.0
        %2105 = vmatpush1.msra.mxu0 0.0
        %2106 = vmatprep.subr.mxu0 0.0
        %2107 = vmatpush1.msra.mxu0 0.0
        %2108 = vmatprep.subr.mxu0 0.0
        %2109 = vmatpush1.msra.mxu0 0.0
        %2110 = vmatprep.subr.mxu0 0.0
        %2111 = vmatpush1.msra.mxu0 0.0
        %2112 = vmatprep.subr.mxu0 0.0
        %2113 = vmatpush1.msra.mxu0 0.0
        %2114 = vmatprep.subr.mxu0 0.0
        %2115 = vmatpush1.msra.mxu0 0.0
        %2116 = vmatprep.subr.mxu0 0.0
        %2117 = vmatpush1.msra.mxu0 0.0
        %2118 = vmatprep.subr.mxu0 0.0
        %2119 = vmatpush1.msra.mxu0 0.0
        %2120 = vmatprep.subr.mxu0 0.0
        %2121 = vmatpush1.msra.mxu0 0.0
        %2122 = vmatprep.subr.mxu0 0.0
        %2123 = vmatpush1.msra.mxu0 0.0
        %2124 = vmatprep.subr.mxu0 0.0
        %2125 = vmatpush1.msra.mxu0 0.0
        %2126 = vmatprep.subr.mxu0 0.0
        %2127 = vmatpush1.msra.mxu0 0.0
        %2128 = vmatprep.subr.mxu0 0.0
        %2129 = vmatpush1.msra.mxu0 0.0
        %2130 = vmatprep.subr.mxu0 0.0
        %2131 = vmatpush1.msra.mxu0 0.0
        %2132 = vmatprep.subr.mxu0 0.0
        %2133 = vmatpush1.msra.mxu0 0.0
        %2134 = vmatprep.subr.mxu0 0.0
        %2135 = vmatpush1.msra.mxu0 0.0
        %2136 = vmatprep.subr.mxu0 0.0
        %2137 = vmatpush1.msra.mxu0 0.0
        %2138 = vmatprep.subr.mxu0 0.0
        %2139 = vmatpush1.msra.mxu0 0.0
        %2140 = vmatprep.mubr.f32.mxu0 0.0
        %2141 = vmatmul.mubr.f32.gmra.mrb[0].mxu0 %v2074
        %v2142 = vpop.f32.mrb[0].mxu0
        %v2143 = vadd.f32 0.0, %v2142
        %v2144 = vpop.f32.mrb[0].mxu0
        %2145 = vdwg.mxu0
        %2146 = vrot.lane.b32.xlu0 %v969, 104
        %v2147 = vpop.permute.xlu0 %2146
        %2148 = vrot.lane.b32.xlu0 %v969, 72
        %v2149 = vpop.permute.xlu0 %2148
        %v2150 = vsel %vm976, %v2147, 0
        %v2152 = vsel %vm976, %v2149, 0
        %2154 = vmatprep.subr.mxu0 0.0
        %2155 = vmatpush1.xpose.msra.mxu0 %v2152
        %2156 = vmatprep.subr.mxu0 0.0
        %2157 = vmatpush1.xpose.msra.mxu0 0.0
        %2158 = vmatprep.subr.mxu0 0.0
        %2159 = vmatpush1.xpose.msra.mxu0 0.0
        %2160 = vmatprep.subr.mxu0 0.0
        %2161 = vmatpush1.xpose.msra.mxu0 0.0
        %2162 = vmatprep.subr.mxu0 0.0
        %2163 = vmatpush1.xpose.msra.mxu0 0.0
        %2164 = vmatprep.subr.mxu0 0.0
        %2165 = vmatpush1.xpose.msra.mxu0 0.0
        %2166 = vmatprep.subr.mxu0 0.0
        %2167 = vmatpush1.xpose.msra.mxu0 0.0
        %2168 = vmatprep.subr.mxu0 0.0
        %2169 = vmatpush1.xpose.msra.mxu0 0.0
        %2170 = vmatprep.subr.mxu0 0.0
        %2171 = vmatpush1.xpose.msra.mxu0 0.0
        %2172 = vmatprep.subr.mxu0 0.0
        %2173 = vmatpush1.xpose.msra.mxu0 0.0
        %2174 = vmatprep.subr.mxu0 0.0
        %2175 = vmatpush1.xpose.msra.mxu0 0.0
        %2176 = vmatprep.subr.mxu0 0.0
        %2177 = vmatpush1.xpose.msra.mxu0 0.0
        %2178 = vmatprep.subr.mxu0 0.0
        %2179 = vmatpush1.xpose.msra.mxu0 0.0
        %2180 = vmatprep.subr.mxu0 0.0
        %2181 = vmatpush1.xpose.msra.mxu0 0.0
        %2182 = vmatprep.subr.mxu0 0.0
        %2183 = vmatpush1.xpose.msra.mxu0 0.0
        %2184 = vmatprep.subr.mxu0 0.0
        %2185 = vmatpush1.xpose.msra.mxu0 0.0
        %2186 = vmatprep.subr.mxu0 0.0
        %2187 = vmatpush1.xpose.msra.mxu0 0.0
        %2188 = vmatprep.subr.mxu0 0.0
        %2189 = vmatpush1.xpose.msra.mxu0 0.0
        %2190 = vmatprep.subr.mxu0 0.0
        %2191 = vmatpush1.xpose.msra.mxu0 0.0
        %2192 = vmatprep.subr.mxu0 0.0
        %2193 = vmatpush1.xpose.msra.mxu0 0.0
        %2194 = vmatprep.subr.mxu0 0.0
        %2195 = vmatpush1.xpose.msra.mxu0 0.0
        %2196 = vmatprep.subr.mxu0 0.0
        %2197 = vmatpush1.xpose.msra.mxu0 0.0
        %2198 = vmatprep.subr.mxu0 0.0
        %2199 = vmatpush1.xpose.msra.mxu0 0.0
        %2200 = vmatprep.subr.mxu0 0.0
        %2201 = vmatpush1.xpose.msra.mxu0 0.0
        %2202 = vmatprep.subr.mxu0 0.0
        %2203 = vmatpush1.xpose.msra.mxu0 0.0
        %2204 = vmatprep.subr.mxu0 0.0
        %2205 = vmatpush1.xpose.msra.mxu0 0.0
        %2206 = vmatprep.subr.mxu0 0.0
        %2207 = vmatpush1.xpose.msra.mxu0 0.0
        %2208 = vmatprep.subr.mxu0 0.0
        %2209 = vmatpush1.xpose.msra.mxu0 0.0
        %2210 = vmatprep.subr.mxu0 0.0
        %2211 = vmatpush1.xpose.msra.mxu0 0.0
        %2212 = vmatprep.subr.mxu0 0.0
        %2213 = vmatpush1.xpose.msra.mxu0 0.0
        %2214 = vmatprep.subr.mxu0 0.0
        %2215 = vmatpush1.xpose.msra.mxu0 0.0
        %2216 = vmatprep.subr.mxu0 0.0
        %2217 = vmatpush1.xpose.msra.mxu0 0.0
        %2218 = vmatprep.mubr.f32.mxu0 0.0
        %2219 = vmatmul.mubr.f32.gmra.mrb[0].mxu0 %v2150
        %v2220 = vpop.f32.mrb[0].mxu0
        %v2221 = vadd.f32 %v1651, %v2220
        %v2222 = vpop.f32.mrb[0].mxu0
        %2223 = vdwg.mxu0
        %v2224 = vsel %vm976, %v2221, -inf
        %2225 = vmax.xlane.f32.xlu0 %v2224
        %v2226 = vpop.xlane.xlu0 %2225
        %v2227 = vsub.f32 %v2221, %v2226
        %v2228 = vmul.f32 %v2227, 1.442695
        %v2229 = vpow.pop %v2228
        %v2230 = vsel %vm976, %v2229, 0.0
        %2231 = vadd.xlane.f32.xlu0 %v2230
        %v2232 = vpop.xlane.xlu0 %2231
        %v2233 = vrcp.pop %v2232
        %v2234 = vmul.f32 %v2229, %v2233
        %2235 = vrot.lane.b32.xlu0 %v969, 40
        %v2236 = vpop.permute.xlu0 %2235
        %v2239 = vsel %vm976, %v2234, 0
        %2241 = vmatprep.subr.mxu0 0.0
        %2242 = vmatpush1.msra.mxu0 %v2236
        %2243 = vmatprep.subr.mxu0 0.0
        %2244 = vmatpush1.msra.mxu0 0.0
        %2245 = vmatprep.subr.mxu0 0.0
        %2246 = vmatpush1.msra.mxu0 0.0
        %2247 = vmatprep.subr.mxu0 0.0
        %2248 = vmatpush1.msra.mxu0 0.0
        %2249 = vmatprep.subr.mxu0 0.0
        %2250 = vmatpush1.msra.mxu0 0.0
        %2251 = vmatprep.subr.mxu0 0.0
        %2252 = vmatpush1.msra.mxu0 0.0
        %2253 = vmatprep.subr.mxu0 0.0
        %2254 = vmatpush1.msra.mxu0 0.0
        %2255 = vmatprep.subr.mxu0 0.0
        %2256 = vmatpush1.msra.mxu0 0.0
        %2257 = vmatprep.subr.mxu0 0.0
        %2258 = vmatpush1.msra.mxu0 0.0
        %2259 = vmatprep.subr.mxu0 0.0
        %2260 = vmatpush1.msra.mxu0 0.0
        %2261 = vmatprep.subr.mxu0 0.0
        %2262 = vmatpush1.msra.mxu0 0.0
        %2263 = vmatprep.subr.mxu0 0.0
        %2264 = vmatpush1.msra.mxu0 0.0
        %2265 = vmatprep.subr.mxu0 0.0
        %2266 = vmatpush1.msra.mxu0 0.0
        %2267 = vmatprep.subr.mxu0 0.0
        %2268 = vmatpush1.msra.mxu0 0.0
        %2269 = vmatprep.subr.mxu0 0.0
        %2270 = vmatpush1.msra.mxu0 0.0
        %2271 = vmatprep.subr.mxu0 0.0
        %2272 = vmatpush1.msra.mxu0 0.0
        %2273 = vmatprep.subr.mxu0 0.0
        %2274 = vmatpush1.msra.mxu0 0.0
        %2275 = vmatprep.subr.mxu0 0.0
        %2276 = vmatpush1.msra.mxu0 0.0
        %2277 = vmatprep.subr.mxu0 0.0
        %2278 = vmatpush1.msra.mxu0 0.0
        %2279 = vmatprep.subr.mxu0 0.0
        %2280 = vmatpush1.msra.mxu0 0.0
        %2281 = vmatprep.subr.mxu0 0.0
        %2282 = vmatpush1.msra.mxu0 0.0
        %2283 = vmatprep.subr.mxu0 0.0
        %2284 = vmatpush1.msra.mxu0 0.0
        %2285 = vmatprep.subr.mxu0 0.0
        %2286 = vmatpush1.msra.mxu0 0.0
        %2287 = vmatprep.subr.mxu0 0.0
        %2288 = vmatpush1.msra.mxu0 0.0
        %2289 = vmatprep.subr.mxu0 0.0
        %2290 = vmatpush1.msra.mxu0 0.0
        %2291 = vmatprep.subr.mxu0 0.0
        %2292 = vmatpush1.msra.mxu0 0.0
        %2293 = vmatprep.subr.mxu0 0.0
        %2294 = vmatpush1.msra.mxu0 0.0
        %2295 = vmatprep.subr.mxu0 0.0
        %2296 = vmatpush1.msra.mxu0 0.0
        %2297 = vmatprep.subr.mxu0 0.0
        %2298 = vmatpush1.msra.mxu0 0.0
        %2299 = vmatprep.subr.mxu0 0.0
        %2300 = vmatpush1.msra.mxu0 0.0
        %2301 = vmatprep.subr.mxu0 0.0
        %2302 = vmatpush1.msra.mxu0 0.0
        %2303 = vmatprep.subr.mxu0 0.0
        %2304 = vmatpush1.msra.mxu0 0.0
        %2305 = vmatprep.mubr.f32.mxu0 0.0
        %2306 = vmatmul.mubr.f32.gmra.mrb[0].mxu0 %v2239
        %v2307 = vpop.f32.mrb[0].mxu0
        %v2308 = vadd.f32 0.0, %v2307
        %v2309 = vpop.f32.mrb[0].mxu0
        %2310 = vdwg.mxu0
        %2312 = vrot.lane.b32.xlu0 %v1978, 8
        %v2313 = vpop.permute.xlu0 %2312
        %2316 = vrot.lane.b32.xlu0 %v2143, 16
        %v2317 = vpop.permute.xlu0 %2316
        %2320 = vrot.lane.b32.xlu0 %v2308, 24
        %v2321 = vpop.permute.xlu0 %2320
        %v2323 = vsel %vm976, %v1813, %v2313
        %v2324 = vsel %vm1646, %v2323, %v2317
        %v2325 = vsel %vm1648, %v2324, %v2321
        %v2326 = vld [vmem:[%s791] sm:$0xff]
        %v2327 = vld [vmem:[%s791 + $0x8] sm:$0xff]
        %v2328 = vld [vmem:[%s791 + $0x10] sm:$0xff]
        %v2329 = vld [vmem:[%s791 + $0x18] sm:$0xff]
        %v2330 = vld [vmem:[%s794] sm:$0x1]
        %v2332 = vlaneseq
        %v2333 = vshrl.u32 %v2332, 7
        %v2334 = vsub.s32 0, %v2333
        %v2335 = vrot.slane %v2330, %v2334
        %v2338 = vsel %vm890, %v1649, 0
        %v2341 = vsel %vm890, %v2325, 0
        %2343 = vmatprep.subr.mxu0 0.0
        %2344 = vmatpush1.msra.mxu0 %v2326
        %2345 = vmatprep.subr.mxu0 0.0
        %2346 = vmatpush1.msra.mxu0 %v2327
        %2347 = vmatprep.subr.mxu0 0.0
        %2348 = vmatpush1.msra.mxu0 %v2328
        %2349 = vmatprep.subr.mxu0 0.0
        %2350 = vmatpush1.msra.mxu0 %v2329
        %2351 = vmatprep.subr.mxu0 0.0
        %2352 = vmatpush1.msra.mxu0 0.0
        %2353 = vmatprep.subr.mxu0 0.0
        %2354 = vmatpush1.msra.mxu0 0.0
        %2355 = vmatprep.subr.mxu0 0.0
        %2356 = vmatpush1.msra.mxu0 0.0
        %2357 = vmatprep.subr.mxu0 0.0
        %2358 = vmatpush1.msra.mxu0 0.0
        %2359 = vmatprep.subr.mxu0 0.0
        %2360 = vmatpush1.msra.mxu0 0.0
        %2361 = vmatprep.subr.mxu0 0.0
        %2362 = vmatpush1.msra.mxu0 0.0
        %2363 = vmatprep.subr.mxu0 0.0
        %2364 = vmatpush1.msra.mxu0 0.0
        %2365 = vmatprep.subr.mxu0 0.0
        %2366 = vmatpush1.msra.mxu0 0.0
        %2367 = vmatprep.subr.mxu0 0.0
        %2368 = vmatpush1.msra.mxu0 0.0
        %2369 = vmatprep.subr.mxu0 0.0
        %2370 = vmatpush1.msra.mxu0 0.0
        %2371 = vmatprep.subr.mxu0 0.0
        %2372 = vmatpush1.msra.mxu0 0.0
        %2373 = vmatprep.subr.mxu0 0.0
        %2374 = vmatpush1.msra.mxu0 0.0
        %2375 = vmatprep.subr.mxu0 0.0
        %2376 = vmatpush1.msra.mxu0 0.0
        %2377 = vmatprep.subr.mxu0 0.0
        %2378 = vmatpush1.msra.mxu0 0.0
        %2379 = vmatprep.subr.mxu0 0.0
        %2380 = vmatpush1.msra.mxu0 0.0
        %2381 = vmatprep.subr.mxu0 0.0
        %2382 = vmatpush1.msra.mxu0 0.0
        %2383 = vmatprep.subr.mxu0 0.0
        %2384 = vmatpush1.msra.mxu0 0.0
        %2385 = vmatprep.subr.mxu0 0.0
        %2386 = vmatpush1.msra.mxu0 0.0
        %2387 = vmatprep.subr.mxu0 0.0
        %2388 = vmatpush1.msra.mxu0 0.0
        %2389 = vmatprep.subr.mxu0 0.0
        %2390 = vmatpush1.msra.mxu0 0.0
        %2391 = vmatprep.subr.mxu0 0.0
        %2392 = vmatpush1.msra.mxu0 0.0
        %2393 = vmatprep.subr.mxu0 0.0
        %2394 = vmatpush1.msra.mxu0 0.0
        %2395 = vmatprep.subr.mxu0 0.0
        %2396 = vmatpush1.msra.mxu0 0.0
        %2397 = vmatprep.subr.mxu0 0.0
        %2398 = vmatpush1.msra.mxu0 0.0
        %2399 = vmatprep.subr.mxu0 0.0
        %2400 = vmatpush1.msra.mxu0 0.0
        %2401 = vmatprep.subr.mxu0 0.0
        %2402 = vmatpush1.msra.mxu0 0.0
        %2403 = vmatprep.subr.mxu0 0.0
        %2404 = vmatpush1.msra.mxu0 0.0
        %2405 = vmatprep.subr.mxu0 0.0
        %2406 = vmatpush1.msra.mxu0 0.0
        %2407 = vmatprep.mubr.f32.mxu0 0.0
        %2408 = vmatmul.mubr.f32.gmra.mrb[0].mxu0 %v2338
        %v2409 = vpop.f32.mrb[0].mxu0
        %v2410 = vadd.f32 %v2335, %v2409
        %v2411 = vpop.f32.mrb[0].mxu0
        %2412 = vmatprep.mubr.f32.mxu0 0.0
        %2413 = vmatmul.mubr.f32.gmra.mrb[0].mxu0 %v2341
        %v2414 = vpop.f32.mrb[0].mxu0
        %v2415 = vadd.f32 %v2335, %v2414
        %v2416 = vpop.f32.mrb[0].mxu0
        %2417 = vdwg.mxu0
        %v2418 = vadd.f32 %v2410, %v877
        %v2419 = vadd.f32 %v2415, %v878
        %v2420 = vld [vmem:[%s797] sm:$0x1]
        %v2421 = vld [vmem:[%s800] sm:$0x1]
        %v2422 = vsel %vm890, %v2418, 0.0
        %2423 = vadd.xlane.f32.xlu0 %v2422
        %v2424 = vpop.xlane.xlu0 %2423
        %v2425 = vsel %vm890, %v2419, 0.0
        %2426 = vadd.xlane.f32.xlu0 %v2425
        %v2427 = vpop.xlane.xlu0 %2426
        %v2428 = vrcp.pop 32.0
        %v2429 = vmul.f32 %v2424, %v2428
        %v2430 = vmul.f32 %v2427, %v2428
        %v2431 = vsub.f32 %v2418, %v2429
        %v2432 = vsub.f32 %v2419, %v2430
        %v2433 = vmul.f32 %v2431, %v2431
        %v2434 = vmul.f32 %v2432, %v2432
        %v2435 = vsel %vm890, %v2433, 0.0
        %2436 = vadd.xlane.f32.xlu0 %v2435
        %v2437 = vpop.xlane.xlu0 %2436
        %v2438 = vsel %vm890, %v2434, 0.0
        %2439 = vadd.xlane.f32.xlu0 %v2438
        %v2440 = vpop.xlane.xlu0 %2439
        %v2441 = vmul.f32 %v2437, %v2428
        %v2442 = vmul.f32 %v2440, %v2428
        %v2443 = vadd.f32 %v2441, 1e-12
        %v2444 = vadd.f32 %v2442, 1e-12
        %v2445 = vrsqrt.pop %v2443
        %v2446 = vrsqrt.pop %v2444
        %v2447 = vmul.f32 %v2431, %v2445
        %v2448 = vmul.f32 %v2432, %v2446
        %v2450 = vlaneseq
        %v2451 = vshrl.u32 %v2450, 7
        %v2452 = vsub.s32 0, %v2451
        %v2453 = vrot.slane %v2420, %v2452
        %v2455 = vmul.f32 %v2447, %v2453
        %v2456 = vmul.f32 %v2448, %v2453
        %v2458 = vlaneseq
        %v2459 = vshrl.u32 %v2458, 7
        %v2460 = vsub.s32 0, %v2459
        %v2461 = vrot.slane %v2421, %v2460
        %v2463 = vadd.f32 %v2455, %v2461
        %v2464 = vadd.f32 %v2456, %v2461
        %v2465 = vld [vmem:[%s805] sm:$0xff]
        %v2466 = vld [vmem:[%s805 + $0x8] sm:$0xff]
        %v2467 = vld [vmem:[%s805 + $0x10] sm:$0xff]
        %v2468 = vld [vmem:[%s805 + $0x18] sm:$0xff]
        %v2469 = vld [vmem:[%s808] sm:$0x1]
        %v2471 = vlaneseq
        %v2472 = vshrl.u32 %v2471, 7
        %v2473 = vsub.s32 0, %v2472
        %v2474 = vrot.slane %v2469, %v2473
        %v2477 = vsel %vm890, %v2463, 0
        %v2480 = vsel %vm890, %v2464, 0
        %2482 = vmatprep.subr.mxu0 0.0
        %2483 = vmatpush1.msra.mxu0 %v2465
        %2484 = vmatprep.subr.mxu0 0.0
        %2485 = vmatpush1.msra.mxu0 %v2466
        %2486 = vmatprep.subr.mxu0 0.0
        %2487 = vmatpush1.msra.mxu0 %v2467
        %2488 = vmatprep.subr.mxu0 0.0
        %2489 = vmatpush1.msra.mxu0 %v2468
        %2490 = vmatprep.subr.mxu0 0.0
        %2491 = vmatpush1.msra.mxu0 0.0
        %2492 = vmatprep.subr.mxu0 0.0
        %2493 = vmatpush1.msra.mxu0 0.0
        %2494 = vmatprep.subr.mxu0 0.0
        %2495 = vmatpush1.msra.mxu0 0.0
        %2496 = vmatprep.subr.mxu0 0.0
        %2497 = vmatpush1.msra.mxu0 0.0
        %2498 = vmatprep.subr.mxu0 0.0
        %2499 = vmatpush1.msra.mxu0 0.0
        %2500 = vmatprep.subr.mxu0 0.0
        %2501 = vmatpush1.msra.mxu0 0.0
        %2502 = vmatprep.subr.mxu0 0.0
        %2503 = vmatpush1.msra.mxu0 0.0
        %2504 = vmatprep.subr.mxu0 0.0
        %2505 = vmatpush1.msra.mxu0 0.0
        %2506 = vmatprep.subr.mxu0 0.0
        %2507 = vmatpush1.msra.mxu0 0.0
        %2508 = vmatprep.subr.mxu0 0.0
        %2509 = vmatpush1.msra.mxu0 0.0
        %2510 = vmatprep.subr.mxu0 0.0
        %2511 = vmatpush1.msra.mxu0 0.0
        %2512 = vmatprep.subr.mxu0 0.0
        %2513 = vmatpush1.msra.mxu0 0.0
        %2514 = vmatprep.subr.mxu0 0.0
        %2515 = vmatpush1.msra.mxu0 0.0
        %2516 = vmatprep.subr.mxu0 0.0
        %2517 = vmatpush1.msra.mxu0 0.0
        %2518 = vmatprep.subr.mxu0 0.0
        %2519 = vmatpush1.msra.mxu0 0.0
        %2520 = vmatprep.subr.mxu0 0.0
        %2521 = vmatpush1.msra.mxu0 0.0
        %2522 = vmatprep.subr.mxu0 0.0
        %2523 = vmatpush1.msra.mxu0 0.0
        %2524 = vmatprep.subr.mxu0 0.0
        %2525 = vmatpush1.msra.mxu0 0.0
        %2526 = vmatprep.subr.mxu0 0.0
        %2527 = vmatpush1.msra.mxu0 0.0
        %2528 = vmatprep.subr.mxu0 0.0
        %2529 = vmatpush1.msra.mxu0 0.0
        %2530 = vmatprep.subr.mxu0 0.0
        %2531 = vmatpush1.msra.mxu0 0.0
        %2532 = vmatprep.subr.mxu0 0.0
        %2533 = vmatpush1.msra.mxu0 0.0
        %2534 = vmatprep.subr.mxu0 0.0
        %2535 = vmatpush1.msra.mxu0 0.0
        %2536 = vmatprep.subr.mxu0 0.0
        %2537 = vmatpush1.msra.mxu0 0.0
        %2538 = vmatprep.subr.mxu0 0.0
        %2539 = vmatpush1.msra.mxu0 0.0
        %2540 = vmatprep.subr.mxu0 0.0
        %2541 = vmatpush1.msra.mxu0 0.0
        %2542 = vmatprep.subr.mxu0 0.0
        %2543 = vmatpush1.msra.mxu0 0.0
        %2544 = vmatprep.subr.mxu0 0.0
        %2545 = vmatpush1.msra.mxu0 0.0
        %2546 = vmatprep.mubr.f32.mxu0 0.0
        %2547 = vmatmul.mubr.f32.gmra.mrb[0].mxu0 %v2477
        %v2548 = vpop.f32.mrb[0].mxu0
        %v2549 = vadd.f32 %v2474, %v2548
        %v2550 = vpop.f32.mrb[0].mxu0
        %2551 = vmatprep.mubr.f32.mxu0 0.0
        %2552 = vmatmul.mubr.f32.gmra.mrb[0].mxu0 %v2480
        %v2553 = vpop.f32.mrb[0].mxu0
        %v2554 = vadd.f32 %v2474, %v2553
        %v2555 = vpop.f32.mrb[0].mxu0
        %2556 = vdwg.mxu0
        %v2557 = vmul.f32 %v2549, 0.5
        %v2558 = vmul.f32 %v2554, 0.5
        %v2559 = vmul.f32 %v2549, 0.044715
        %v2560 = vmul.f32 %v2554, 0.044715
        %v2561 = vmul.f32 %v2559, %v2549
        %v2562 = vmul.f32 %v2560, %v2554
        %v2563 = vmul.f32 %v2561, %v2549
        %v2564 = vmul.f32 %v2562, %v2554
        %v2565 = vadd.f32 %v2549, %v2563
        %v2566 = vadd.f32 %v2554, %v2564
        %v2567 = vmul.f32 %v2565, 0.7978846
        %v2568 = vmul.f32 %v2566, 0.7978846
        %v2569 = vtanh.pop %v2567
        %v2570 = vtanh.pop %v2568
        %v2571 = vadd.f32 %v2569, 1.0
        %v2572 = vadd.f32 %v2570, 1.0
        %v2573 = vmul.f32 %v2557, %v2571
        %v2574 = vmul.f32 %v2558, %v2572
        %v2575 = vld [vmem:[%s813] sm:$0xff]
        %v2576 = vld [vmem:[%s813 + $0x8] sm:$0xff]
        %v2577 = vld [vmem:[%s813 + $0x10] sm:$0xff]
        %v2578 = vld [vmem:[%s813 + $0x18] sm:$0xff]
        %v2579 = vld [vmem:[%s813 + $0x20] sm:$0xff]
        %v2580 = vld [vmem:[%s813 + $0x28] sm:$0xff]
        %v2581 = vld [vmem:[%s813 + $0x30] sm:$0xff]
        %v2582 = vld [vmem:[%s813 + $0x38] sm:$0xff]
        %v2583 = vld [vmem:[%s816] sm:$0x1]
        %v2585 = vlaneseq
        %v2586 = vshrl.u32 %v2585, 7
        %v2587 = vsub.s32 0, %v2586
        %v2588 = vrot.slane %v2583, %v2587
        %vm2590 = vcmask 523264
        %v2592 = vsel %vm2590, %v2573, 0
        %v2595 = vsel %vm2590, %v2574, 0
        %2597 = vmatprep.subr.mxu0 0.0
        %2598 = vmatpush1.msra.mxu0 %v2575
        %2599 = vmatprep.subr.mxu0 0.0
        %2600 = vmatpush1.msra.mxu0 %v2576
        %2601 = vmatprep.subr.mxu0 0.0
        %2602 = vmatpush1.msra.mxu0 %v2577
        %2603 = vmatprep.subr.mxu0 0.0
        %2604 = vmatpush1.msra.mxu0 %v2578
        %2605 = vmatprep.subr.mxu0 0.0
        %2606 = vmatpush1.msra.mxu0 %v2579
        %2607 = vmatprep.subr.mxu0 0.0
        %2608 = vmatpush1.msra.mxu0 %v2580
        %2609 = vmatprep.subr.mxu0 0.0
        %2610 = vmatpush1.msra.mxu0 %v2581
        %2611 = vmatprep.subr.mxu0 0.0
        %2612 = vmatpush1.msra.mxu0 %v2582
        %2613 = vmatprep.subr.mxu0 0.0
        %2614 = vmatpush1.msra.mxu0 0.0
        %2615 = vmatprep.subr.mxu0 0.0
        %2616 = vmatpush1.msra.mxu0 0.0
        %2617 = vmatprep.subr.mxu0 0.0
        %2618 = vmatpush1.msra.mxu0 0.0
        %2619 = vmatprep.subr.mxu0 0.0
        %2620 = vmatpush1.msra.mxu0 0.0
        %2621 = vmatprep.subr.mxu0 0.0
        %2622 = vmatpush1.msra.mxu0 0.0
        %2623 = vmatprep.subr.mxu0 0.0
        %2624 = vmatpush1.msra.mxu0 0.0
        %2625 = vmatprep.subr.mxu0 0.0
        %2626 = vmatpush1.msra.mxu0 0.0
        %2627 = vmatprep.subr.mxu0 0.0
        %2628 = vmatpush1.msra.mxu0 0.0
        %2629 = vmatprep.subr.mxu0 0.0
        %2630 = vmatpush1.msra.mxu0 0.0
        %2631 = vmatprep.subr.mxu0 0.0
        %2632 = vmatpush1.msra.mxu0 0.0
        %2633 = vmatprep.subr.mxu0 0.0
        %2634 = vmatpush1.msra.mxu0 0.0
        %2635 = vmatprep.subr.mxu0 0.0
        %2636 = vmatpush1.msra.mxu0 0.0
        %2637 = vmatprep.subr.mxu0 0.0
        %2638 = vmatpush1.msra.mxu0 0.0
        %2639 = vmatprep.subr.mxu0 0.0
        %2640 = vmatpush1.msra.mxu0 0.0
        %2641 = vmatprep.subr.mxu0 0.0
        %2642 = vmatpush1.msra.mxu0 0.0
        %2643 = vmatprep.subr.mxu0 0.0
        %2644 = vmatpush1.msra.mxu0 0.0
        %2645 = vmatprep.subr.mxu0 0.0
        %2646 = vmatpush1.msra.mxu0 0.0
        %2647 = vmatprep.subr.mxu0 0.0
        %2648 = vmatpush1.msra.mxu0 0.0
        %2649 = vmatprep.subr.mxu0 0.0
        %2650 = vmatpush1.msra.mxu0 0.0
        %2651 = vmatprep.subr.mxu0 0.0
        %2652 = vmatpush1.msra.mxu0 0.0
        %2653 = vmatprep.subr.mxu0 0.0
        %2654 = vmatpush1.msra.mxu0 0.0
        %2655 = vmatprep.subr.mxu0 0.0
        %2656 = vmatpush1.msra.mxu0 0.0
        %2657 = vmatprep.subr.mxu0 0.0
        %2658 = vmatpush1.msra.mxu0 0.0
        %2659 = vmatprep.subr.mxu0 0.0
        %2660 = vmatpush1.msra.mxu0 0.0
        %2661 = vmatprep.mubr.f32.mxu0 0.0
        %2662 = vmatmul.mubr.f32.gmra.mrb[0].mxu0 %v2592
        %v2663 = vpop.f32.mrb[0].mxu0
        %v2664 = vadd.f32 %v2588, %v2663
        %v2665 = vpop.f32.mrb[0].mxu0
        %2666 = vmatprep.mubr.f32.mxu0 0.0
        %2667 = vmatmul.mubr.f32.gmra.mrb[0].mxu0 %v2595
        %v2668 = vpop.f32.mrb[0].mxu0
        %v2669 = vadd.f32 %v2588, %v2668
        %v2670 = vpop.f32.mrb[0].mxu0
        %2671 = vdwg.mxu0
        %v2672 = vadd.f32 %v2664, %v2463
        %v2673 = vadd.f32 %v2669, %v2464
        %v2674 = vld [vmem:[%s819] sm:$0x1]
        %v2675 = vld [vmem:[%s822] sm:$0x1]
        %v2676 = vsel %vm890, %v2672, 0.0
        %2677 = vadd.xlane.f32.xlu0 %v2676
        %v2678 = vpop.xlane.xlu0 %2677
        %v2679 = vsel %vm890, %v2673, 0.0
        %2680 = vadd.xlane.f32.xlu0 %v2679
        %v2681 = vpop.xlane.xlu0 %2680
        %v2682 = vmul.f32 %v2678, %v2428
        %v2683 = vmul.f32 %v2681, %v2428
        %v2684 = vsub.f32 %v2672, %v2682
        %v2685 = vsub.f32 %v2673, %v2683
        %v2686 = vmul.f32 %v2684, %v2684
        %v2687 = vmul.f32 %v2685, %v2685
        %v2688 = vsel %vm890, %v2686, 0.0
        %2689 = vadd.xlane.f32.xlu0 %v2688
        %v2690 = vpop.xlane.xlu0 %2689
        %v2691 = vsel %vm890, %v2687, 0.0
        %2692 = vadd.xlane.f32.xlu0 %v2691
        %v2693 = vpop.xlane.xlu0 %2692
        %v2694 = vmul.f32 %v2690, %v2428
        %v2695 = vmul.f32 %v2693, %v2428
        %v2696 = vadd.f32 %v2694, 1e-12
        %v2697 = vadd.f32 %v2695, 1e-12
        %v2698 = vrsqrt.pop %v2696
        %v2699 = vrsqrt.pop %v2697
        %v2700 = vmul.f32 %v2684, %v2698
        %v2701 = vmul.f32 %v2685, %v2699
        %v2703 = vlaneseq
        %v2704 = vshrl.u32 %v2703, 7
        %v2705 = vsub.s32 0, %v2704
        %v2706 = vrot.slane %v2674, %v2705
        %v2708 = vmul.f32 %v2700, %v2706
        %v2709 = vmul.f32 %v2701, %v2706
        %v2711 = vlaneseq
        %v2712 = vshrl.u32 %v2711, 7
        %v2713 = vsub.s32 0, %v2712
        %v2714 = vrot.slane %v2675, %v2713
        %v2716 = vadd.f32 %v2708, %v2714
        %v2717 = vadd.f32 %v2709, %v2714
        %2718 = vst.msk [vmem:[#allocation2] sm:$0xff] %vm890, %v2716
        %2719 = vst.msk [vmem:[#allocation2 + $0x8] sm:$0xff] %vm890, %v2717
        %p2720 = scmp.eq.s32.totalorder %s36, 1
        // Predicated region
        $region113: #{_lambda_.1} parent=99 // pred_check
          %p2721 = pneg %p2720
        $region114: #{_lambda_.1} parent=99 // pred_check_branch
          %2723 = sbr.rel (%p2721) target = $region116
        $region115: #{_lambda_.1} parent=99 // pred_region
          %v2725 = vrot.slane %v2717, 7
          %vm2727 = vcmask 1040384
          %v2728 = vsel %vm2727, %v2716, %v2725
          %v2729 = vld [vmem:[#allocation6] sm:$0xff]
          %v2730 = vld [vmem:[#allocation6 + $0x8] sm:$0xff]
          %v2731 = vld [vmem:[#allocation6 + $0x10] sm:$0xff]
          %v2732 = vld [vmem:[#allocation6 + $0x18] sm:$0xff]
          %v2733 = vld [vmem:[%s17] sm:$0x1]
          %v2735 = vlaneseq
          %v2736 = vshrl.u32 %v2735, 7
          %v2737 = vsub.s32 0, %v2736
          %v2738 = vrot.slane %v2733, %v2737
          %v2741 = vsel %vm890, %v2728, 0
          %2743 = vmatprep.subr.mxu0 0.0
          %2744 = vmatpush1.msra.mxu0 %v2729
          %2745 = vmatprep.subr.mxu0 0.0
          %2746 = vmatpush1.msra.mxu0 %v2730
          %2747 = vmatprep.subr.mxu0 0.0
          %2748 = vmatpush1.msra.mxu0 %v2731
          %2749 = vmatprep.subr.mxu0 0.0
          %2750 = vmatpush1.msra.mxu0 %v2732
          %2751 = vmatprep.subr.mxu0 0.0
          %2752 = vmatpush1.msra.mxu0 0.0
          %2753 = vmatprep.subr.mxu0 0.0
          %2754 = vmatpush1.msra.mxu0 0.0
          %2755 = vmatprep.subr.mxu0 0.0
          %2756 = vmatpush1.msra.mxu0 0.0
          %2757 = vmatprep.subr.mxu0 0.0
          %2758 = vmatpush1.msra.mxu0 0.0
          %2759 = vmatprep.subr.mxu0 0.0
          %2760 = vmatpush1.msra.mxu0 0.0
          %2761 = vmatprep.subr.mxu0 0.0
          %2762 = vmatpush1.msra.mxu0 0.0
          %2763 = vmatprep.subr.mxu0 0.0
          %2764 = vmatpush1.msra.mxu0 0.0
          %2765 = vmatprep.subr.mxu0 0.0
          %2766 = vmatpush1.msra.mxu0 0.0
          %2767 = vmatprep.subr.mxu0 0.0
          %2768 = vmatpush1.msra.mxu0 0.0
          %2769 = vmatprep.subr.mxu0 0.0
          %2770 = vmatpush1.msra.mxu0 0.0
          %2771 = vmatprep.subr.mxu0 0.0
          %2772 = vmatpush1.msra.mxu0 0.0
          %2773 = vmatprep.subr.mxu0 0.0
          %2774 = vmatpush1.msra.mxu0 0.0
          %2775 = vmatprep.subr.mxu0 0.0
          %2776 = vmatpush1.msra.mxu0 0.0
          %2777 = vmatprep.subr.mxu0 0.0
          %2778 = vmatpush1.msra.mxu0 0.0
          %2779 = vmatprep.subr.mxu0 0.0
          %2780 = vmatpush1.msra.mxu0 0.0
          %2781 = vmatprep.subr.mxu0 0.0
          %2782 = vmatpush1.msra.mxu0 0.0
          %2783 = vmatprep.subr.mxu0 0.0
          %2784 = vmatpush1.msra.mxu0 0.0
          %2785 = vmatprep.subr.mxu0 0.0
          %2786 = vmatpush1.msra.mxu0 0.0
          %2787 = vmatprep.subr.mxu0 0.0
          %2788 = vmatpush1.msra.mxu0 0.0
          %2789 = vmatprep.subr.mxu0 0.0
          %2790 = vmatpush1.msra.mxu0 0.0
          %2791 = vmatprep.subr.mxu0 0.0
          %2792 = vmatpush1.msra.mxu0 0.0
          %2793 = vmatprep.subr.mxu0 0.0
          %2794 = vmatpush1.msra.mxu0 0.0
          %2795 = vmatprep.subr.mxu0 0.0
          %2796 = vmatpush1.msra.mxu0 0.0
          %2797 = vmatprep.subr.mxu0 0.0
          %2798 = vmatpush1.msra.mxu0 0.0
          %2799 = vmatprep.subr.mxu0 0.0
          %2800 = vmatpush1.msra.mxu0 0.0
          %2801 = vmatprep.subr.mxu0 0.0
          %2802 = vmatpush1.msra.mxu0 0.0
          %2803 = vmatprep.subr.mxu0 0.0
          %2804 = vmatpush1.msra.mxu0 0.0
          %2805 = vmatprep.subr.mxu0 0.0
          %2806 = vmatpush1.msra.mxu0 0.0
          %2807 = vmatprep.mubr.f32.mxu0 0.0
          %2808 = vmatmul.mubr.f32.gmra.mrb[0].mxu0 %v2741
          %v2809 = vpop.f32.mrb[0].mxu0
          %v2810 = vadd.f32 %v2738, %v2809
          %v2811 = vpop.f32.mrb[0].mxu0
          %2812 = vdwg.mxu0
          %v2813 = vtanh.pop %v2810
          %v2814 = vld [vmem:[%s18] sm:$0xff]
          %v2815 = vld [vmem:[%s18 + $0x8] sm:$0xff]
          %v2816 = vld [vmem:[%s18 + $0x10] sm:$0xff]
          %v2817 = vld [vmem:[%s18 + $0x18] sm:$0xff]
          %v2818 = vld [vmem:[%s19] sm:$0x1]
          %v2820 = vlaneseq
          %v2821 = vshrl.u32 %v2820, 7
          %v2822 = vsub.s32 0, %v2821
          %v2823 = vrot.slane %v2818, %v2822
          %v2826 = vsel %vm890, %v2813, 0
          %2828 = vmatprep.subr.mxu0 0.0
          %2829 = vmatpush1.msra.mxu0 %v2814
          %2830 = vmatprep.subr.mxu0 0.0
          %2831 = vmatpush1.msra.mxu0 %v2815
          %2832 = vmatprep.subr.mxu0 0.0
          %2833 = vmatpush1.msra.mxu0 %v2816
          %2834 = vmatprep.subr.mxu0 0.0
          %2835 = vmatpush1.msra.mxu0 %v2817
          %2836 = vmatprep.subr.mxu0 0.0
          %2837 = vmatpush1.msra.mxu0 0.0
          %2838 = vmatprep.subr.mxu0 0.0
          %2839 = vmatpush1.msra.mxu0 0.0
          %2840 = vmatprep.subr.mxu0 0.0
          %2841 = vmatpush1.msra.mxu0 0.0
          %2842 = vmatprep.subr.mxu0 0.0
          %2843 = vmatpush1.msra.mxu0 0.0
          %2844 = vmatprep.subr.mxu0 0.0
          %2845 = vmatpush1.msra.mxu0 0.0
          %2846 = vmatprep.subr.mxu0 0.0
          %2847 = vmatpush1.msra.mxu0 0.0
          %2848 = vmatprep.subr.mxu0 0.0
          %2849 = vmatpush1.msra.mxu0 0.0
          %2850 = vmatprep.subr.mxu0 0.0
          %2851 = vmatpush1.msra.mxu0 0.0
          %2852 = vmatprep.subr.mxu0 0.0
          %2853 = vmatpush1.msra.mxu0 0.0
          %2854 = vmatprep.subr.mxu0 0.0
          %2855 = vmatpush1.msra.mxu0 0.0
          %2856 = vmatprep.subr.mxu0 0.0
          %2857 = vmatpush1.msra.mxu0 0.0
          %2858 = vmatprep.subr.mxu0 0.0
          %2859 = vmatpush1.msra.mxu0 0.0
          %2860 = vmatprep.subr.mxu0 0.0
          %2861 = vmatpush1.msra.mxu0 0.0
          %2862 = vmatprep.subr.mxu0 0.0
          %2863 = vmatpush1.msra.mxu0 0.0
          %2864 = vmatprep.subr.mxu0 0.0
          %2865 = vmatpush1.msra.mxu0 0.0
          %2866 = vmatprep.subr.mxu0 0.0
          %2867 = vmatpush1.msra.mxu0 0.0
          %2868 = vmatprep.subr.mxu0 0.0
          %2869 = vmatpush1.msra.mxu0 0.0
          %2870 = vmatprep.subr.mxu0 0.0
          %2871 = vmatpush1.msra.mxu0 0.0
          %2872 = vmatprep.subr.mxu0 0.0
          %2873 = vmatpush1.msra.mxu0 0.0
          %2874 = vmatprep.subr.mxu0 0.0
          %2875 = vmatpush1.msra.mxu0 0.0
          %2876 = vmatprep.subr.mxu0 0.0
          %2877 = vmatpush1.msra.mxu0 0.0
          %2878 = vmatprep.subr.mxu0 0.0
          %2879 = vmatpush1.msra.mxu0 0.0
          %2880 = vmatprep.subr.mxu0 0.0
          %2881 = vmatpush1.msra.mxu0 0.0
          %2882 = vmatprep.subr.mxu0 0.0
          %2883 = vmatpush1.msra.mxu0 0.0
          %2884 = vmatprep.subr.mxu0 0.0
          %2885 = vmatpush1.msra.mxu0 0.0
          %2886 = vmatprep.subr.mxu0 0.0
          %2887 = vmatpush1.msra.mxu0 0.0
          %2888 = vmatprep.subr.mxu0 0.0
          %2889 = vmatpush1.msra.mxu0 0.0
          %2890 = vmatprep.subr.mxu0 0.0
          %2891 = vmatpush1.msra.mxu0 0.0
          %2892 = vmatprep.mubr.f32.mxu0 0.0
          %2893 = vmatmul.mubr.f32.gmra.mrb[0].mxu0 %v2826
          %v2894 = vpop.f32.mrb[0].mxu0
          %v2895 = vadd.f32 %v2823, %v2894
          %v2896 = vpop.f32.mrb[0].mxu0
          %2897 = vdwg.mxu0
          %vm2898 = vcmask 17408
          %2899 = vst.msk [vmem:[#allocation8] sm:$0x3] %vm2898, %v2895
        $region116: #{_lambda_.1} parent=99 // pred_fallthru
          _
        // Predicated region
        $region117: #{_lambda_.1} parent=99 // pred_check
          %p2900 = pneg %p529
        $region118: #{_lambda_.1} parent=99 // pred_check_branch
          %2902 = sbr.rel (%p2900) target = $region120
        $region119: #{_lambda_.1} parent=99 // pred_region
          %s2904 = ssub.s32 32, 32
          %2905 = vsyncadd [#allocation5], %s2904
          %s2907 = sshll.u32 [#allocation8], 4
          %s2908 = int_to_ptr.vmem [resolvable:$true] %s2907
          %2910 = dma.vmem_to_hbm [thread:$0]  %s2908, 32, %s20, [#allocation5]
        $region120: #{_lambda_.1} parent=99 // pred_fallthru
          _
        // Predicated region
        $region121: #{_lambda_.1} parent=99 // pred_check
          %p2911 = pneg %p529
        $region122: #{_lambda_.1} parent=99 // pred_check_branch
          %2913 = sbr.rel (%p2911) target = $region124
        $region123: #{_lambda_.1} parent=99 // pred_region
          %2914 = dma.done [#allocation5], 32
        $region124: #{_lambda_.1} parent=99 // pred_fallthru
          _
      $region100: #{_lambda_.1} parent=5 // pred_fallthru
        _
      %p2915 = scmp.le.s32.totalorder 2, %s31
      // Predicated region
      $region125: #{_lambda_.1} parent=5 // pred_check
        %p2916 = pneg %p2915
      $region126: #{_lambda_.1} parent=5 // pred_check_branch
        %2918 = sbr.rel (%p2916) target = $region128
      $region127: #{_lambda_.1} parent=5 // pred_region
        %s2919 = ssub.s32 %s31, 2
      $region128: #{_lambda_.1} parent=5 // pred_fallthru
        _
    $region6: #{_lambda_.1} parent=1 // loop_footer
      %s35 = sadd.s32 1, %s31
    $region7: #{_lambda_.1} parent=1 // loop_footer_branch
      %30 = sbr.rel target = $region3
    $region8: #{_lambda_.1} parent=1 // loop_exit
      _
    %2920 = vsyncpa [#allocation4], 1
    %s2921 = scalar_lea.sflag [#allocation4], 1
    %2922 = vsyncpa %s2921, 1
    %2923 = vsyncpa [#allocation7], 1
    %2924 = vsyncpa [#allocation5], 1
    %s2925 = scalar_lea.sflag [#allocation5], 1
    %2926 = vsyncpa %s2925, 1

</llo_original>
